<compile_context>
chip_gen: v7x
topology: tpu7x:2x2x1
jax: 0.10.0
libtpu: 0.0.40
codegen_flags: <defaults>
</compile_context>

<pallas_src>
import functools
import math

import jax
import jax.numpy as jnp
from jax.experimental import pallas as pl
from jax.experimental.pallas import tpu as pltpu

LN_EPS = 1e-5


def _ln(x, g, b):
    """LayerNorm over the last dim (torch-style biased variance, eps inside rsqrt)."""
    m = jnp.mean(x, axis=-1, keepdims=True)
    c = x - m
    v = jnp.mean(c * c, axis=-1, keepdims=True)
    return c * jax.lax.rsqrt(v + LN_EPS) * g + b


# --------------------------- stage 1: self-attention ---------------------------

def _stage1_kernel(src_ref, srcc_ref, wqk_ref, bqk_ref, wv_ref, bv_ref,
                   wo_ref, bo_ref, g0_ref, b0_ref, g1_ref, b1_ref,
                   out_ref, qk_ref, v_ref, attn_ref, *, B, S, H, Dh, E):
    """Rows are tokens in batch-major order: row = b*S + s. All refs fully VMEM-resident."""
    src = src_ref[...]                                               # (B*S, E)
    inp = _ln(src + srcc_ref[...], g0_ref[...], b0_ref[...])         # norm0(src + srcc)

    # Fused Q|K projection from input_feature; V projection from src.
    qk_ref[...] = jnp.dot(inp, wqk_ref[...],
                          preferred_element_type=jnp.float32) + bqk_ref[...]   # (B*S, 2E)
    v_ref[...] = jnp.dot(src, wv_ref[...],
                         preferred_element_type=jnp.float32) + bv_ref[...]     # (B*S, E)

    scale = 1.0 / math.sqrt(Dh)
    for b in range(B):                       # static unroll: B*H tiny attention blocks
        rows = pl.ds(b * S, S)
        for h in range(H):
            q_bh = qk_ref[rows, pl.ds(h * Dh, Dh)]                   # (S, Dh)
            k_bh = qk_ref[rows, pl.ds(E + h * Dh, Dh)]               # (S, Dh)
            v_bh = v_ref[rows, pl.ds(h * Dh, Dh)]                    # (S, Dh)
            s = jax.lax.dot_general(q_bh, k_bh, (((1,), (1,)), ((), ())),
                                    preferred_element_type=jnp.float32) * scale
            s = s - jnp.max(s, axis=-1, keepdims=True)
            p = jnp.exp(s)
            p = p * pl.reciprocal(jnp.sum(p, axis=-1, keepdims=True), approx=True)
            attn_ref[rows, pl.ds(h * Dh, Dh)] = jnp.dot(
                p, v_bh, preferred_element_type=jnp.float32)

    src2 = jnp.dot(attn_ref[...], wo_ref[...],
                   preferred_element_type=jnp.float32) + bo_ref[...]
    out_ref[...] = _ln(src + src2, g1_ref[...], b1_ref[...])         # norm1(src + src2)


# ---------------------- stage 2: Cattention + feed-forward ----------------------

def _stage2_kernel(x_ref, y_ref, w1_ref, w2_ref, wx_ref, wy_ref, bct_ref,
                   gamma_ref, fw1_ref, fb1_ref, fw2_ref, fb2_ref,
                   g2_ref, b2_ref, out_ref, *, B, S):
    """Rows are the module's fake (b, spatial) pairs of the raw .view(b,c,h,w) tensor:
    row = b*S + s, columns = the fake channel dim. Everything in row form (E in lanes)."""
    gamma = gamma_ref[0]                                             # scalar from SMEM
    w1t, w2t = w1_ref[...], w2_ref[...]
    wx, wy = wx_ref[...], wy_ref[...]
    fw1, fw2 = fw1_ref[...], fw2_ref[...]
    for b in range(B):                                               # static unroll
        rows = pl.ds(b * S, S)
        x = x_ref[rows, :]                                           # (S, E) == x_b^T
        y = y_ref[rows, :]
        # squeeze-excitation: avg-pool over spatial -> 1x1 conv -> ReLU -> 1x1 conv
        pooled = jnp.mean(y, axis=0, keepdims=True)                  # (1, E)
        hidden = jnp.maximum(
            jnp.dot(pooled, w1t, preferred_element_type=jnp.float32), 0.0)   # (1, E//6)
        ww = jnp.dot(hidden, w2t, preferred_element_type=jnp.float32)        # (1, E)
        # ConvTranspose2d(2E, E, 1) on cat((x, y)) -- weight pre-split on host
        conv = (jnp.dot(x, wx, preferred_element_type=jnp.float32)
                + jnp.dot(y, wy, preferred_element_type=jnp.float32)
                + bct_ref[...])                                      # (S, E)
        ca = x + gamma * (conv * ww) * x                             # (S, E)
        # feed-forward + norm2
        hid = jnp.maximum(
            jnp.dot(ca, fw1, preferred_element_type=jnp.float32) + fb1_ref[...], 0.0)
        ff = jnp.dot(hid, fw2, preferred_element_type=jnp.float32) + fb2_ref[...]
        out_ref[rows, :] = _ln(ca + ff, g2_ref[...], b2_ref[...])


# ------------------------------ forward pass (glue) -----------------------------

def transformer_encoder_layer(src, srcc, p, *, nhead):
    S, B, E = src.shape
    H = nhead
    Dh = E // H
    F = p["ff_w1"].shape[0]
    hh = int(math.sqrt(S))
    assert hh * hh == S, "sequence length must be a perfect square (module views it as HxW)"
    assert H * Dh == E

    f32 = jnp.float32

    # batch-major token rows for stage 1 (contiguous per-(batch,head) slices)
    src_bm = jnp.transpose(src, (1, 0, 2)).reshape(B * S, E)
    srcc_bm = jnp.transpose(srcc, (1, 0, 2)).reshape(B * S, E)

    Wq, Wk, Wv = jnp.split(p["in_proj_w"], 3, axis=0)
    bq, bk, bv = jnp.split(p["in_proj_b"], 3, axis=0)
    wqk = jnp.concatenate([Wq.T, Wk.T], axis=1)                      # (E, 2E)
    bqk = jnp.concatenate([bq, bk]).reshape(1, 2 * E)

    stage1 = pl.pallas_call(
        functools.partial(_stage1_kernel, B=B, S=S, H=H, Dh=Dh, E=E),
        out_shape=jax.ShapeDtypeStruct((B * S, E), f32),
        scratch_shapes=[pltpu.VMEM((B * S, 2 * E), f32),   # qk
                        pltpu.VMEM((B * S, E), f32),       # v
                        pltpu.VMEM((B * S, E), f32)],      # attention output
    )
    src1_bm = stage1(src_bm, srcc_bm, wqk, bqk, Wv.T, bv.reshape(1, E),
                     p["out_proj_w"].T, p["out_proj_b"].reshape(1, E),
                     p["ln0_g"].reshape(1, E), p["ln0_b"].reshape(1, E),
                     p["ln1_g"].reshape(1, E), p["ln1_b"].reshape(1, E))

    # Reproduce the module's raw `.view(b, c, h, w)` re-interpretation of the (S, B, E)
    # activations; lay it out fake-batch-row-major so stage 2 needs no in-kernel transposes.
    src1_sbe = src1_bm.reshape(B, S, E).transpose(1, 0, 2)            # (S, B, E)
    x2 = src1_sbe.reshape(B, E, S).transpose(0, 2, 1).reshape(B * S, E)
    y2 = srcc.reshape(B, E, S).transpose(0, 2, 1).reshape(B * S, E)

    wct = p["ca_wct"]                                                 # (2E, E)
    vmem = pl.BlockSpec(memory_space=pltpu.MemorySpace.VMEM)
    smem = pl.BlockSpec(memory_space=pltpu.MemorySpace.SMEM)
    stage2 = pl.pallas_call(
        functools.partial(_stage2_kernel, B=B, S=S),
        out_shape=jax.ShapeDtypeStruct((B * S, E), f32),
        in_specs=[vmem] * 7 + [smem] + [vmem] * 6,
    )
    out2 = stage2(x2, y2, p["ca_w1"].T, p["ca_w2"].T,
                  wct[:E], wct[E:], p["ca_bct"].reshape(1, E),
                  p["ca_gamma"].reshape((1,)),
                  p["ff_w1"].T, p["ff_b1"].reshape(1, F),
                  p["ff_w2"].T, p["ff_b2"].reshape(1, E),
                  p["ln2_g"].reshape(1, E), p["ln2_b"].reshape(1, E))

    return out2.reshape(B, S, E).transpose(1, 0, 2)                   # (S, B, E)


# ------------------------------- pure-JAX reference ------------------------------

def reference(src, srcc, p, *, nhead):
    S, B, E = src.shape
    H, Dh = nhead, E // nhead
    inp = _ln(src + srcc, p["ln0_g"], p["ln0_b"])
    Wq, Wk, Wv = jnp.split(p["in_proj_w"], 3, axis=0)
    bq, bk, bv = jnp.split(p["in_proj_b"], 3, axis=0)
    q = inp @ Wq.T + bq
    k = inp @ Wk.T + bk
    v = src @ Wv.T + bv

    def heads(t):
        return t.reshape(S, B, H, Dh).transpose(1, 2, 0, 3)  # (B, H, S, Dh)

    qh, kh, vh = heads(q), heads(k), heads(v)
    sc = jnp.einsum("bhqd,bhkd->bhqk", qh, kh) / math.sqrt(Dh)
    pr = jax.nn.softmax(sc, axis=-1)
    ao = jnp.einsum("bhqk,bhkd->bhqd", pr, vh).transpose(2, 0, 1, 3).reshape(S, B, E)
    src2 = ao @ p["out_proj_w"].T + p["out_proj_b"]
    s1 = _ln(src + src2, p["ln1_g"], p["ln1_b"])

    x = s1.reshape(B, E, S)
    y = srcc.reshape(B, E, S)
    pooled = jnp.mean(y, axis=-1, keepdims=True)
    hidden = jax.nn.relu(jnp.einsum("oe,bes->bos", p["ca_w1"], pooled))
    ww = jnp.einsum("eo,bos->bes", p["ca_w2"], hidden)
    cat = jnp.concatenate([x, y], axis=1)
    conv = jnp.einsum("bis,ie->bes", cat, p["ca_wct"]) + p["ca_bct"][None, :, None]
    ca = x + p["ca_gamma"] * (conv * ww) * x
    s = jnp.transpose(ca, (2, 0, 1))

    hid = jax.nn.relu(s @ p["ff_w1"].T + p["ff_b1"])
    ff = hid @ p["ff_w2"].T + p["ff_b2"]
    return _ln(s + ff, p["ln2_g"], p["ln2_b"])


# -------------------------------------- main --------------------------------------

if __name__ == "__main__":
    S, B, E, H, F = 16, 2, 24, 4, 48      # seq (perfect square), batch, d_model, heads, ffn
    Eh = E // 6                           # Cattention bottleneck

    key = jax.random.PRNGKey(0)
    ks = jax.random.split(key, 16)

    def nrm(k, shape, scale=0.05):
        return scale * jax.random.normal(k, shape, dtype=jnp.float32)

    params = {
        # MultiheadAttention
        "in_proj_w": nrm(ks[0], (3 * E, E)),
        "in_proj_b": nrm(ks[1], (3 * E,)),
        "out_proj_w": nrm(ks[2], (E, E)),
        "out_proj_b": nrm(ks[3], (E,)),
        # LayerNorms
        "ln0_g": jnp.ones((E,), jnp.float32), "ln0_b": jnp.zeros((E,), jnp.float32),
        "ln1_g": jnp.ones((E,), jnp.float32), "ln1_b": jnp.zeros((E,), jnp.float32),
        "ln2_g": jnp.ones((E,), jnp.float32), "ln2_b": jnp.zeros((E,), jnp.float32),
        # Cattention: linear1 (E//6, E), linear2 (E, E//6),
        # ConvTranspose2d weight (in=2E, out=E, 1, 1) -> (2E, E), bias (E,)
        "ca_w1": nrm(ks[4], (Eh, E)),
        "ca_w2": nrm(ks[5], (E, Eh)),
        "ca_wct": nrm(ks[6], (2 * E, E)),
        "ca_bct": nrm(ks[7], (E,)),
        # PyTorch inits gamma to 0 (branch would be a no-op); use non-zero to exercise it.
        "ca_gamma": jnp.array([0.5], dtype=jnp.float32),
        # Feed-forward
        "ff_w1": nrm(ks[8], (F, E)),
        "ff_b1": nrm(ks[9], (F,)),
        "ff_w2": nrm(ks[10], (E, F)),
        "ff_b2": nrm(ks[11], (E,)),
    }

    src = jax.random.normal(ks[12], (S, B, E), dtype=jnp.float32)
    srcc = jax.random.normal(ks[13], (S, B, E), dtype=jnp.float32)

    layer = jax.jit(functools.partial(transformer_encoder_layer, nhead=H))
    out = jax.block_until_ready(layer(src, srcc, params))
    ref = jax.block_until_ready(reference(src, srcc, params, nhead=H))

    assert out.shape == (S, B, E)
    assert bool(jnp.all(jnp.isfinite(out)))
    assert bool(jnp.allclose(out, ref, atol=5e-3, rtol=5e-3)), "mismatch vs pure-JAX reference"
    print("KERNEL_OK")
</pallas_src>

<mosaic_0001>
module attributes {stable_mosaic.version = 11 : i64} {
  func.func @_stage1_kernel(%arg0: memref<32x24xf32, #tpu.memory_space<vmem>>, %arg1: memref<32x24xf32, #tpu.memory_space<vmem>>, %arg2: memref<24x48xf32, #tpu.memory_space<vmem>>, %arg3: memref<1x48xf32, #tpu.memory_space<vmem>>, %arg4: memref<24x24xf32, #tpu.memory_space<vmem>>, %arg5: memref<1x24xf32, #tpu.memory_space<vmem>>, %arg6: memref<24x24xf32, #tpu.memory_space<vmem>>, %arg7: memref<1x24xf32, #tpu.memory_space<vmem>>, %arg8: memref<1x24xf32, #tpu.memory_space<vmem>>, %arg9: memref<1x24xf32, #tpu.memory_space<vmem>>, %arg10: memref<1x24xf32, #tpu.memory_space<vmem>>, %arg11: memref<1x24xf32, #tpu.memory_space<vmem>>, %arg12: memref<32x24xf32, #tpu.memory_space<vmem>>, %arg13: memref<32x48xf32, #tpu.memory_space<vmem>>, %arg14: memref<32x24xf32, #tpu.memory_space<vmem>>, %arg15: memref<32x24xf32, #tpu.memory_space<vmem>>) attributes {dimension_semantics = [], scalar_prefetch = 0 : i64, scratch_operands = 3 : i64, tpu.core_type = #tpu.core_type<tc>} {
    %c0 = arith.constant 0 : index
    %c0_0 = arith.constant 0 : index
    %0 = vector.load %arg0[%c0, %c0_0] : memref<32x24xf32, #tpu.memory_space<vmem>>, vector<32x24xf32>
    %c0_1 = arith.constant 0 : index
    %c0_2 = arith.constant 0 : index
    %1 = vector.load %arg1[%c0_1, %c0_2] : memref<32x24xf32, #tpu.memory_space<vmem>>, vector<32x24xf32>
    %2 = arith.addf %0, %1 : vector<32x24xf32>
    %c0_3 = arith.constant 0 : index
    %c0_4 = arith.constant 0 : index
    %3 = vector.load %arg8[%c0_3, %c0_4] : memref<1x24xf32, #tpu.memory_space<vmem>>, vector<1x24xf32>
    %c0_5 = arith.constant 0 : index
    %c0_6 = arith.constant 0 : index
    %4 = vector.load %arg9[%c0_5, %c0_6] : memref<1x24xf32, #tpu.memory_space<vmem>>, vector<1x24xf32>
    %cst = arith.constant dense<0.000000e+00> : vector<32xf32>
    %5 = vector.multi_reduction <add>, %2, %cst [1] : vector<32x24xf32> to vector<32xf32>
    %6 = vector.shape_cast %5 : vector<32xf32> to vector<32x1xf32>
    %cst_7 = arith.constant 2.400000e+01 : f32
    %7 = vector.broadcast %cst_7 : f32 to vector<32x1xf32>
    %8 = arith.divf %6, %7 : vector<32x1xf32>
    %9 = vector.broadcast %8 : vector<32x1xf32> to vector<32x24xf32>
    %10 = arith.subf %2, %9 : vector<32x24xf32>
    %11 = arith.mulf %10, %10 : vector<32x24xf32>
    %cst_8 = arith.constant dense<0.000000e+00> : vector<32xf32>
    %12 = vector.multi_reduction <add>, %11, %cst_8 [1] : vector<32x24xf32> to vector<32xf32>
    %13 = vector.shape_cast %12 : vector<32xf32> to vector<32x1xf32>
    %cst_9 = arith.constant 2.400000e+01 : f32
    %14 = vector.broadcast %cst_9 : f32 to vector<32x1xf32>
    %15 = arith.divf %13, %14 : vector<32x1xf32>
    %cst_10 = arith.constant 9.99999974E-6 : f32
    %16 = vector.broadcast %cst_10 : f32 to vector<32x1xf32>
    %17 = arith.addf %15, %16 : vector<32x1xf32>
    %18 = math.rsqrt %17 : vector<32x1xf32>
    %19 = vector.broadcast %18 : vector<32x1xf32> to vector<32x24xf32>
    %20 = arith.mulf %10, %19 : vector<32x24xf32>
    %21 = vector.broadcast %3 : vector<1x24xf32> to vector<32x24xf32>
    %22 = arith.mulf %20, %21 : vector<32x24xf32>
    %23 = vector.broadcast %4 : vector<1x24xf32> to vector<32x24xf32>
    %24 = arith.addf %22, %23 : vector<32x24xf32>
    %c0_11 = arith.constant 0 : index
    %c0_12 = arith.constant 0 : index
    %25 = vector.load %arg2[%c0_11, %c0_12] : memref<24x48xf32, #tpu.memory_space<vmem>>, vector<24x48xf32>
    %cst_13 = arith.constant dense<0.000000e+00> : vector<32x48xf32>
    %26 = tpu.matmul %24, %25, %cst_13 {dimension_numbers = #tpu.dot_dimension_numbers<[1], [0], [0], [1], [0, 0, 1, 1], [], []>} : vector<32x24xf32>, vector<24x48xf32>, vector<32x48xf32> -> vector<32x48xf32>
    %c0_14 = arith.constant 0 : index
    %c0_15 = arith.constant 0 : index
    %27 = vector.load %arg3[%c0_14, %c0_15] : memref<1x48xf32, #tpu.memory_space<vmem>>, vector<1x48xf32>
    %28 = vector.broadcast %27 : vector<1x48xf32> to vector<32x48xf32>
    %29 = arith.addf %26, %28 : vector<32x48xf32>
    %c0_16 = arith.constant 0 : index
    %c0_17 = arith.constant 0 : index
    %30 = vector.load %arg13[%c0_16, %c0_17] : memref<32x48xf32, #tpu.memory_space<vmem>>, vector<32x48xf32>
    tpu.vector_store %arg13[%c0_16, %c0_17], %29 {strides = array<i32>} : memref<32x48xf32, #tpu.memory_space<vmem>>, vector<32x48xf32>,
    %c0_18 = arith.constant 0 : index
    %c0_19 = arith.constant 0 : index
    %31 = vector.load %arg4[%c0_18, %c0_19] : memref<24x24xf32, #tpu.memory_space<vmem>>, vector<24x24xf32>
    %cst_20 = arith.constant dense<0.000000e+00> : vector<32x24xf32>
    %32 = tpu.matmul %0, %31, %cst_20 {dimension_numbers = #tpu.dot_dimension_numbers<[1], [0], [0], [1], [0, 0, 1, 1], [], []>} : vector<32x24xf32>, vector<24x24xf32>, vector<32x24xf32> -> vector<32x24xf32>
    %c0_21 = arith.constant 0 : index
    %c0_22 = arith.constant 0 : index
    %33 = vector.load %arg5[%c0_21, %c0_22] : memref<1x24xf32, #tpu.memory_space<vmem>>, vector<1x24xf32>
    %34 = vector.broadcast %33 : vector<1x24xf32> to vector<32x24xf32>
    %35 = arith.addf %32, %34 : vector<32x24xf32>
    %c0_23 = arith.constant 0 : index
    %c0_24 = arith.constant 0 : index
    %36 = vector.load %arg14[%c0_23, %c0_24] : memref<32x24xf32, #tpu.memory_space<vmem>>, vector<32x24xf32>
    tpu.vector_store %arg14[%c0_23, %c0_24], %35 {strides = array<i32>} : memref<32x24xf32, #tpu.memory_space<vmem>>, vector<32x24xf32>,
    %c0_25 = arith.constant 0 : index
    %c0_26 = arith.constant 0 : index
    %37 = vector.load %arg13[%c0_25, %c0_26] : memref<32x48xf32, #tpu.memory_space<vmem>>, vector<16x6xf32>
    %c0_27 = arith.constant 0 : index
    %c24 = arith.constant 24 : index
    %38 = vector.load %arg13[%c0_27, %c24] : memref<32x48xf32, #tpu.memory_space<vmem>>, vector<16x6xf32>
    %c0_28 = arith.constant 0 : index
    %c0_29 = arith.constant 0 : index
    %39 = vector.load %arg14[%c0_28, %c0_29] : memref<32x24xf32, #tpu.memory_space<vmem>>, vector<16x6xf32>
    %cst_30 = arith.constant dense<0.000000e+00> : vector<16x16xf32>
    %40 = tpu.matmul %37, %38, %cst_30 {dimension_numbers = #tpu.dot_dimension_numbers<[1], [1], [0], [0], [0, 0, 1, 0], [], []>} : vector<16x6xf32>, vector<16x6xf32>, vector<16x16xf32> -> vector<16x16xf32>
    %cst_31 = arith.constant 0.408248305 : f32
    %41 = vector.broadcast %cst_31 : f32 to vector<16x16xf32>
    %42 = arith.mulf %40, %41 : vector<16x16xf32>
    %cst_32 = arith.constant dense<0xFF800000> : vector<16xf32>
    %43 = vector.multi_reduction <maximumf>, %42, %cst_32 [1] : vector<16x16xf32> to vector<16xf32>
    %44 = vector.shape_cast %43 : vector<16xf32> to vector<16x1xf32>
    %45 = vector.broadcast %44 : vector<16x1xf32> to vector<16x16xf32>
    %46 = arith.subf %42, %45 : vector<16x16xf32>
    %47 = math.exp %46 : vector<16x16xf32>
    %cst_33 = arith.constant dense<0.000000e+00> : vector<16xf32>
    %48 = vector.multi_reduction <add>, %47, %cst_33 [1] : vector<16x16xf32> to vector<16xf32>
    %49 = vector.shape_cast %48 : vector<16xf32> to vector<16x1xf32>
    %50 = tpu.reciprocal %49 {approx = true} : vector<16x1xf32> -> vector<16x1xf32>
    %51 = vector.broadcast %50 : vector<16x1xf32> to vector<16x16xf32>
    %52 = arith.mulf %47, %51 : vector<16x16xf32>
    %cst_34 = arith.constant dense<0.000000e+00> : vector<16x6xf32>
    %53 = tpu.matmul %52, %39, %cst_34 {dimension_numbers = #tpu.dot_dimension_numbers<[1], [0], [0], [1], [0, 0, 1, 1], [], []>} : vector<16x16xf32>, vector<16x6xf32>, vector<16x6xf32> -> vector<16x6xf32>
    %c0_35 = arith.constant 0 : index
    %c0_36 = arith.constant 0 : index
    %54 = vector.load %arg15[%c0_35, %c0_36] : memref<32x24xf32, #tpu.memory_space<vmem>>, vector<16x6xf32>
    tpu.vector_store %arg15[%c0_35, %c0_36], %53 {strides = array<i32>} : memref<32x24xf32, #tpu.memory_space<vmem>>, vector<16x6xf32>,
    %c0_37 = arith.constant 0 : index
    %c6 = arith.constant 6 : index
    %55 = vector.load %arg13[%c0_37, %c6] : memref<32x48xf32, #tpu.memory_space<vmem>>, vector<16x6xf32>
    %c0_38 = arith.constant 0 : index
    %c30 = arith.constant 30 : index
    %56 = vector.load %arg13[%c0_38, %c30] : memref<32x48xf32, #tpu.memory_space<vmem>>, vector<16x6xf32>
    %c0_39 = arith.constant 0 : index
    %c6_40 = arith.constant 6 : index
    %57 = vector.load %arg14[%c0_39, %c6_40] : memref<32x24xf32, #tpu.memory_space<vmem>>, vector<16x6xf32>
    %cst_41 = arith.constant dense<0.000000e+00> : vector<16x16xf32>
    %58 = tpu.matmul %55, %56, %cst_41 {dimension_numbers = #tpu.dot_dimension_numbers<[1], [1], [0], [0], [0, 0, 1, 0], [], []>} : vector<16x6xf32>, vector<16x6xf32>, vector<16x16xf32> -> vector<16x16xf32>
    %cst_42 = arith.constant 0.408248305 : f32
    %59 = vector.broadcast %cst_42 : f32 to vector<16x16xf32>
    %60 = arith.mulf %58, %59 : vector<16x16xf32>
    %cst_43 = arith.constant dense<0xFF800000> : vector<16xf32>
    %61 = vector.multi_reduction <maximumf>, %60, %cst_43 [1] : vector<16x16xf32> to vector<16xf32>
    %62 = vector.shape_cast %61 : vector<16xf32> to vector<16x1xf32>
    %63 = vector.broadcast %62 : vector<16x1xf32> to vector<16x16xf32>
    %64 = arith.subf %60, %63 : vector<16x16xf32>
    %65 = math.exp %64 : vector<16x16xf32>
    %cst_44 = arith.constant dense<0.000000e+00> : vector<16xf32>
    %66 = vector.multi_reduction <add>, %65, %cst_44 [1] : vector<16x16xf32> to vector<16xf32>
    %67 = vector.shape_cast %66 : vector<16xf32> to vector<16x1xf32>
    %68 = tpu.reciprocal %67 {approx = true} : vector<16x1xf32> -> vector<16x1xf32>
    %69 = vector.broadcast %68 : vector<16x1xf32> to vector<16x16xf32>
    %70 = arith.mulf %65, %69 : vector<16x16xf32>
    %cst_45 = arith.constant dense<0.000000e+00> : vector<16x6xf32>
    %71 = tpu.matmul %70, %57, %cst_45 {dimension_numbers = #tpu.dot_dimension_numbers<[1], [0], [0], [1], [0, 0, 1, 1], [], []>} : vector<16x16xf32>, vector<16x6xf32>, vector<16x6xf32> -> vector<16x6xf32>
    %c0_46 = arith.constant 0 : index
    %c6_47 = arith.constant 6 : index
    %72 = vector.load %arg15[%c0_46, %c6_47] : memref<32x24xf32, #tpu.memory_space<vmem>>, vector<16x6xf32>
    tpu.vector_store %arg15[%c0_46, %c6_47], %71 {strides = array<i32>} : memref<32x24xf32, #tpu.memory_space<vmem>>, vector<16x6xf32>,
    %c0_48 = arith.constant 0 : index
    %c12 = arith.constant 12 : index
    %73 = vector.load %arg13[%c0_48, %c12] : memref<32x48xf32, #tpu.memory_space<vmem>>, vector<16x6xf32>
    %c0_49 = arith.constant 0 : index
    %c36 = arith.constant 36 : index
    %74 = vector.load %arg13[%c0_49, %c36] : memref<32x48xf32, #tpu.memory_space<vmem>>, vector<16x6xf32>
    %c0_50 = arith.constant 0 : index
    %c12_51 = arith.constant 12 : index
    %75 = vector.load %arg14[%c0_50, %c12_51] : memref<32x24xf32, #tpu.memory_space<vmem>>, vector<16x6xf32>
    %cst_52 = arith.constant dense<0.000000e+00> : vector<16x16xf32>
    %76 = tpu.matmul %73, %74, %cst_52 {dimension_numbers = #tpu.dot_dimension_numbers<[1], [1], [0], [0], [0, 0, 1, 0], [], []>} : vector<16x6xf32>, vector<16x6xf32>, vector<16x16xf32> -> vector<16x16xf32>
    %cst_53 = arith.constant 0.408248305 : f32
    %77 = vector.broadcast %cst_53 : f32 to vector<16x16xf32>
    %78 = arith.mulf %76, %77 : vector<16x16xf32>
    %cst_54 = arith.constant dense<0xFF800000> : vector<16xf32>
    %79 = vector.multi_reduction <maximumf>, %78, %cst_54 [1] : vector<16x16xf32> to vector<16xf32>
    %80 = vector.shape_cast %79 : vector<16xf32> to vector<16x1xf32>
    %81 = vector.broadcast %80 : vector<16x1xf32> to vector<16x16xf32>
    %82 = arith.subf %78, %81 : vector<16x16xf32>
    %83 = math.exp %82 : vector<16x16xf32>
    %cst_55 = arith.constant dense<0.000000e+00> : vector<16xf32>
    %84 = vector.multi_reduction <add>, %83, %cst_55 [1] : vector<16x16xf32> to vector<16xf32>
    %85 = vector.shape_cast %84 : vector<16xf32> to vector<16x1xf32>
    %86 = tpu.reciprocal %85 {approx = true} : vector<16x1xf32> -> vector<16x1xf32>
    %87 = vector.broadcast %86 : vector<16x1xf32> to vector<16x16xf32>
    %88 = arith.mulf %83, %87 : vector<16x16xf32>
    %cst_56 = arith.constant dense<0.000000e+00> : vector<16x6xf32>
    %89 = tpu.matmul %88, %75, %cst_56 {dimension_numbers = #tpu.dot_dimension_numbers<[1], [0], [0], [1], [0, 0, 1, 1], [], []>} : vector<16x16xf32>, vector<16x6xf32>, vector<16x6xf32> -> vector<16x6xf32>
    %c0_57 = arith.constant 0 : index
    %c12_58 = arith.constant 12 : index
    %90 = vector.load %arg15[%c0_57, %c12_58] : memref<32x24xf32, #tpu.memory_space<vmem>>, vector<16x6xf32>
    tpu.vector_store %arg15[%c0_57, %c12_58], %89 {strides = array<i32>} : memref<32x24xf32, #tpu.memory_space<vmem>>, vector<16x6xf32>,
    %c0_59 = arith.constant 0 : index
    %c18 = arith.constant 18 : index
    %91 = vector.load %arg13[%c0_59, %c18] : memref<32x48xf32, #tpu.memory_space<vmem>>, vector<16x6xf32>
    %c0_60 = arith.constant 0 : index
    %c42 = arith.constant 42 : index
    %92 = vector.load %arg13[%c0_60, %c42] : memref<32x48xf32, #tpu.memory_space<vmem>>, vector<16x6xf32>
    %c0_61 = arith.constant 0 : index
    %c18_62 = arith.constant 18 : index
    %93 = vector.load %arg14[%c0_61, %c18_62] : memref<32x24xf32, #tpu.memory_space<vmem>>, vector<16x6xf32>
    %cst_63 = arith.constant dense<0.000000e+00> : vector<16x16xf32>
    %94 = tpu.matmul %91, %92, %cst_63 {dimension_numbers = #tpu.dot_dimension_numbers<[1], [1], [0], [0], [0, 0, 1, 0], [], []>} : vector<16x6xf32>, vector<16x6xf32>, vector<16x16xf32> -> vector<16x16xf32>
    %cst_64 = arith.constant 0.408248305 : f32
    %95 = vector.broadcast %cst_64 : f32 to vector<16x16xf32>
    %96 = arith.mulf %94, %95 : vector<16x16xf32>
    %cst_65 = arith.constant dense<0xFF800000> : vector<16xf32>
    %97 = vector.multi_reduction <maximumf>, %96, %cst_65 [1] : vector<16x16xf32> to vector<16xf32>
    %98 = vector.shape_cast %97 : vector<16xf32> to vector<16x1xf32>
    %99 = vector.broadcast %98 : vector<16x1xf32> to vector<16x16xf32>
    %100 = arith.subf %96, %99 : vector<16x16xf32>
    %101 = math.exp %100 : vector<16x16xf32>
    %cst_66 = arith.constant dense<0.000000e+00> : vector<16xf32>
    %102 = vector.multi_reduction <add>, %101, %cst_66 [1] : vector<16x16xf32> to vector<16xf32>
    %103 = vector.shape_cast %102 : vector<16xf32> to vector<16x1xf32>
    %104 = tpu.reciprocal %103 {approx = true} : vector<16x1xf32> -> vector<16x1xf32>
    %105 = vector.broadcast %104 : vector<16x1xf32> to vector<16x16xf32>
    %106 = arith.mulf %101, %105 : vector<16x16xf32>
    %cst_67 = arith.constant dense<0.000000e+00> : vector<16x6xf32>
    %107 = tpu.matmul %106, %93, %cst_67 {dimension_numbers = #tpu.dot_dimension_numbers<[1], [0], [0], [1], [0, 0, 1, 1], [], []>} : vector<16x16xf32>, vector<16x6xf32>, vector<16x6xf32> -> vector<16x6xf32>
    %c0_68 = arith.constant 0 : index
    %c18_69 = arith.constant 18 : index
    %108 = vector.load %arg15[%c0_68, %c18_69] : memref<32x24xf32, #tpu.memory_space<vmem>>, vector<16x6xf32>
    tpu.vector_store %arg15[%c0_68, %c18_69], %107 {strides = array<i32>} : memref<32x24xf32, #tpu.memory_space<vmem>>, vector<16x6xf32>,
    %c16 = arith.constant 16 : index
    %c0_70 = arith.constant 0 : index
    %109 = vector.load %arg13[%c16, %c0_70] : memref<32x48xf32, #tpu.memory_space<vmem>>, vector<16x6xf32>
    %c16_71 = arith.constant 16 : index
    %c24_72 = arith.constant 24 : index
    %110 = vector.load %arg13[%c16_71, %c24_72] : memref<32x48xf32, #tpu.memory_space<vmem>>, vector<16x6xf32>
    %c16_73 = arith.constant 16 : index
    %c0_74 = arith.constant 0 : index
    %111 = vector.load %arg14[%c16_73, %c0_74] : memref<32x24xf32, #tpu.memory_space<vmem>>, vector<16x6xf32>
    %cst_75 = arith.constant dense<0.000000e+00> : vector<16x16xf32>
    %112 = tpu.matmul %109, %110, %cst_75 {dimension_numbers = #tpu.dot_dimension_numbers<[1], [1], [0], [0], [0, 0, 1, 0], [], []>} : vector<16x6xf32>, vector<16x6xf32>, vector<16x16xf32> -> vector<16x16xf32>
    %cst_76 = arith.constant 0.408248305 : f32
    %113 = vector.broadcast %cst_76 : f32 to vector<16x16xf32>
    %114 = arith.mulf %112, %113 : vector<16x16xf32>
    %cst_77 = arith.constant dense<0xFF800000> : vector<16xf32>
    %115 = vector.multi_reduction <maximumf>, %114, %cst_77 [1] : vector<16x16xf32> to vector<16xf32>
    %116 = vector.shape_cast %115 : vector<16xf32> to vector<16x1xf32>
    %117 = vector.broadcast %116 : vector<16x1xf32> to vector<16x16xf32>
    %118 = arith.subf %114, %117 : vector<16x16xf32>
    %119 = math.exp %118 : vector<16x16xf32>
    %cst_78 = arith.constant dense<0.000000e+00> : vector<16xf32>
    %120 = vector.multi_reduction <add>, %119, %cst_78 [1] : vector<16x16xf32> to vector<16xf32>
    %121 = vector.shape_cast %120 : vector<16xf32> to vector<16x1xf32>
    %122 = tpu.reciprocal %121 {approx = true} : vector<16x1xf32> -> vector<16x1xf32>
    %123 = vector.broadcast %122 : vector<16x1xf32> to vector<16x16xf32>
    %124 = arith.mulf %119, %123 : vector<16x16xf32>
    %cst_79 = arith.constant dense<0.000000e+00> : vector<16x6xf32>
    %125 = tpu.matmul %124, %111, %cst_79 {dimension_numbers = #tpu.dot_dimension_numbers<[1], [0], [0], [1], [0, 0, 1, 1], [], []>} : vector<16x16xf32>, vector<16x6xf32>, vector<16x6xf32> -> vector<16x6xf32>
    %c16_80 = arith.constant 16 : index
    %c0_81 = arith.constant 0 : index
    %126 = vector.load %arg15[%c16_80, %c0_81] : memref<32x24xf32, #tpu.memory_space<vmem>>, vector<16x6xf32>
    tpu.vector_store %arg15[%c16_80, %c0_81], %125 {strides = array<i32>} : memref<32x24xf32, #tpu.memory_space<vmem>>, vector<16x6xf32>,
    %c16_82 = arith.constant 16 : index
    %c6_83 = arith.constant 6 : index
    %127 = vector.load %arg13[%c16_82, %c6_83] : memref<32x48xf32, #tpu.memory_space<vmem>>, vector<16x6xf32>
    %c16_84 = arith.constant 16 : index
    %c30_85 = arith.constant 30 : index
    %128 = vector.load %arg13[%c16_84, %c30_85] : memref<32x48xf32, #tpu.memory_space<vmem>>, vector<16x6xf32>
    %c16_86 = arith.constant 16 : index
    %c6_87 = arith.constant 6 : index
    %129 = vector.load %arg14[%c16_86, %c6_87] : memref<32x24xf32, #tpu.memory_space<vmem>>, vector<16x6xf32>
    %cst_88 = arith.constant dense<0.000000e+00> : vector<16x16xf32>
    %130 = tpu.matmul %127, %128, %cst_88 {dimension_numbers = #tpu.dot_dimension_numbers<[1], [1], [0], [0], [0, 0, 1, 0], [], []>} : vector<16x6xf32>, vector<16x6xf32>, vector<16x16xf32> -> vector<16x16xf32>
    %cst_89 = arith.constant 0.408248305 : f32
    %131 = vector.broadcast %cst_89 : f32 to vector<16x16xf32>
    %132 = arith.mulf %130, %131 : vector<16x16xf32>
    %cst_90 = arith.constant dense<0xFF800000> : vector<16xf32>
    %133 = vector.multi_reduction <maximumf>, %132, %cst_90 [1] : vector<16x16xf32> to vector<16xf32>
    %134 = vector.shape_cast %133 : vector<16xf32> to vector<16x1xf32>
    %135 = vector.broadcast %134 : vector<16x1xf32> to vector<16x16xf32>
    %136 = arith.subf %132, %135 : vector<16x16xf32>
    %137 = math.exp %136 : vector<16x16xf32>
    %cst_91 = arith.constant dense<0.000000e+00> : vector<16xf32>
    %138 = vector.multi_reduction <add>, %137, %cst_91 [1] : vector<16x16xf32> to vector<16xf32>
    %139 = vector.shape_cast %138 : vector<16xf32> to vector<16x1xf32>
    %140 = tpu.reciprocal %139 {approx = true} : vector<16x1xf32> -> vector<16x1xf32>
    %141 = vector.broadcast %140 : vector<16x1xf32> to vector<16x16xf32>
    %142 = arith.mulf %137, %141 : vector<16x16xf32>
    %cst_92 = arith.constant dense<0.000000e+00> : vector<16x6xf32>
    %143 = tpu.matmul %142, %129, %cst_92 {dimension_numbers = #tpu.dot_dimension_numbers<[1], [0], [0], [1], [0, 0, 1, 1], [], []>} : vector<16x16xf32>, vector<16x6xf32>, vector<16x6xf32> -> vector<16x6xf32>
    %c16_93 = arith.constant 16 : index
    %c6_94 = arith.constant 6 : index
    %144 = vector.load %arg15[%c16_93, %c6_94] : memref<32x24xf32, #tpu.memory_space<vmem>>, vector<16x6xf32>
    tpu.vector_store %arg15[%c16_93, %c6_94], %143 {strides = array<i32>} : memref<32x24xf32, #tpu.memory_space<vmem>>, vector<16x6xf32>,
    %c16_95 = arith.constant 16 : index
    %c12_96 = arith.constant 12 : index
    %145 = vector.load %arg13[%c16_95, %c12_96] : memref<32x48xf32, #tpu.memory_space<vmem>>, vector<16x6xf32>
    %c16_97 = arith.constant 16 : index
    %c36_98 = arith.constant 36 : index
    %146 = vector.load %arg13[%c16_97, %c36_98] : memref<32x48xf32, #tpu.memory_space<vmem>>, vector<16x6xf32>
    %c16_99 = arith.constant 16 : index
    %c12_100 = arith.constant 12 : index
    %147 = vector.load %arg14[%c16_99, %c12_100] : memref<32x24xf32, #tpu.memory_space<vmem>>, vector<16x6xf32>
    %cst_101 = arith.constant dense<0.000000e+00> : vector<16x16xf32>
    %148 = tpu.matmul %145, %146, %cst_101 {dimension_numbers = #tpu.dot_dimension_numbers<[1], [1], [0], [0], [0, 0, 1, 0], [], []>} : vector<16x6xf32>, vector<16x6xf32>, vector<16x16xf32> -> vector<16x16xf32>
    %cst_102 = arith.constant 0.408248305 : f32
    %149 = vector.broadcast %cst_102 : f32 to vector<16x16xf32>
    %150 = arith.mulf %148, %149 : vector<16x16xf32>
    %cst_103 = arith.constant dense<0xFF800000> : vector<16xf32>
    %151 = vector.multi_reduction <maximumf>, %150, %cst_103 [1] : vector<16x16xf32> to vector<16xf32>
    %152 = vector.shape_cast %151 : vector<16xf32> to vector<16x1xf32>
    %153 = vector.broadcast %152 : vector<16x1xf32> to vector<16x16xf32>
    %154 = arith.subf %150, %153 : vector<16x16xf32>
    %155 = math.exp %154 : vector<16x16xf32>
    %cst_104 = arith.constant dense<0.000000e+00> : vector<16xf32>
    %156 = vector.multi_reduction <add>, %155, %cst_104 [1] : vector<16x16xf32> to vector<16xf32>
    %157 = vector.shape_cast %156 : vector<16xf32> to vector<16x1xf32>
    %158 = tpu.reciprocal %157 {approx = true} : vector<16x1xf32> -> vector<16x1xf32>
    %159 = vector.broadcast %158 : vector<16x1xf32> to vector<16x16xf32>
    %160 = arith.mulf %155, %159 : vector<16x16xf32>
    %cst_105 = arith.constant dense<0.000000e+00> : vector<16x6xf32>
    %161 = tpu.matmul %160, %147, %cst_105 {dimension_numbers = #tpu.dot_dimension_numbers<[1], [0], [0], [1], [0, 0, 1, 1], [], []>} : vector<16x16xf32>, vector<16x6xf32>, vector<16x6xf32> -> vector<16x6xf32>
    %c16_106 = arith.constant 16 : index
    %c12_107 = arith.constant 12 : index
    %162 = vector.load %arg15[%c16_106, %c12_107] : memref<32x24xf32, #tpu.memory_space<vmem>>, vector<16x6xf32>
    tpu.vector_store %arg15[%c16_106, %c12_107], %161 {strides = array<i32>} : memref<32x24xf32, #tpu.memory_space<vmem>>, vector<16x6xf32>,
    %c16_108 = arith.constant 16 : index
    %c18_109 = arith.constant 18 : index
    %163 = vector.load %arg13[%c16_108, %c18_109] : memref<32x48xf32, #tpu.memory_space<vmem>>, vector<16x6xf32>
    %c16_110 = arith.constant 16 : index
    %c42_111 = arith.constant 42 : index
    %164 = vector.load %arg13[%c16_110, %c42_111] : memref<32x48xf32, #tpu.memory_space<vmem>>, vector<16x6xf32>
    %c16_112 = arith.constant 16 : index
    %c18_113 = arith.constant 18 : index
    %165 = vector.load %arg14[%c16_112, %c18_113] : memref<32x24xf32, #tpu.memory_space<vmem>>, vector<16x6xf32>
    %cst_114 = arith.constant dense<0.000000e+00> : vector<16x16xf32>
    %166 = tpu.matmul %163, %164, %cst_114 {dimension_numbers = #tpu.dot_dimension_numbers<[1], [1], [0], [0], [0, 0, 1, 0], [], []>} : vector<16x6xf32>, vector<16x6xf32>, vector<16x16xf32> -> vector<16x16xf32>
    %cst_115 = arith.constant 0.408248305 : f32
    %167 = vector.broadcast %cst_115 : f32 to vector<16x16xf32>
    %168 = arith.mulf %166, %167 : vector<16x16xf32>
    %cst_116 = arith.constant dense<0xFF800000> : vector<16xf32>
    %169 = vector.multi_reduction <maximumf>, %168, %cst_116 [1] : vector<16x16xf32> to vector<16xf32>
    %170 = vector.shape_cast %169 : vector<16xf32> to vector<16x1xf32>
    %171 = vector.broadcast %170 : vector<16x1xf32> to vector<16x16xf32>
    %172 = arith.subf %168, %171 : vector<16x16xf32>
    %173 = math.exp %172 : vector<16x16xf32>
    %cst_117 = arith.constant dense<0.000000e+00> : vector<16xf32>
    %174 = vector.multi_reduction <add>, %173, %cst_117 [1] : vector<16x16xf32> to vector<16xf32>
    %175 = vector.shape_cast %174 : vector<16xf32> to vector<16x1xf32>
    %176 = tpu.reciprocal %175 {approx = true} : vector<16x1xf32> -> vector<16x1xf32>
    %177 = vector.broadcast %176 : vector<16x1xf32> to vector<16x16xf32>
    %178 = arith.mulf %173, %177 : vector<16x16xf32>
    %cst_118 = arith.constant dense<0.000000e+00> : vector<16x6xf32>
    %179 = tpu.matmul %178, %165, %cst_118 {dimension_numbers = #tpu.dot_dimension_numbers<[1], [0], [0], [1], [0, 0, 1, 1], [], []>} : vector<16x16xf32>, vector<16x6xf32>, vector<16x6xf32> -> vector<16x6xf32>
    %c16_119 = arith.constant 16 : index
    %c18_120 = arith.constant 18 : index
    %180 = vector.load %arg15[%c16_119, %c18_120] : memref<32x24xf32, #tpu.memory_space<vmem>>, vector<16x6xf32>
    tpu.vector_store %arg15[%c16_119, %c18_120], %179 {strides = array<i32>} : memref<32x24xf32, #tpu.memory_space<vmem>>, vector<16x6xf32>,
    %c0_121 = arith.constant 0 : index
    %c0_122 = arith.constant 0 : index
    %181 = vector.load %arg15[%c0_121, %c0_122] : memref<32x24xf32, #tpu.memory_space<vmem>>, vector<32x24xf32>
    %c0_123 = arith.constant 0 : index
    %c0_124 = arith.constant 0 : index
    %182 = vector.load %arg6[%c0_123, %c0_124] : memref<24x24xf32, #tpu.memory_space<vmem>>, vector<24x24xf32>
    %cst_125 = arith.constant dense<0.000000e+00> : vector<32x24xf32>
    %183 = tpu.matmul %181, %182, %cst_125 {dimension_numbers = #tpu.dot_dimension_numbers<[1], [0], [0], [1], [0, 0, 1, 1], [], []>} : vector<32x24xf32>, vector<24x24xf32>, vector<32x24xf32> -> vector<32x24xf32>
    %c0_126 = arith.constant 0 : index
    %c0_127 = arith.constant 0 : index
    %184 = vector.load %arg7[%c0_126, %c0_127] : memref<1x24xf32, #tpu.memory_space<vmem>>, vector<1x24xf32>
    %185 = vector.broadcast %184 : vector<1x24xf32> to vector<32x24xf32>
    %186 = arith.addf %183, %185 : vector<32x24xf32>
    %187 = arith.addf %0, %186 : vector<32x24xf32>
    %c0_128 = arith.constant 0 : index
    %c0_129 = arith.constant 0 : index
    %188 = vector.load %arg10[%c0_128, %c0_129] : memref<1x24xf32, #tpu.memory_space<vmem>>, vector<1x24xf32>
    %c0_130 = arith.constant 0 : index
    %c0_131 = arith.constant 0 : index
    %189 = vector.load %arg11[%c0_130, %c0_131] : memref<1x24xf32, #tpu.memory_space<vmem>>, vector<1x24xf32>
    %cst_132 = arith.constant dense<0.000000e+00> : vector<32xf32>
    %190 = vector.multi_reduction <add>, %187, %cst_132 [1] : vector<32x24xf32> to vector<32xf32>
    %191 = vector.shape_cast %190 : vector<32xf32> to vector<32x1xf32>
    %cst_133 = arith.constant 2.400000e+01 : f32
    %192 = vector.broadcast %cst_133 : f32 to vector<32x1xf32>
    %193 = arith.divf %191, %192 : vector<32x1xf32>
    %194 = vector.broadcast %193 : vector<32x1xf32> to vector<32x24xf32>
    %195 = arith.subf %187, %194 : vector<32x24xf32>
    %196 = arith.mulf %195, %195 : vector<32x24xf32>
    %cst_134 = arith.constant dense<0.000000e+00> : vector<32xf32>
    %197 = vector.multi_reduction <add>, %196, %cst_134 [1] : vector<32x24xf32> to vector<32xf32>
    %198 = vector.shape_cast %197 : vector<32xf32> to vector<32x1xf32>
    %cst_135 = arith.constant 2.400000e+01 : f32
    %199 = vector.broadcast %cst_135 : f32 to vector<32x1xf32>
    %200 = arith.divf %198, %199 : vector<32x1xf32>
    %cst_136 = arith.constant 9.99999974E-6 : f32
    %201 = vector.broadcast %cst_136 : f32 to vector<32x1xf32>
    %202 = arith.addf %200, %201 : vector<32x1xf32>
    %203 = math.rsqrt %202 : vector<32x1xf32>
    %204 = vector.broadcast %203 : vector<32x1xf32> to vector<32x24xf32>
    %205 = arith.mulf %195, %204 : vector<32x24xf32>
    %206 = vector.broadcast %188 : vector<1x24xf32> to vector<32x24xf32>
    %207 = arith.mulf %205, %206 : vector<32x24xf32>
    %208 = vector.broadcast %189 : vector<1x24xf32> to vector<32x24xf32>
    %209 = arith.addf %207, %208 : vector<32x24xf32>
    %c0_137 = arith.constant 0 : index
    %c0_138 = arith.constant 0 : index
    %210 = vector.load %arg12[%c0_137, %c0_138] : memref<32x24xf32, #tpu.memory_space<vmem>>, vector<32x24xf32>
    tpu.vector_store %arg12[%c0_137, %c0_138], %209 {strides = array<i32>} : memref<32x24xf32, #tpu.memory_space<vmem>>, vector<32x24xf32>,
    return
  }
}

module attributes {stable_mosaic.version = 11 : i64} {
  func.func @_stage2_kernel(%arg0: memref<32x24xf32, #tpu.memory_space<vmem>>, %arg1: memref<32x24xf32, #tpu.memory_space<vmem>>, %arg2: memref<24x4xf32, #tpu.memory_space<vmem>>, %arg3: memref<4x24xf32, #tpu.memory_space<vmem>>, %arg4: memref<24x24xf32, #tpu.memory_space<vmem>>, %arg5: memref<24x24xf32, #tpu.memory_space<vmem>>, %arg6: memref<1x24xf32, #tpu.memory_space<vmem>>, %arg7: memref<1xf32, #tpu.memory_space<smem>>, %arg8: memref<24x48xf32, #tpu.memory_space<vmem>>, %arg9: memref<1x48xf32, #tpu.memory_space<vmem>>, %arg10: memref<48x24xf32, #tpu.memory_space<vmem>>, %arg11: memref<1x24xf32, #tpu.memory_space<vmem>>, %arg12: memref<1x24xf32, #tpu.memory_space<vmem>>, %arg13: memref<1x24xf32, #tpu.memory_space<vmem>>, %arg14: memref<32x24xf32, #tpu.memory_space<vmem>>) attributes {dimension_semantics = [], scalar_prefetch = 0 : i64, scratch_operands = 0 : i64, tpu.core_type = #tpu.core_type<tc>} {
    %c0 = arith.constant 0 : index
    %0 = memref.load %arg7[%c0] : memref<1xf32, #tpu.memory_space<smem>>
    %c0_0 = arith.constant 0 : index
    %c0_1 = arith.constant 0 : index
    %1 = vector.load %arg2[%c0_0, %c0_1] : memref<24x4xf32, #tpu.memory_space<vmem>>, vector<24x4xf32>
    %c0_2 = arith.constant 0 : index
    %c0_3 = arith.constant 0 : index
    %2 = vector.load %arg3[%c0_2, %c0_3] : memref<4x24xf32, #tpu.memory_space<vmem>>, vector<4x24xf32>
    %c0_4 = arith.constant 0 : index
    %c0_5 = arith.constant 0 : index
    %3 = vector.load %arg4[%c0_4, %c0_5] : memref<24x24xf32, #tpu.memory_space<vmem>>, vector<24x24xf32>
    %c0_6 = arith.constant 0 : index
    %c0_7 = arith.constant 0 : index
    %4 = vector.load %arg5[%c0_6, %c0_7] : memref<24x24xf32, #tpu.memory_space<vmem>>, vector<24x24xf32>
    %c0_8 = arith.constant 0 : index
    %c0_9 = arith.constant 0 : index
    %5 = vector.load %arg8[%c0_8, %c0_9] : memref<24x48xf32, #tpu.memory_space<vmem>>, vector<24x48xf32>
    %c0_10 = arith.constant 0 : index
    %c0_11 = arith.constant 0 : index
    %6 = vector.load %arg10[%c0_10, %c0_11] : memref<48x24xf32, #tpu.memory_space<vmem>>, vector<48x24xf32>
    %c0_12 = arith.constant 0 : index
    %c0_13 = arith.constant 0 : index
    %7 = vector.load %arg0[%c0_12, %c0_13] : memref<32x24xf32, #tpu.memory_space<vmem>>, vector<16x24xf32>
    %c0_14 = arith.constant 0 : index
    %c0_15 = arith.constant 0 : index
    %8 = vector.load %arg1[%c0_14, %c0_15] : memref<32x24xf32, #tpu.memory_space<vmem>>, vector<16x24xf32>
    %cst = arith.constant dense<0.000000e+00> : vector<24xf32>
    %9 = vector.multi_reduction <add>, %8, %cst [0] : vector<16x24xf32> to vector<24xf32>
    %10 = vector.shape_cast %9 : vector<24xf32> to vector<1x24xf32>
    %cst_16 = arith.constant 1.600000e+01 : f32
    %11 = vector.broadcast %cst_16 : f32 to vector<1x24xf32>
    %12 = arith.divf %10, %11 : vector<1x24xf32>
    %cst_17 = arith.constant dense<0.000000e+00> : vector<1x4xf32>
    %13 = tpu.matmul %12, %1, %cst_17 {dimension_numbers = #tpu.dot_dimension_numbers<[1], [0], [0], [1], [0, 0, 1, 1], [], []>} : vector<1x24xf32>, vector<24x4xf32>, vector<1x4xf32> -> vector<1x4xf32>
    %cst_18 = arith.constant 0.000000e+00 : f32
    %14 = vector.broadcast %cst_18 : f32 to vector<1x4xf32>
    %15 = arith.maximumf %13, %14 : vector<1x4xf32>
    %cst_19 = arith.constant dense<0.000000e+00> : vector<1x24xf32>
    %16 = tpu.matmul %15, %2, %cst_19 {dimension_numbers = #tpu.dot_dimension_numbers<[1], [0], [0], [1], [0, 0, 1, 1], [], []>} : vector<1x4xf32>, vector<4x24xf32>, vector<1x24xf32> -> vector<1x24xf32>
    %cst_20 = arith.constant dense<0.000000e+00> : vector<16x24xf32>
    %17 = tpu.matmul %7, %3, %cst_20 {dimension_numbers = #tpu.dot_dimension_numbers<[1], [0], [0], [1], [0, 0, 1, 1], [], []>} : vector<16x24xf32>, vector<24x24xf32>, vector<16x24xf32> -> vector<16x24xf32>
    %cst_21 = arith.constant dense<0.000000e+00> : vector<16x24xf32>
    %18 = tpu.matmul %8, %4, %cst_21 {dimension_numbers = #tpu.dot_dimension_numbers<[1], [0], [0], [1], [0, 0, 1, 1], [], []>} : vector<16x24xf32>, vector<24x24xf32>, vector<16x24xf32> -> vector<16x24xf32>
    %19 = arith.addf %17, %18 : vector<16x24xf32>
    %c0_22 = arith.constant 0 : index
    %c0_23 = arith.constant 0 : index
    %20 = vector.load %arg6[%c0_22, %c0_23] : memref<1x24xf32, #tpu.memory_space<vmem>>, vector<1x24xf32>
    %21 = vector.broadcast %20 : vector<1x24xf32> to vector<16x24xf32>
    %22 = arith.addf %19, %21 : vector<16x24xf32>
    %23 = vector.broadcast %16 : vector<1x24xf32> to vector<16x24xf32>
    %24 = arith.mulf %22, %23 : vector<16x24xf32>
    %25 = vector.broadcast %0 : f32 to vector<16x24xf32>
    %26 = arith.mulf %25, %24 : vector<16x24xf32>
    %27 = arith.mulf %26, %7 : vector<16x24xf32>
    %28 = arith.addf %7, %27 : vector<16x24xf32>
    %cst_24 = arith.constant dense<0.000000e+00> : vector<16x48xf32>
    %29 = tpu.matmul %28, %5, %cst_24 {dimension_numbers = #tpu.dot_dimension_numbers<[1], [0], [0], [1], [0, 0, 1, 1], [], []>} : vector<16x24xf32>, vector<24x48xf32>, vector<16x48xf32> -> vector<16x48xf32>
    %c0_25 = arith.constant 0 : index
    %c0_26 = arith.constant 0 : index
    %30 = vector.load %arg9[%c0_25, %c0_26] : memref<1x48xf32, #tpu.memory_space<vmem>>, vector<1x48xf32>
    %31 = vector.broadcast %30 : vector<1x48xf32> to vector<16x48xf32>
    %32 = arith.addf %29, %31 : vector<16x48xf32>
    %cst_27 = arith.constant 0.000000e+00 : f32
    %33 = vector.broadcast %cst_27 : f32 to vector<16x48xf32>
    %34 = arith.maximumf %32, %33 : vector<16x48xf32>
    %cst_28 = arith.constant dense<0.000000e+00> : vector<16x24xf32>
    %35 = tpu.matmul %34, %6, %cst_28 {dimension_numbers = #tpu.dot_dimension_numbers<[1], [0], [0], [1], [0, 0, 1, 1], [], []>} : vector<16x48xf32>, vector<48x24xf32>, vector<16x24xf32> -> vector<16x24xf32>
    %c0_29 = arith.constant 0 : index
    %c0_30 = arith.constant 0 : index
    %36 = vector.load %arg11[%c0_29, %c0_30] : memref<1x24xf32, #tpu.memory_space<vmem>>, vector<1x24xf32>
    %37 = vector.broadcast %36 : vector<1x24xf32> to vector<16x24xf32>
    %38 = arith.addf %35, %37 : vector<16x24xf32>
    %39 = arith.addf %28, %38 : vector<16x24xf32>
    %c0_31 = arith.constant 0 : index
    %c0_32 = arith.constant 0 : index
    %40 = vector.load %arg12[%c0_31, %c0_32] : memref<1x24xf32, #tpu.memory_space<vmem>>, vector<1x24xf32>
    %c0_33 = arith.constant 0 : index
    %c0_34 = arith.constant 0 : index
    %41 = vector.load %arg13[%c0_33, %c0_34] : memref<1x24xf32, #tpu.memory_space<vmem>>, vector<1x24xf32>
    %cst_35 = arith.constant dense<0.000000e+00> : vector<16xf32>
    %42 = vector.multi_reduction <add>, %39, %cst_35 [1] : vector<16x24xf32> to vector<16xf32>
    %43 = vector.shape_cast %42 : vector<16xf32> to vector<16x1xf32>
    %cst_36 = arith.constant 2.400000e+01 : f32
    %44 = vector.broadcast %cst_36 : f32 to vector<16x1xf32>
    %45 = arith.divf %43, %44 : vector<16x1xf32>
    %46 = vector.broadcast %45 : vector<16x1xf32> to vector<16x24xf32>
    %47 = arith.subf %39, %46 : vector<16x24xf32>
    %48 = arith.mulf %47, %47 : vector<16x24xf32>
    %cst_37 = arith.constant dense<0.000000e+00> : vector<16xf32>
    %49 = vector.multi_reduction <add>, %48, %cst_37 [1] : vector<16x24xf32> to vector<16xf32>
    %50 = vector.shape_cast %49 : vector<16xf32> to vector<16x1xf32>
    %cst_38 = arith.constant 2.400000e+01 : f32
    %51 = vector.broadcast %cst_38 : f32 to vector<16x1xf32>
    %52 = arith.divf %50, %51 : vector<16x1xf32>
    %cst_39 = arith.constant 9.99999974E-6 : f32
    %53 = vector.broadcast %cst_39 : f32 to vector<16x1xf32>
    %54 = arith.addf %52, %53 : vector<16x1xf32>
    %55 = math.rsqrt %54 : vector<16x1xf32>
    %56 = vector.broadcast %55 : vector<16x1xf32> to vector<16x24xf32>
    %57 = arith.mulf %47, %56 : vector<16x24xf32>
    %58 = vector.broadcast %40 : vector<1x24xf32> to vector<16x24xf32>
    %59 = arith.mulf %57, %58 : vector<16x24xf32>
    %60 = vector.broadcast %41 : vector<1x24xf32> to vector<16x24xf32>
    %61 = arith.addf %59, %60 : vector<16x24xf32>
    %c0_40 = arith.constant 0 : index
    %c0_41 = arith.constant 0 : index
    %62 = vector.load %arg14[%c0_40, %c0_41] : memref<32x24xf32, #tpu.memory_space<vmem>>, vector<16x24xf32>
    tpu.vector_store %arg14[%c0_40, %c0_41], %61 {strides = array<i32>} : memref<32x24xf32, #tpu.memory_space<vmem>>, vector<16x24xf32>,
    %c16 = arith.constant 16 : index
    %c0_42 = arith.constant 0 : index
    %63 = vector.load %arg0[%c16, %c0_42] : memref<32x24xf32, #tpu.memory_space<vmem>>, vector<16x24xf32>
    %c16_43 = arith.constant 16 : index
    %c0_44 = arith.constant 0 : index
    %64 = vector.load %arg1[%c16_43, %c0_44] : memref<32x24xf32, #tpu.memory_space<vmem>>, vector<16x24xf32>
    %cst_45 = arith.constant dense<0.000000e+00> : vector<24xf32>
    %65 = vector.multi_reduction <add>, %64, %cst_45 [0] : vector<16x24xf32> to vector<24xf32>
    %66 = vector.shape_cast %65 : vector<24xf32> to vector<1x24xf32>
    %cst_46 = arith.constant 1.600000e+01 : f32
    %67 = vector.broadcast %cst_46 : f32 to vector<1x24xf32>
    %68 = arith.divf %66, %67 : vector<1x24xf32>
    %cst_47 = arith.constant dense<0.000000e+00> : vector<1x4xf32>
    %69 = tpu.matmul %68, %1, %cst_47 {dimension_numbers = #tpu.dot_dimension_numbers<[1], [0], [0], [1], [0, 0, 1, 1], [], []>} : vector<1x24xf32>, vector<24x4xf32>, vector<1x4xf32> -> vector<1x4xf32>
    %cst_48 = arith.constant 0.000000e+00 : f32
    %70 = vector.broadcast %cst_48 : f32 to vector<1x4xf32>
    %71 = arith.maximumf %69, %70 : vector<1x4xf32>
    %cst_49 = arith.constant dense<0.000000e+00> : vector<1x24xf32>
    %72 = tpu.matmul %71, %2, %cst_49 {dimension_numbers = #tpu.dot_dimension_numbers<[1], [0], [0], [1], [0, 0, 1, 1], [], []>} : vector<1x4xf32>, vector<4x24xf32>, vector<1x24xf32> -> vector<1x24xf32>
    %cst_50 = arith.constant dense<0.000000e+00> : vector<16x24xf32>
    %73 = tpu.matmul %63, %3, %cst_50 {dimension_numbers = #tpu.dot_dimension_numbers<[1], [0], [0], [1], [0, 0, 1, 1], [], []>} : vector<16x24xf32>, vector<24x24xf32>, vector<16x24xf32> -> vector<16x24xf32>
    %cst_51 = arith.constant dense<0.000000e+00> : vector<16x24xf32>
    %74 = tpu.matmul %64, %4, %cst_51 {dimension_numbers = #tpu.dot_dimension_numbers<[1], [0], [0], [1], [0, 0, 1, 1], [], []>} : vector<16x24xf32>, vector<24x24xf32>, vector<16x24xf32> -> vector<16x24xf32>
    %75 = arith.addf %73, %74 : vector<16x24xf32>
    %c0_52 = arith.constant 0 : index
    %c0_53 = arith.constant 0 : index
    %76 = vector.load %arg6[%c0_52, %c0_53] : memref<1x24xf32, #tpu.memory_space<vmem>>, vector<1x24xf32>
    %77 = vector.broadcast %76 : vector<1x24xf32> to vector<16x24xf32>
    %78 = arith.addf %75, %77 : vector<16x24xf32>
    %79 = vector.broadcast %72 : vector<1x24xf32> to vector<16x24xf32>
    %80 = arith.mulf %78, %79 : vector<16x24xf32>
    %81 = vector.broadcast %0 : f32 to vector<16x24xf32>
    %82 = arith.mulf %81, %80 : vector<16x24xf32>
    %83 = arith.mulf %82, %63 : vector<16x24xf32>
    %84 = arith.addf %63, %83 : vector<16x24xf32>
    %cst_54 = arith.constant dense<0.000000e+00> : vector<16x48xf32>
    %85 = tpu.matmul %84, %5, %cst_54 {dimension_numbers = #tpu.dot_dimension_numbers<[1], [0], [0], [1], [0, 0, 1, 1], [], []>} : vector<16x24xf32>, vector<24x48xf32>, vector<16x48xf32> -> vector<16x48xf32>
    %c0_55 = arith.constant 0 : index
    %c0_56 = arith.constant 0 : index
    %86 = vector.load %arg9[%c0_55, %c0_56] : memref<1x48xf32, #tpu.memory_space<vmem>>, vector<1x48xf32>
    %87 = vector.broadcast %86 : vector<1x48xf32> to vector<16x48xf32>
    %88 = arith.addf %85, %87 : vector<16x48xf32>
    %cst_57 = arith.constant 0.000000e+00 : f32
    %89 = vector.broadcast %cst_57 : f32 to vector<16x48xf32>
    %90 = arith.maximumf %88, %89 : vector<16x48xf32>
    %cst_58 = arith.constant dense<0.000000e+00> : vector<16x24xf32>
    %91 = tpu.matmul %90, %6, %cst_58 {dimension_numbers = #tpu.dot_dimension_numbers<[1], [0], [0], [1], [0, 0, 1, 1], [], []>} : vector<16x48xf32>, vector<48x24xf32>, vector<16x24xf32> -> vector<16x24xf32>
    %c0_59 = arith.constant 0 : index
    %c0_60 = arith.constant 0 : index
    %92 = vector.load %arg11[%c0_59, %c0_60] : memref<1x24xf32, #tpu.memory_space<vmem>>, vector<1x24xf32>
    %93 = vector.broadcast %92 : vector<1x24xf32> to vector<16x24xf32>
    %94 = arith.addf %91, %93 : vector<16x24xf32>
    %95 = arith.addf %84, %94 : vector<16x24xf32>
    %c0_61 = arith.constant 0 : index
    %c0_62 = arith.constant 0 : index
    %96 = vector.load %arg12[%c0_61, %c0_62] : memref<1x24xf32, #tpu.memory_space<vmem>>, vector<1x24xf32>
    %c0_63 = arith.constant 0 : index
    %c0_64 = arith.constant 0 : index
    %97 = vector.load %arg13[%c0_63, %c0_64] : memref<1x24xf32, #tpu.memory_space<vmem>>, vector<1x24xf32>
    %cst_65 = arith.constant dense<0.000000e+00> : vector<16xf32>
    %98 = vector.multi_reduction <add>, %95, %cst_65 [1] : vector<16x24xf32> to vector<16xf32>
    %99 = vector.shape_cast %98 : vector<16xf32> to vector<16x1xf32>
    %cst_66 = arith.constant 2.400000e+01 : f32
    %100 = vector.broadcast %cst_66 : f32 to vector<16x1xf32>
    %101 = arith.divf %99, %100 : vector<16x1xf32>
    %102 = vector.broadcast %101 : vector<16x1xf32> to vector<16x24xf32>
    %103 = arith.subf %95, %102 : vector<16x24xf32>
    %104 = arith.mulf %103, %103 : vector<16x24xf32>
    %cst_67 = arith.constant dense<0.000000e+00> : vector<16xf32>
    %105 = vector.multi_reduction <add>, %104, %cst_67 [1] : vector<16x24xf32> to vector<16xf32>
    %106 = vector.shape_cast %105 : vector<16xf32> to vector<16x1xf32>
    %cst_68 = arith.constant 2.400000e+01 : f32
    %107 = vector.broadcast %cst_68 : f32 to vector<16x1xf32>
    %108 = arith.divf %106, %107 : vector<16x1xf32>
    %cst_69 = arith.constant 9.99999974E-6 : f32
    %109 = vector.broadcast %cst_69 : f32 to vector<16x1xf32>
    %110 = arith.addf %108, %109 : vector<16x1xf32>
    %111 = math.rsqrt %110 : vector<16x1xf32>
    %112 = vector.broadcast %111 : vector<16x1xf32> to vector<16x24xf32>
    %113 = arith.mulf %103, %112 : vector<16x24xf32>
    %114 = vector.broadcast %96 : vector<1x24xf32> to vector<16x24xf32>
    %115 = arith.mulf %113, %114 : vector<16x24xf32>
    %116 = vector.broadcast %97 : vector<1x24xf32> to vector<16x24xf32>
    %117 = arith.addf %115, %116 : vector<16x24xf32>
    %c16_70 = arith.constant 16 : index
    %c0_71 = arith.constant 0 : index
    %118 = vector.load %arg14[%c16_70, %c0_71] : memref<32x24xf32, #tpu.memory_space<vmem>>, vector<16x24xf32>
    tpu.vector_store %arg14[%c16_70, %c0_71], %117 {strides = array<i32>} : memref<32x24xf32, #tpu.memory_space<vmem>>, vector<16x24xf32>,
    return
  }
}

</mosaic_0001>

<llo_original>
// kernel: transformer_encoder_layer.3
$region0: #{transformer_encoder_layer.3}
  #allocation0 [shape = 'u32[]', space=smem, size = 0x4, offset = 0x4, fixed_abs, tag = 'smem constant byte address 0x4 - core index']
  #allocation1 [shape = 'u32[144,128]{1,0:T(1,128)}', space=vmem, size = 0x12000, scoped, tag = 'internal scratch']
  #allocation2 [shape = 'f32[1]{0:T(128)S(6)}', space=smem, size = 0x200, scoped, tag = 'scoped memory for transformer_encoder_layer.3']
  %s0 = inlined_call_operand.vmem [shape: f32[32,24], index: 0, kind: input, shape index: {}]
  %s1 = inlined_call_operand.vmem [shape: f32[32,24], index: 1, kind: input, shape index: {}]
  %s2 = inlined_call_operand.vmem [shape: f32[24,4], index: 2, kind: input, shape index: {}]
  %s3 = inlined_call_operand.vmem [shape: f32[4,24], index: 3, kind: input, shape index: {}]
  %s4 = inlined_call_operand.vmem [shape: f32[24,24], index: 4, kind: input, shape index: {}]
  %s5 = inlined_call_operand.vmem [shape: f32[24,24], index: 5, kind: input, shape index: {}]
  %s6 = inlined_call_operand.vmem [shape: f32[1,24], index: 6, kind: input, shape index: {}]
  %s7 = inlined_call_operand.<no memory space> [shape: f32[1], index: 7, kind: input, shape index: {}]
  %s8 = inlined_call_operand.vmem [shape: f32[24,48], index: 8, kind: input, shape index: {}]
  %s9 = inlined_call_operand.vmem [shape: f32[1,48], index: 9, kind: input, shape index: {}]
  %s10 = inlined_call_operand.vmem [shape: f32[48,24], index: 10, kind: input, shape index: {}]
  %s11 = inlined_call_operand.vmem [shape: f32[1,24], index: 11, kind: input, shape index: {}]
  %s12 = inlined_call_operand.vmem [shape: f32[1,24], index: 12, kind: input, shape index: {}]
  %s13 = inlined_call_operand.vmem [shape: f32[1,24], index: 13, kind: input, shape index: {}]
  %s14 = inlined_call_operand.vmem [shape: f32[32,24], index: 14, kind: output, shape index: {}]
  %s15 = sld [smem:[#allocation0]]
  $region66: #{transformer_encoder_layer.3} parent=0
    _
  %s17 = ssub.s32 1, %s15
  %s18 = scalar_select 0, %s17, %s15
  %19 = sst [smem:[#allocation2]] %s7
  // Predicated region
  $region2: #{transformer_encoder_layer.3} parent=0 // pred_check
    _
  $region3: #{transformer_encoder_layer.3} parent=0 // pred_check_branch
    %21 = sbr.rel (0) target = $region5
  $region4: #{transformer_encoder_layer.3} parent=0 // pred_region
    _
  $region5: #{transformer_encoder_layer.3} parent=0 // pred_fallthru
    _
  // Predicated region
  $region6: #{transformer_encoder_layer.3} parent=0 // pred_check
    _
  $region7: #{transformer_encoder_layer.3} parent=0 // pred_check_branch
    %23 = sbr.rel (0) target = $region9
  $region8: #{transformer_encoder_layer.3} parent=0 // pred_region
    _
  $region9: #{transformer_encoder_layer.3} parent=0 // pred_fallthru
    _
  // Predicated region
  $region10: #{transformer_encoder_layer.3} parent=0 // pred_check
    _
  $region11: #{transformer_encoder_layer.3} parent=0 // pred_check_branch
    %25 = sbr.rel (0) target = $region13
  $region12: #{transformer_encoder_layer.3} parent=0 // pred_region
    _
  $region13: #{transformer_encoder_layer.3} parent=0 // pred_fallthru
    _
  // Predicated region
  $region14: #{transformer_encoder_layer.3} parent=0 // pred_check
    _
  $region15: #{transformer_encoder_layer.3} parent=0 // pred_check_branch
    %27 = sbr.rel (0) target = $region17
  $region16: #{transformer_encoder_layer.3} parent=0 // pred_region
    _
  $region17: #{transformer_encoder_layer.3} parent=0 // pred_fallthru
    _
  // Predicated region
  $region18: #{transformer_encoder_layer.3} parent=0 // pred_check
    _
  $region19: #{transformer_encoder_layer.3} parent=0 // pred_check_branch
    %29 = sbr.rel (0) target = $region21
  $region20: #{transformer_encoder_layer.3} parent=0 // pred_region
    _
  $region21: #{transformer_encoder_layer.3} parent=0 // pred_fallthru
    _
  // Predicated region
  $region22: #{transformer_encoder_layer.3} parent=0 // pred_check
    _
  $region23: #{transformer_encoder_layer.3} parent=0 // pred_check_branch
    %31 = sbr.rel (0) target = $region25
  $region24: #{transformer_encoder_layer.3} parent=0 // pred_region
    _
  $region25: #{transformer_encoder_layer.3} parent=0 // pred_fallthru
    _
  // Predicated region
  $region26: #{transformer_encoder_layer.3} parent=0 // pred_check
    _
  $region27: #{transformer_encoder_layer.3} parent=0 // pred_check_branch
    %33 = sbr.rel (0) target = $region29
  $region28: #{transformer_encoder_layer.3} parent=0 // pred_region
    _
  $region29: #{transformer_encoder_layer.3} parent=0 // pred_fallthru
    _
  // Predicated region
  $region30: #{transformer_encoder_layer.3} parent=0 // pred_check
    _
  $region31: #{transformer_encoder_layer.3} parent=0 // pred_check_branch
    %35 = sbr.rel (0) target = $region33
  $region32: #{transformer_encoder_layer.3} parent=0 // pred_region
    _
  $region33: #{transformer_encoder_layer.3} parent=0 // pred_fallthru
    _
  // Predicated region
  $region34: #{transformer_encoder_layer.3} parent=0 // pred_check
    _
  $region35: #{transformer_encoder_layer.3} parent=0 // pred_check_branch
    %37 = sbr.rel (0) target = $region37
  $region36: #{transformer_encoder_layer.3} parent=0 // pred_region
    _
  $region37: #{transformer_encoder_layer.3} parent=0 // pred_fallthru
    _
  // Predicated region
  $region38: #{transformer_encoder_layer.3} parent=0 // pred_check
    _
  $region39: #{transformer_encoder_layer.3} parent=0 // pred_check_branch
    %39 = sbr.rel (0) target = $region41
  $region40: #{transformer_encoder_layer.3} parent=0 // pred_region
    _
  $region41: #{transformer_encoder_layer.3} parent=0 // pred_fallthru
    _
  // Predicated region
  $region42: #{transformer_encoder_layer.3} parent=0 // pred_check
    _
  $region43: #{transformer_encoder_layer.3} parent=0 // pred_check_branch
    %41 = sbr.rel (0) target = $region45
  $region44: #{transformer_encoder_layer.3} parent=0 // pred_region
    _
  $region45: #{transformer_encoder_layer.3} parent=0 // pred_fallthru
    _
  // Predicated region
  $region46: #{transformer_encoder_layer.3} parent=0 // pred_check
    _
  $region47: #{transformer_encoder_layer.3} parent=0 // pred_check_branch
    %43 = sbr.rel (0) target = $region49
  $region48: #{transformer_encoder_layer.3} parent=0 // pred_region
    _
  $region49: #{transformer_encoder_layer.3} parent=0 // pred_fallthru
    _
  // Predicated region
  $region50: #{transformer_encoder_layer.3} parent=0 // pred_check
    _
  $region51: #{transformer_encoder_layer.3} parent=0 // pred_check_branch
    %45 = sbr.rel (0) target = $region53
  $region52: #{transformer_encoder_layer.3} parent=0 // pred_region
    _
  $region53: #{transformer_encoder_layer.3} parent=0 // pred_fallthru
    _
  // Predicated region
  $region54: #{transformer_encoder_layer.3} parent=0 // pred_check
    _
  $region55: #{transformer_encoder_layer.3} parent=0 // pred_check_branch
    %47 = sbr.rel (0) target = $region57
  $region56: #{transformer_encoder_layer.3} parent=0 // pred_region
    _
  $region57: #{transformer_encoder_layer.3} parent=0 // pred_fallthru
    _
  %s48 = sld [smem:[#allocation2]]
  %v49 = vld [vmem:[%s2] sm:$0xff]
  %v50 = vld [vmem:[%s2 + $0x8] sm:$0xff]
  %v51 = vld [vmem:[%s2 + $0x10] sm:$0xff]
  %v52 = vld [vmem:[%s3] sm:$0xf]
  %v53 = vld [vmem:[%s4] sm:$0xff]
  %v54 = vld [vmem:[%s4 + $0x8] sm:$0xff]
  %v55 = vld [vmem:[%s4 + $0x10] sm:$0xff]
  %v56 = vld [vmem:[%s5] sm:$0xff]
  %v57 = vld [vmem:[%s5 + $0x8] sm:$0xff]
  %v58 = vld [vmem:[%s5 + $0x10] sm:$0xff]
  %v59 = vld [vmem:[%s8] sm:$0xff]
  %v60 = vld [vmem:[%s8 + $0x8] sm:$0xff]
  %v61 = vld [vmem:[%s8 + $0x10] sm:$0xff]
  %v62 = vld [vmem:[%s10] sm:$0xff]
  %v63 = vld [vmem:[%s10 + $0x8] sm:$0xff]
  %v64 = vld [vmem:[%s10 + $0x10] sm:$0xff]
  %v65 = vld [vmem:[%s10 + $0x18] sm:$0xff]
  %v66 = vld [vmem:[%s10 + $0x20] sm:$0xff]
  %v67 = vld [vmem:[%s10 + $0x28] sm:$0xff]
  %v68 = vld [vmem:[%s0] sm:$0xff]
  %v69 = vld [vmem:[%s0 + $0x8] sm:$0xff]
  %v70 = vld [vmem:[%s1] sm:$0xff]
  %v71 = vld [vmem:[%s1 + $0x8] sm:$0xff]
  %vm72 = vcmask 195584
  %v73 = vsel %vm72, %v70, 0.0
  %v74 = vsel %vm72, %v71, 0.0
  %v75 = vadd.f32 %v73, %v74
  %v76 = vrot.slane %v75, 4
  %v77 = vadd.f32 %v75, %v76
  %v78 = vrot.slane %v77, 2
  %v79 = vadd.f32 %v77, %v78
  %v80 = vrot.slane %v79, 1
  %v81 = vadd.f32 %v79, %v80
  %v82 = vrcp.pop 16.0
  %v83 = vmul.f32 %v81, %v82
  %v85 = vsel %vm72, %v83, 0
  %87 = vmatprep.subr.mxu0 0.0
  %88 = vmatpush1.msra.mxu0 %v49
  %89 = vmatprep.subr.mxu0 0.0
  %90 = vmatpush1.msra.mxu0 %v50
  %91 = vmatprep.subr.mxu0 0.0
  %92 = vmatpush1.msra.mxu0 %v51
  %93 = vmatprep.subr.mxu0 0.0
  %94 = vmatpush1.msra.mxu0 0.0
  %95 = vmatprep.subr.mxu0 0.0
  %96 = vmatpush1.msra.mxu0 0.0
  %97 = vmatprep.subr.mxu0 0.0
  %98 = vmatpush1.msra.mxu0 0.0
  %99 = vmatprep.subr.mxu0 0.0
  %100 = vmatpush1.msra.mxu0 0.0
  %101 = vmatprep.subr.mxu0 0.0
  %102 = vmatpush1.msra.mxu0 0.0
  %103 = vmatprep.subr.mxu0 0.0
  %104 = vmatpush1.msra.mxu0 0.0
  %105 = vmatprep.subr.mxu0 0.0
  %106 = vmatpush1.msra.mxu0 0.0
  %107 = vmatprep.subr.mxu0 0.0
  %108 = vmatpush1.msra.mxu0 0.0
  %109 = vmatprep.subr.mxu0 0.0
  %110 = vmatpush1.msra.mxu0 0.0
  %111 = vmatprep.subr.mxu0 0.0
  %112 = vmatpush1.msra.mxu0 0.0
  %113 = vmatprep.subr.mxu0 0.0
  %114 = vmatpush1.msra.mxu0 0.0
  %115 = vmatprep.subr.mxu0 0.0
  %116 = vmatpush1.msra.mxu0 0.0
  %117 = vmatprep.subr.mxu0 0.0
  %118 = vmatpush1.msra.mxu0 0.0
  %119 = vmatprep.subr.mxu0 0.0
  %120 = vmatpush1.msra.mxu0 0.0
  %121 = vmatprep.subr.mxu0 0.0
  %122 = vmatpush1.msra.mxu0 0.0
  %123 = vmatprep.subr.mxu0 0.0
  %124 = vmatpush1.msra.mxu0 0.0
  %125 = vmatprep.subr.mxu0 0.0
  %126 = vmatpush1.msra.mxu0 0.0
  %127 = vmatprep.subr.mxu0 0.0
  %128 = vmatpush1.msra.mxu0 0.0
  %129 = vmatprep.subr.mxu0 0.0
  %130 = vmatpush1.msra.mxu0 0.0
  %131 = vmatprep.subr.mxu0 0.0
  %132 = vmatpush1.msra.mxu0 0.0
  %133 = vmatprep.subr.mxu0 0.0
  %134 = vmatpush1.msra.mxu0 0.0
  %135 = vmatprep.subr.mxu0 0.0
  %136 = vmatpush1.msra.mxu0 0.0
  %137 = vmatprep.subr.mxu0 0.0
  %138 = vmatpush1.msra.mxu0 0.0
  %139 = vmatprep.subr.mxu0 0.0
  %140 = vmatpush1.msra.mxu0 0.0
  %141 = vmatprep.subr.mxu0 0.0
  %142 = vmatpush1.msra.mxu0 0.0
  %143 = vmatprep.subr.mxu0 0.0
  %144 = vmatpush1.msra.mxu0 0.0
  %145 = vmatprep.subr.mxu0 0.0
  %146 = vmatpush1.msra.mxu0 0.0
  %147 = vmatprep.subr.mxu0 0.0
  %148 = vmatpush1.msra.mxu0 0.0
  %149 = vmatprep.subr.mxu0 0.0
  %150 = vmatpush1.msra.mxu0 0.0
  %151 = vmatprep.mubr.f32.mxu0 0.0
  %152 = vmatmul.mubr.f32.gmra.mrb[0].mxu0 %v85
  %v153 = vpop.f32.mrb[0].mxu0
  %v154 = vadd.f32 0.0, %v153
  %v155 = vpop.f32.mrb[0].mxu0
  %156 = vdwg.mxu0
  %v157 = vmax.f32 %v154, 0.0
  %vm158 = vcmask 31744
  %v160 = vsel %vm158, %v157, 0
  %vm162 = vcmask 1043456
  %v164 = vsel %vm162, %v52, 0
  %166 = vmatprep.subr.mxu0 0.0
  %167 = vmatpush1.msra.mxu0 %v164
  %168 = vmatprep.subr.mxu0 0.0
  %169 = vmatpush1.msra.mxu0 0.0
  %170 = vmatprep.subr.mxu0 0.0
  %171 = vmatpush1.msra.mxu0 0.0
  %172 = vmatprep.subr.mxu0 0.0
  %173 = vmatpush1.msra.mxu0 0.0
  %174 = vmatprep.subr.mxu0 0.0
  %175 = vmatpush1.msra.mxu0 0.0
  %176 = vmatprep.subr.mxu0 0.0
  %177 = vmatpush1.msra.mxu0 0.0
  %178 = vmatprep.subr.mxu0 0.0
  %179 = vmatpush1.msra.mxu0 0.0
  %180 = vmatprep.subr.mxu0 0.0
  %181 = vmatpush1.msra.mxu0 0.0
  %182 = vmatprep.subr.mxu0 0.0
  %183 = vmatpush1.msra.mxu0 0.0
  %184 = vmatprep.subr.mxu0 0.0
  %185 = vmatpush1.msra.mxu0 0.0
  %186 = vmatprep.subr.mxu0 0.0
  %187 = vmatpush1.msra.mxu0 0.0
  %188 = vmatprep.subr.mxu0 0.0
  %189 = vmatpush1.msra.mxu0 0.0
  %190 = vmatprep.subr.mxu0 0.0
  %191 = vmatpush1.msra.mxu0 0.0
  %192 = vmatprep.subr.mxu0 0.0
  %193 = vmatpush1.msra.mxu0 0.0
  %194 = vmatprep.subr.mxu0 0.0
  %195 = vmatpush1.msra.mxu0 0.0
  %196 = vmatprep.subr.mxu0 0.0
  %197 = vmatpush1.msra.mxu0 0.0
  %198 = vmatprep.subr.mxu0 0.0
  %199 = vmatpush1.msra.mxu0 0.0
  %200 = vmatprep.subr.mxu0 0.0
  %201 = vmatpush1.msra.mxu0 0.0
  %202 = vmatprep.subr.mxu0 0.0
  %203 = vmatpush1.msra.mxu0 0.0
  %204 = vmatprep.subr.mxu0 0.0
  %205 = vmatpush1.msra.mxu0 0.0
  %206 = vmatprep.subr.mxu0 0.0
  %207 = vmatpush1.msra.mxu0 0.0
  %208 = vmatprep.subr.mxu0 0.0
  %209 = vmatpush1.msra.mxu0 0.0
  %210 = vmatprep.subr.mxu0 0.0
  %211 = vmatpush1.msra.mxu0 0.0
  %212 = vmatprep.subr.mxu0 0.0
  %213 = vmatpush1.msra.mxu0 0.0
  %214 = vmatprep.subr.mxu0 0.0
  %215 = vmatpush1.msra.mxu0 0.0
  %216 = vmatprep.subr.mxu0 0.0
  %217 = vmatpush1.msra.mxu0 0.0
  %218 = vmatprep.subr.mxu0 0.0
  %219 = vmatpush1.msra.mxu0 0.0
  %220 = vmatprep.subr.mxu0 0.0
  %221 = vmatpush1.msra.mxu0 0.0
  %222 = vmatprep.subr.mxu0 0.0
  %223 = vmatpush1.msra.mxu0 0.0
  %224 = vmatprep.subr.mxu0 0.0
  %225 = vmatpush1.msra.mxu0 0.0
  %226 = vmatprep.subr.mxu0 0.0
  %227 = vmatpush1.msra.mxu0 0.0
  %228 = vmatprep.subr.mxu0 0.0
  %229 = vmatpush1.msra.mxu0 0.0
  %230 = vmatprep.mubr.f32.mxu0 0.0
  %231 = vmatmul.mubr.f32.gmra.mrb[0].mxu0 %v160
  %v232 = vpop.f32.mrb[0].mxu0
  %v233 = vadd.f32 0.0, %v232
  %v234 = vpop.f32.mrb[0].mxu0
  %235 = vdwg.mxu0
  %v237 = vsel %vm72, %v70, 0
  %v240 = vsel %vm72, %v71, 0
  %242 = vmatprep.subr.mxu0 0.0
  %243 = vmatpush1.msra.mxu0 %v56
  %244 = vmatprep.subr.mxu0 0.0
  %245 = vmatpush1.msra.mxu0 %v57
  %246 = vmatprep.subr.mxu0 0.0
  %247 = vmatpush1.msra.mxu0 %v58
  %248 = vmatprep.subr.mxu0 0.0
  %249 = vmatpush1.msra.mxu0 0.0
  %250 = vmatprep.subr.mxu0 0.0
  %251 = vmatpush1.msra.mxu0 0.0
  %252 = vmatprep.subr.mxu0 0.0
  %253 = vmatpush1.msra.mxu0 0.0
  %254 = vmatprep.subr.mxu0 0.0
  %255 = vmatpush1.msra.mxu0 0.0
  %256 = vmatprep.subr.mxu0 0.0
  %257 = vmatpush1.msra.mxu0 0.0
  %258 = vmatprep.subr.mxu0 0.0
  %259 = vmatpush1.msra.mxu0 0.0
  %260 = vmatprep.subr.mxu0 0.0
  %261 = vmatpush1.msra.mxu0 0.0
  %262 = vmatprep.subr.mxu0 0.0
  %263 = vmatpush1.msra.mxu0 0.0
  %264 = vmatprep.subr.mxu0 0.0
  %265 = vmatpush1.msra.mxu0 0.0
  %266 = vmatprep.subr.mxu0 0.0
  %267 = vmatpush1.msra.mxu0 0.0
  %268 = vmatprep.subr.mxu0 0.0
  %269 = vmatpush1.msra.mxu0 0.0
  %270 = vmatprep.subr.mxu0 0.0
  %271 = vmatpush1.msra.mxu0 0.0
  %272 = vmatprep.subr.mxu0 0.0
  %273 = vmatpush1.msra.mxu0 0.0
  %274 = vmatprep.subr.mxu0 0.0
  %275 = vmatpush1.msra.mxu0 0.0
  %276 = vmatprep.subr.mxu0 0.0
  %277 = vmatpush1.msra.mxu0 0.0
  %278 = vmatprep.subr.mxu0 0.0
  %279 = vmatpush1.msra.mxu0 0.0
  %280 = vmatprep.subr.mxu0 0.0
  %281 = vmatpush1.msra.mxu0 0.0
  %282 = vmatprep.subr.mxu0 0.0
  %283 = vmatpush1.msra.mxu0 0.0
  %284 = vmatprep.subr.mxu0 0.0
  %285 = vmatpush1.msra.mxu0 0.0
  %286 = vmatprep.subr.mxu0 0.0
  %287 = vmatpush1.msra.mxu0 0.0
  %288 = vmatprep.subr.mxu0 0.0
  %289 = vmatpush1.msra.mxu0 0.0
  %290 = vmatprep.subr.mxu0 0.0
  %291 = vmatpush1.msra.mxu0 0.0
  %292 = vmatprep.subr.mxu0 0.0
  %293 = vmatpush1.msra.mxu0 0.0
  %294 = vmatprep.subr.mxu0 0.0
  %295 = vmatpush1.msra.mxu0 0.0
  %296 = vmatprep.subr.mxu0 0.0
  %297 = vmatpush1.msra.mxu0 0.0
  %298 = vmatprep.subr.mxu0 0.0
  %299 = vmatpush1.msra.mxu0 0.0
  %300 = vmatprep.subr.mxu0 0.0
  %301 = vmatpush1.msra.mxu0 0.0
  %302 = vmatprep.subr.mxu0 0.0
  %303 = vmatpush1.msra.mxu0 0.0
  %304 = vmatprep.subr.mxu0 0.0
  %305 = vmatpush1.msra.mxu0 0.0
  %306 = vmatprep.mubr.f32.mxu0 0.0
  %307 = vmatmul.mubr.f32.gmra.mrb[0].mxu0 %v237
  %v308 = vpop.f32.mrb[0].mxu0
  %v309 = vadd.f32 0.0, %v308
  %v310 = vpop.f32.mrb[0].mxu0
  %311 = vmatprep.mubr.f32.mxu0 0.0
  %312 = vmatmul.mubr.f32.gmra.mrb[0].mxu0 %v240
  %v313 = vpop.f32.mrb[0].mxu0
  %v314 = vadd.f32 0.0, %v313
  %v315 = vpop.f32.mrb[0].mxu0
  %316 = vdwg.mxu0
  %v318 = vsel %vm72, %v68, 0
  %v321 = vsel %vm72, %v69, 0
  %323 = vmatprep.subr.mxu0 0.0
  %324 = vmatpush1.msra.mxu0 %v53
  %325 = vmatprep.subr.mxu0 0.0
  %326 = vmatpush1.msra.mxu0 %v54
  %327 = vmatprep.subr.mxu0 0.0
  %328 = vmatpush1.msra.mxu0 %v55
  %329 = vmatprep.subr.mxu0 0.0
  %330 = vmatpush1.msra.mxu0 0.0
  %331 = vmatprep.subr.mxu0 0.0
  %332 = vmatpush1.msra.mxu0 0.0
  %333 = vmatprep.subr.mxu0 0.0
  %334 = vmatpush1.msra.mxu0 0.0
  %335 = vmatprep.subr.mxu0 0.0
  %336 = vmatpush1.msra.mxu0 0.0
  %337 = vmatprep.subr.mxu0 0.0
  %338 = vmatpush1.msra.mxu0 0.0
  %339 = vmatprep.subr.mxu0 0.0
  %340 = vmatpush1.msra.mxu0 0.0
  %341 = vmatprep.subr.mxu0 0.0
  %342 = vmatpush1.msra.mxu0 0.0
  %343 = vmatprep.subr.mxu0 0.0
  %344 = vmatpush1.msra.mxu0 0.0
  %345 = vmatprep.subr.mxu0 0.0
  %346 = vmatpush1.msra.mxu0 0.0
  %347 = vmatprep.subr.mxu0 0.0
  %348 = vmatpush1.msra.mxu0 0.0
  %349 = vmatprep.subr.mxu0 0.0
  %350 = vmatpush1.msra.mxu0 0.0
  %351 = vmatprep.subr.mxu0 0.0
  %352 = vmatpush1.msra.mxu0 0.0
  %353 = vmatprep.subr.mxu0 0.0
  %354 = vmatpush1.msra.mxu0 0.0
  %355 = vmatprep.subr.mxu0 0.0
  %356 = vmatpush1.msra.mxu0 0.0
  %357 = vmatprep.subr.mxu0 0.0
  %358 = vmatpush1.msra.mxu0 0.0
  %359 = vmatprep.subr.mxu0 0.0
  %360 = vmatpush1.msra.mxu0 0.0
  %361 = vmatprep.subr.mxu0 0.0
  %362 = vmatpush1.msra.mxu0 0.0
  %363 = vmatprep.subr.mxu0 0.0
  %364 = vmatpush1.msra.mxu0 0.0
  %365 = vmatprep.subr.mxu0 0.0
  %366 = vmatpush1.msra.mxu0 0.0
  %367 = vmatprep.subr.mxu0 0.0
  %368 = vmatpush1.msra.mxu0 0.0
  %369 = vmatprep.subr.mxu0 0.0
  %370 = vmatpush1.msra.mxu0 0.0
  %371 = vmatprep.subr.mxu0 0.0
  %372 = vmatpush1.msra.mxu0 0.0
  %373 = vmatprep.subr.mxu0 0.0
  %374 = vmatpush1.msra.mxu0 0.0
  %375 = vmatprep.subr.mxu0 0.0
  %376 = vmatpush1.msra.mxu0 0.0
  %377 = vmatprep.subr.mxu0 0.0
  %378 = vmatpush1.msra.mxu0 0.0
  %379 = vmatprep.subr.mxu0 0.0
  %380 = vmatpush1.msra.mxu0 0.0
  %381 = vmatprep.subr.mxu0 0.0
  %382 = vmatpush1.msra.mxu0 0.0
  %383 = vmatprep.subr.mxu0 0.0
  %384 = vmatpush1.msra.mxu0 0.0
  %385 = vmatprep.subr.mxu0 0.0
  %386 = vmatpush1.msra.mxu0 0.0
  %387 = vmatprep.mubr.f32.mxu0 0.0
  %388 = vmatmul.mubr.f32.gmra.mrb[0].mxu0 %v318
  %v389 = vpop.f32.mrb[0].mxu0
  %v390 = vadd.f32 %v309, %v389
  %v391 = vpop.f32.mrb[0].mxu0
  %392 = vmatprep.mubr.f32.mxu0 0.0
  %393 = vmatmul.mubr.f32.gmra.mrb[0].mxu0 %v321
  %v394 = vpop.f32.mrb[0].mxu0
  %v395 = vadd.f32 %v314, %v394
  %v396 = vpop.f32.mrb[0].mxu0
  %397 = vdwg.mxu0
  %v398 = vld [vmem:[%s6] sm:$0x1]
  %v400 = vlaneseq
  %v401 = vshrl.u32 %v400, 7
  %v402 = vsub.s32 0, %v401
  %v403 = vrot.slane %v398, %v402
  %v405 = vadd.f32 %v390, %v403
  %v406 = vadd.f32 %v395, %v403
  %v407 = vlaneseq
  %v408 = vshrl.u32 %v407, 7
  %v409 = vsub.s32 0, %v408
  %v410 = vrot.slane %v233, %v409
  %v411 = vmul.f32 %v405, %v410
  %v412 = vmul.f32 %v406, %v410
  %v413 = vstv %s48
  %v414 = vmul.f32 %v413, %v411
  %v415 = vmul.f32 %v413, %v412
  %v416 = vmul.f32 %v414, %v68
  %v417 = vmul.f32 %v415, %v69
  %v418 = vadd.f32 %v68, %v416
  %v419 = vadd.f32 %v69, %v417
  %v420 = vld [vmem:[%s9] sm:$0x1]
  %v422 = vlaneseq
  %v423 = vshrl.u32 %v422, 7
  %v424 = vsub.s32 0, %v423
  %v425 = vrot.slane %v420, %v424
  %v428 = vsel %vm72, %v418, 0
  %v431 = vsel %vm72, %v419, 0
  %433 = vmatprep.subr.mxu0 0.0
  %434 = vmatpush1.msra.mxu0 %v59
  %435 = vmatprep.subr.mxu0 0.0
  %436 = vmatpush1.msra.mxu0 %v60
  %437 = vmatprep.subr.mxu0 0.0
  %438 = vmatpush1.msra.mxu0 %v61
  %439 = vmatprep.subr.mxu0 0.0
  %440 = vmatpush1.msra.mxu0 0.0
  %441 = vmatprep.subr.mxu0 0.0
  %442 = vmatpush1.msra.mxu0 0.0
  %443 = vmatprep.subr.mxu0 0.0
  %444 = vmatpush1.msra.mxu0 0.0
  %445 = vmatprep.subr.mxu0 0.0
  %446 = vmatpush1.msra.mxu0 0.0
  %447 = vmatprep.subr.mxu0 0.0
  %448 = vmatpush1.msra.mxu0 0.0
  %449 = vmatprep.subr.mxu0 0.0
  %450 = vmatpush1.msra.mxu0 0.0
  %451 = vmatprep.subr.mxu0 0.0
  %452 = vmatpush1.msra.mxu0 0.0
  %453 = vmatprep.subr.mxu0 0.0
  %454 = vmatpush1.msra.mxu0 0.0
  %455 = vmatprep.subr.mxu0 0.0
  %456 = vmatpush1.msra.mxu0 0.0
  %457 = vmatprep.subr.mxu0 0.0
  %458 = vmatpush1.msra.mxu0 0.0
  %459 = vmatprep.subr.mxu0 0.0
  %460 = vmatpush1.msra.mxu0 0.0
  %461 = vmatprep.subr.mxu0 0.0
  %462 = vmatpush1.msra.mxu0 0.0
  %463 = vmatprep.subr.mxu0 0.0
  %464 = vmatpush1.msra.mxu0 0.0
  %465 = vmatprep.subr.mxu0 0.0
  %466 = vmatpush1.msra.mxu0 0.0
  %467 = vmatprep.subr.mxu0 0.0
  %468 = vmatpush1.msra.mxu0 0.0
  %469 = vmatprep.subr.mxu0 0.0
  %470 = vmatpush1.msra.mxu0 0.0
  %471 = vmatprep.subr.mxu0 0.0
  %472 = vmatpush1.msra.mxu0 0.0
  %473 = vmatprep.subr.mxu0 0.0
  %474 = vmatpush1.msra.mxu0 0.0
  %475 = vmatprep.subr.mxu0 0.0
  %476 = vmatpush1.msra.mxu0 0.0
  %477 = vmatprep.subr.mxu0 0.0
  %478 = vmatpush1.msra.mxu0 0.0
  %479 = vmatprep.subr.mxu0 0.0
  %480 = vmatpush1.msra.mxu0 0.0
  %481 = vmatprep.subr.mxu0 0.0
  %482 = vmatpush1.msra.mxu0 0.0
  %483 = vmatprep.subr.mxu0 0.0
  %484 = vmatpush1.msra.mxu0 0.0
  %485 = vmatprep.subr.mxu0 0.0
  %486 = vmatpush1.msra.mxu0 0.0
  %487 = vmatprep.subr.mxu0 0.0
  %488 = vmatpush1.msra.mxu0 0.0
  %489 = vmatprep.subr.mxu0 0.0
  %490 = vmatpush1.msra.mxu0 0.0
  %491 = vmatprep.subr.mxu0 0.0
  %492 = vmatpush1.msra.mxu0 0.0
  %493 = vmatprep.subr.mxu0 0.0
  %494 = vmatpush1.msra.mxu0 0.0
  %495 = vmatprep.subr.mxu0 0.0
  %496 = vmatpush1.msra.mxu0 0.0
  %497 = vmatprep.mubr.f32.mxu0 0.0
  %498 = vmatmul.mubr.f32.gmra.mrb[0].mxu0 %v428
  %v499 = vpop.f32.mrb[0].mxu0
  %v500 = vadd.f32 %v425, %v499
  %v501 = vpop.f32.mrb[0].mxu0
  %502 = vmatprep.mubr.f32.mxu0 0.0
  %503 = vmatmul.mubr.f32.gmra.mrb[0].mxu0 %v431
  %v504 = vpop.f32.mrb[0].mxu0
  %v505 = vadd.f32 %v425, %v504
  %v506 = vpop.f32.mrb[0].mxu0
  %507 = vdwg.mxu0
  %v508 = vmax.f32 %v500, 0.0
  %v509 = vmax.f32 %v505, 0.0
  %v510 = vld [vmem:[%s11] sm:$0x1]
  %v512 = vlaneseq
  %v513 = vshrl.u32 %v512, 7
  %v514 = vsub.s32 0, %v513
  %v515 = vrot.slane %v510, %v514
  %vm517 = vcmask 392192
  %v519 = vsel %vm517, %v508, 0
  %v522 = vsel %vm517, %v509, 0
  %524 = vmatprep.subr.mxu0 0.0
  %525 = vmatpush1.msra.mxu0 %v62
  %526 = vmatprep.subr.mxu0 0.0
  %527 = vmatpush1.msra.mxu0 %v63
  %528 = vmatprep.subr.mxu0 0.0
  %529 = vmatpush1.msra.mxu0 %v64
  %530 = vmatprep.subr.mxu0 0.0
  %531 = vmatpush1.msra.mxu0 %v65
  %532 = vmatprep.subr.mxu0 0.0
  %533 = vmatpush1.msra.mxu0 %v66
  %534 = vmatprep.subr.mxu0 0.0
  %535 = vmatpush1.msra.mxu0 %v67
  %536 = vmatprep.subr.mxu0 0.0
  %537 = vmatpush1.msra.mxu0 0.0
  %538 = vmatprep.subr.mxu0 0.0
  %539 = vmatpush1.msra.mxu0 0.0
  %540 = vmatprep.subr.mxu0 0.0
  %541 = vmatpush1.msra.mxu0 0.0
  %542 = vmatprep.subr.mxu0 0.0
  %543 = vmatpush1.msra.mxu0 0.0
  %544 = vmatprep.subr.mxu0 0.0
  %545 = vmatpush1.msra.mxu0 0.0
  %546 = vmatprep.subr.mxu0 0.0
  %547 = vmatpush1.msra.mxu0 0.0
  %548 = vmatprep.subr.mxu0 0.0
  %549 = vmatpush1.msra.mxu0 0.0
  %550 = vmatprep.subr.mxu0 0.0
  %551 = vmatpush1.msra.mxu0 0.0
  %552 = vmatprep.subr.mxu0 0.0
  %553 = vmatpush1.msra.mxu0 0.0
  %554 = vmatprep.subr.mxu0 0.0
  %555 = vmatpush1.msra.mxu0 0.0
  %556 = vmatprep.subr.mxu0 0.0
  %557 = vmatpush1.msra.mxu0 0.0
  %558 = vmatprep.subr.mxu0 0.0
  %559 = vmatpush1.msra.mxu0 0.0
  %560 = vmatprep.subr.mxu0 0.0
  %561 = vmatpush1.msra.mxu0 0.0
  %562 = vmatprep.subr.mxu0 0.0
  %563 = vmatpush1.msra.mxu0 0.0
  %564 = vmatprep.subr.mxu0 0.0
  %565 = vmatpush1.msra.mxu0 0.0
  %566 = vmatprep.subr.mxu0 0.0
  %567 = vmatpush1.msra.mxu0 0.0
  %568 = vmatprep.subr.mxu0 0.0
  %569 = vmatpush1.msra.mxu0 0.0
  %570 = vmatprep.subr.mxu0 0.0
  %571 = vmatpush1.msra.mxu0 0.0
  %572 = vmatprep.subr.mxu0 0.0
  %573 = vmatpush1.msra.mxu0 0.0
  %574 = vmatprep.subr.mxu0 0.0
  %575 = vmatpush1.msra.mxu0 0.0
  %576 = vmatprep.subr.mxu0 0.0
  %577 = vmatpush1.msra.mxu0 0.0
  %578 = vmatprep.subr.mxu0 0.0
  %579 = vmatpush1.msra.mxu0 0.0
  %580 = vmatprep.subr.mxu0 0.0
  %581 = vmatpush1.msra.mxu0 0.0
  %582 = vmatprep.subr.mxu0 0.0
  %583 = vmatpush1.msra.mxu0 0.0
  %584 = vmatprep.subr.mxu0 0.0
  %585 = vmatpush1.msra.mxu0 0.0
  %586 = vmatprep.subr.mxu0 0.0
  %587 = vmatpush1.msra.mxu0 0.0
  %588 = vmatprep.mubr.f32.mxu0 0.0
  %589 = vmatmul.mubr.f32.gmra.mrb[0].mxu0 %v519
  %v590 = vpop.f32.mrb[0].mxu0
  %v591 = vadd.f32 %v515, %v590
  %v592 = vpop.f32.mrb[0].mxu0
  %593 = vmatprep.mubr.f32.mxu0 0.0
  %594 = vmatmul.mubr.f32.gmra.mrb[0].mxu0 %v522
  %v595 = vpop.f32.mrb[0].mxu0
  %v596 = vadd.f32 %v515, %v595
  %v597 = vpop.f32.mrb[0].mxu0
  %598 = vdwg.mxu0
  %v599 = vadd.f32 %v418, %v591
  %v600 = vadd.f32 %v419, %v596
  %v601 = vld [vmem:[%s12] sm:$0x1]
  %v602 = vld [vmem:[%s13] sm:$0x1]
  %v603 = vsel %vm72, %v599, 0.0
  %604 = vadd.xlane.f32.xlu0 %v603
  %v605 = vpop.xlane.xlu0 %604
  %v606 = vsel %vm72, %v600, 0.0
  %607 = vadd.xlane.f32.xlu0 %v606
  %v608 = vpop.xlane.xlu0 %607
  %v609 = vrcp.pop 24.0
  %v610 = vmul.f32 %v605, %v609
  %v611 = vmul.f32 %v608, %v609
  %v612 = vsub.f32 %v599, %v610
  %v613 = vsub.f32 %v600, %v611
  %v614 = vmul.f32 %v612, %v612
  %v615 = vmul.f32 %v613, %v613
  %v616 = vsel %vm72, %v614, 0.0
  %617 = vadd.xlane.f32.xlu0 %v616
  %v618 = vpop.xlane.xlu0 %617
  %v619 = vsel %vm72, %v615, 0.0
  %620 = vadd.xlane.f32.xlu0 %v619
  %v621 = vpop.xlane.xlu0 %620
  %v622 = vmul.f32 %v618, %v609
  %v623 = vmul.f32 %v621, %v609
  %v624 = vadd.f32 %v622, 1e-05
  %v625 = vadd.f32 %v623, 1e-05
  %v626 = vrsqrt.pop %v624
  %v627 = vrsqrt.pop %v625
  %v628 = vmul.f32 %v612, %v626
  %v629 = vmul.f32 %v613, %v627
  %v631 = vlaneseq
  %v632 = vshrl.u32 %v631, 7
  %v633 = vsub.s32 0, %v632
  %v634 = vrot.slane %v601, %v633
  %v636 = vmul.f32 %v628, %v634
  %v637 = vmul.f32 %v629, %v634
  %v639 = vlaneseq
  %v640 = vshrl.u32 %v639, 7
  %v641 = vsub.s32 0, %v640
  %v642 = vrot.slane %v602, %v641
  %v644 = vadd.f32 %v636, %v642
  %v645 = vadd.f32 %v637, %v642
  %646 = vst.msk [vmem:[%s14] sm:$0xff] %vm72, %v644
  %647 = vst.msk [vmem:[%s14 + $0x8] sm:$0xff] %vm72, %v645
  %v648 = vld [vmem:[%s0 + $0x10] sm:$0xff]
  %v649 = vld [vmem:[%s0 + $0x18] sm:$0xff]
  %v650 = vld [vmem:[%s1 + $0x10] sm:$0xff]
  %v651 = vld [vmem:[%s1 + $0x18] sm:$0xff]
  %v652 = vsel %vm72, %v650, 0.0
  %v653 = vsel %vm72, %v651, 0.0
  %v654 = vadd.f32 %v652, %v653
  %v655 = vrot.slane %v654, 4
  %v656 = vadd.f32 %v654, %v655
  %v657 = vrot.slane %v656, 2
  %v658 = vadd.f32 %v656, %v657
  %v659 = vrot.slane %v658, 1
  %v660 = vadd.f32 %v658, %v659
  %v661 = vmul.f32 %v660, %v82
  %v663 = vsel %vm72, %v661, 0
  %665 = vmatprep.subr.mxu0 0.0
  %666 = vmatpush1.msra.mxu0 %v49
  %667 = vmatprep.subr.mxu0 0.0
  %668 = vmatpush1.msra.mxu0 %v50
  %669 = vmatprep.subr.mxu0 0.0
  %670 = vmatpush1.msra.mxu0 %v51
  %671 = vmatprep.subr.mxu0 0.0
  %672 = vmatpush1.msra.mxu0 0.0
  %673 = vmatprep.subr.mxu0 0.0
  %674 = vmatpush1.msra.mxu0 0.0
  %675 = vmatprep.subr.mxu0 0.0
  %676 = vmatpush1.msra.mxu0 0.0
  %677 = vmatprep.subr.mxu0 0.0
  %678 = vmatpush1.msra.mxu0 0.0
  %679 = vmatprep.subr.mxu0 0.0
  %680 = vmatpush1.msra.mxu0 0.0
  %681 = vmatprep.subr.mxu0 0.0
  %682 = vmatpush1.msra.mxu0 0.0
  %683 = vmatprep.subr.mxu0 0.0
  %684 = vmatpush1.msra.mxu0 0.0
  %685 = vmatprep.subr.mxu0 0.0
  %686 = vmatpush1.msra.mxu0 0.0
  %687 = vmatprep.subr.mxu0 0.0
  %688 = vmatpush1.msra.mxu0 0.0
  %689 = vmatprep.subr.mxu0 0.0
  %690 = vmatpush1.msra.mxu0 0.0
  %691 = vmatprep.subr.mxu0 0.0
  %692 = vmatpush1.msra.mxu0 0.0
  %693 = vmatprep.subr.mxu0 0.0
  %694 = vmatpush1.msra.mxu0 0.0
  %695 = vmatprep.subr.mxu0 0.0
  %696 = vmatpush1.msra.mxu0 0.0
  %697 = vmatprep.subr.mxu0 0.0
  %698 = vmatpush1.msra.mxu0 0.0
  %699 = vmatprep.subr.mxu0 0.0
  %700 = vmatpush1.msra.mxu0 0.0
  %701 = vmatprep.subr.mxu0 0.0
  %702 = vmatpush1.msra.mxu0 0.0
  %703 = vmatprep.subr.mxu0 0.0
  %704 = vmatpush1.msra.mxu0 0.0
  %705 = vmatprep.subr.mxu0 0.0
  %706 = vmatpush1.msra.mxu0 0.0
  %707 = vmatprep.subr.mxu0 0.0
  %708 = vmatpush1.msra.mxu0 0.0
  %709 = vmatprep.subr.mxu0 0.0
  %710 = vmatpush1.msra.mxu0 0.0
  %711 = vmatprep.subr.mxu0 0.0
  %712 = vmatpush1.msra.mxu0 0.0
  %713 = vmatprep.subr.mxu0 0.0
  %714 = vmatpush1.msra.mxu0 0.0
  %715 = vmatprep.subr.mxu0 0.0
  %716 = vmatpush1.msra.mxu0 0.0
  %717 = vmatprep.subr.mxu0 0.0
  %718 = vmatpush1.msra.mxu0 0.0
  %719 = vmatprep.subr.mxu0 0.0
  %720 = vmatpush1.msra.mxu0 0.0
  %721 = vmatprep.subr.mxu0 0.0
  %722 = vmatpush1.msra.mxu0 0.0
  %723 = vmatprep.subr.mxu0 0.0
  %724 = vmatpush1.msra.mxu0 0.0
  %725 = vmatprep.subr.mxu0 0.0
  %726 = vmatpush1.msra.mxu0 0.0
  %727 = vmatprep.subr.mxu0 0.0
  %728 = vmatpush1.msra.mxu0 0.0
  %729 = vmatprep.mubr.f32.mxu0 0.0
  %730 = vmatmul.mubr.f32.gmra.mrb[0].mxu0 %v663
  %v731 = vpop.f32.mrb[0].mxu0
  %v732 = vadd.f32 0.0, %v731
  %v733 = vpop.f32.mrb[0].mxu0
  %734 = vdwg.mxu0
  %v735 = vmax.f32 %v732, 0.0
  %v737 = vsel %vm158, %v735, 0
  %739 = vmatprep.subr.mxu0 0.0
  %740 = vmatpush1.msra.mxu0 %v164
  %741 = vmatprep.subr.mxu0 0.0
  %742 = vmatpush1.msra.mxu0 0.0
  %743 = vmatprep.subr.mxu0 0.0
  %744 = vmatpush1.msra.mxu0 0.0
  %745 = vmatprep.subr.mxu0 0.0
  %746 = vmatpush1.msra.mxu0 0.0
  %747 = vmatprep.subr.mxu0 0.0
  %748 = vmatpush1.msra.mxu0 0.0
  %749 = vmatprep.subr.mxu0 0.0
  %750 = vmatpush1.msra.mxu0 0.0
  %751 = vmatprep.subr.mxu0 0.0
  %752 = vmatpush1.msra.mxu0 0.0
  %753 = vmatprep.subr.mxu0 0.0
  %754 = vmatpush1.msra.mxu0 0.0
  %755 = vmatprep.subr.mxu0 0.0
  %756 = vmatpush1.msra.mxu0 0.0
  %757 = vmatprep.subr.mxu0 0.0
  %758 = vmatpush1.msra.mxu0 0.0
  %759 = vmatprep.subr.mxu0 0.0
  %760 = vmatpush1.msra.mxu0 0.0
  %761 = vmatprep.subr.mxu0 0.0
  %762 = vmatpush1.msra.mxu0 0.0
  %763 = vmatprep.subr.mxu0 0.0
  %764 = vmatpush1.msra.mxu0 0.0
  %765 = vmatprep.subr.mxu0 0.0
  %766 = vmatpush1.msra.mxu0 0.0
  %767 = vmatprep.subr.mxu0 0.0
  %768 = vmatpush1.msra.mxu0 0.0
  %769 = vmatprep.subr.mxu0 0.0
  %770 = vmatpush1.msra.mxu0 0.0
  %771 = vmatprep.subr.mxu0 0.0
  %772 = vmatpush1.msra.mxu0 0.0
  %773 = vmatprep.subr.mxu0 0.0
  %774 = vmatpush1.msra.mxu0 0.0
  %775 = vmatprep.subr.mxu0 0.0
  %776 = vmatpush1.msra.mxu0 0.0
  %777 = vmatprep.subr.mxu0 0.0
  %778 = vmatpush1.msra.mxu0 0.0
  %779 = vmatprep.subr.mxu0 0.0
  %780 = vmatpush1.msra.mxu0 0.0
  %781 = vmatprep.subr.mxu0 0.0
  %782 = vmatpush1.msra.mxu0 0.0
  %783 = vmatprep.subr.mxu0 0.0
  %784 = vmatpush1.msra.mxu0 0.0
  %785 = vmatprep.subr.mxu0 0.0
  %786 = vmatpush1.msra.mxu0 0.0
  %787 = vmatprep.subr.mxu0 0.0
  %788 = vmatpush1.msra.mxu0 0.0
  %789 = vmatprep.subr.mxu0 0.0
  %790 = vmatpush1.msra.mxu0 0.0
  %791 = vmatprep.subr.mxu0 0.0
  %792 = vmatpush1.msra.mxu0 0.0
  %793 = vmatprep.subr.mxu0 0.0
  %794 = vmatpush1.msra.mxu0 0.0
  %795 = vmatprep.subr.mxu0 0.0
  %796 = vmatpush1.msra.mxu0 0.0
  %797 = vmatprep.subr.mxu0 0.0
  %798 = vmatpush1.msra.mxu0 0.0
  %799 = vmatprep.subr.mxu0 0.0
  %800 = vmatpush1.msra.mxu0 0.0
  %801 = vmatprep.subr.mxu0 0.0
  %802 = vmatpush1.msra.mxu0 0.0
  %803 = vmatprep.mubr.f32.mxu0 0.0
  %804 = vmatmul.mubr.f32.gmra.mrb[0].mxu0 %v737
  %v805 = vpop.f32.mrb[0].mxu0
  %v806 = vadd.f32 0.0, %v805
  %v807 = vpop.f32.mrb[0].mxu0
  %808 = vdwg.mxu0
  %v810 = vsel %vm72, %v650, 0
  %v813 = vsel %vm72, %v651, 0
  %815 = vmatprep.subr.mxu0 0.0
  %816 = vmatpush1.msra.mxu0 %v56
  %817 = vmatprep.subr.mxu0 0.0
  %818 = vmatpush1.msra.mxu0 %v57
  %819 = vmatprep.subr.mxu0 0.0
  %820 = vmatpush1.msra.mxu0 %v58
  %821 = vmatprep.subr.mxu0 0.0
  %822 = vmatpush1.msra.mxu0 0.0
  %823 = vmatprep.subr.mxu0 0.0
  %824 = vmatpush1.msra.mxu0 0.0
  %825 = vmatprep.subr.mxu0 0.0
  %826 = vmatpush1.msra.mxu0 0.0
  %827 = vmatprep.subr.mxu0 0.0
  %828 = vmatpush1.msra.mxu0 0.0
  %829 = vmatprep.subr.mxu0 0.0
  %830 = vmatpush1.msra.mxu0 0.0
  %831 = vmatprep.subr.mxu0 0.0
  %832 = vmatpush1.msra.mxu0 0.0
  %833 = vmatprep.subr.mxu0 0.0
  %834 = vmatpush1.msra.mxu0 0.0
  %835 = vmatprep.subr.mxu0 0.0
  %836 = vmatpush1.msra.mxu0 0.0
  %837 = vmatprep.subr.mxu0 0.0
  %838 = vmatpush1.msra.mxu0 0.0
  %839 = vmatprep.subr.mxu0 0.0
  %840 = vmatpush1.msra.mxu0 0.0
  %841 = vmatprep.subr.mxu0 0.0
  %842 = vmatpush1.msra.mxu0 0.0
  %843 = vmatprep.subr.mxu0 0.0
  %844 = vmatpush1.msra.mxu0 0.0
  %845 = vmatprep.subr.mxu0 0.0
  %846 = vmatpush1.msra.mxu0 0.0
  %847 = vmatprep.subr.mxu0 0.0
  %848 = vmatpush1.msra.mxu0 0.0
  %849 = vmatprep.subr.mxu0 0.0
  %850 = vmatpush1.msra.mxu0 0.0
  %851 = vmatprep.subr.mxu0 0.0
  %852 = vmatpush1.msra.mxu0 0.0
  %853 = vmatprep.subr.mxu0 0.0
  %854 = vmatpush1.msra.mxu0 0.0
  %855 = vmatprep.subr.mxu0 0.0
  %856 = vmatpush1.msra.mxu0 0.0
  %857 = vmatprep.subr.mxu0 0.0
  %858 = vmatpush1.msra.mxu0 0.0
  %859 = vmatprep.subr.mxu0 0.0
  %860 = vmatpush1.msra.mxu0 0.0
  %861 = vmatprep.subr.mxu0 0.0
  %862 = vmatpush1.msra.mxu0 0.0
  %863 = vmatprep.subr.mxu0 0.0
  %864 = vmatpush1.msra.mxu0 0.0
  %865 = vmatprep.subr.mxu0 0.0
  %866 = vmatpush1.msra.mxu0 0.0
  %867 = vmatprep.subr.mxu0 0.0
  %868 = vmatpush1.msra.mxu0 0.0
  %869 = vmatprep.subr.mxu0 0.0
  %870 = vmatpush1.msra.mxu0 0.0
  %871 = vmatprep.subr.mxu0 0.0
  %872 = vmatpush1.msra.mxu0 0.0
  %873 = vmatprep.subr.mxu0 0.0
  %874 = vmatpush1.msra.mxu0 0.0
  %875 = vmatprep.subr.mxu0 0.0
  %876 = vmatpush1.msra.mxu0 0.0
  %877 = vmatprep.subr.mxu0 0.0
  %878 = vmatpush1.msra.mxu0 0.0
  %879 = vmatprep.mubr.f32.mxu0 0.0
  %880 = vmatmul.mubr.f32.gmra.mrb[0].mxu0 %v810
  %v881 = vpop.f32.mrb[0].mxu0
  %v882 = vadd.f32 0.0, %v881
  %v883 = vpop.f32.mrb[0].mxu0
  %884 = vmatprep.mubr.f32.mxu0 0.0
  %885 = vmatmul.mubr.f32.gmra.mrb[0].mxu0 %v813
  %v886 = vpop.f32.mrb[0].mxu0
  %v887 = vadd.f32 0.0, %v886
  %v888 = vpop.f32.mrb[0].mxu0
  %889 = vdwg.mxu0
  %v891 = vsel %vm72, %v648, 0
  %v894 = vsel %vm72, %v649, 0
  %896 = vmatprep.subr.mxu0 0.0
  %897 = vmatpush1.msra.mxu0 %v53
  %898 = vmatprep.subr.mxu0 0.0
  %899 = vmatpush1.msra.mxu0 %v54
  %900 = vmatprep.subr.mxu0 0.0
  %901 = vmatpush1.msra.mxu0 %v55
  %902 = vmatprep.subr.mxu0 0.0
  %903 = vmatpush1.msra.mxu0 0.0
  %904 = vmatprep.subr.mxu0 0.0
  %905 = vmatpush1.msra.mxu0 0.0
  %906 = vmatprep.subr.mxu0 0.0
  %907 = vmatpush1.msra.mxu0 0.0
  %908 = vmatprep.subr.mxu0 0.0
  %909 = vmatpush1.msra.mxu0 0.0
  %910 = vmatprep.subr.mxu0 0.0
  %911 = vmatpush1.msra.mxu0 0.0
  %912 = vmatprep.subr.mxu0 0.0
  %913 = vmatpush1.msra.mxu0 0.0
  %914 = vmatprep.subr.mxu0 0.0
  %915 = vmatpush1.msra.mxu0 0.0
  %916 = vmatprep.subr.mxu0 0.0
  %917 = vmatpush1.msra.mxu0 0.0
  %918 = vmatprep.subr.mxu0 0.0
  %919 = vmatpush1.msra.mxu0 0.0
  %920 = vmatprep.subr.mxu0 0.0
  %921 = vmatpush1.msra.mxu0 0.0
  %922 = vmatprep.subr.mxu0 0.0
  %923 = vmatpush1.msra.mxu0 0.0
  %924 = vmatprep.subr.mxu0 0.0
  %925 = vmatpush1.msra.mxu0 0.0
  %926 = vmatprep.subr.mxu0 0.0
  %927 = vmatpush1.msra.mxu0 0.0
  %928 = vmatprep.subr.mxu0 0.0
  %929 = vmatpush1.msra.mxu0 0.0
  %930 = vmatprep.subr.mxu0 0.0
  %931 = vmatpush1.msra.mxu0 0.0
  %932 = vmatprep.subr.mxu0 0.0
  %933 = vmatpush1.msra.mxu0 0.0
  %934 = vmatprep.subr.mxu0 0.0
  %935 = vmatpush1.msra.mxu0 0.0
  %936 = vmatprep.subr.mxu0 0.0
  %937 = vmatpush1.msra.mxu0 0.0
  %938 = vmatprep.subr.mxu0 0.0
  %939 = vmatpush1.msra.mxu0 0.0
  %940 = vmatprep.subr.mxu0 0.0
  %941 = vmatpush1.msra.mxu0 0.0
  %942 = vmatprep.subr.mxu0 0.0
  %943 = vmatpush1.msra.mxu0 0.0
  %944 = vmatprep.subr.mxu0 0.0
  %945 = vmatpush1.msra.mxu0 0.0
  %946 = vmatprep.subr.mxu0 0.0
  %947 = vmatpush1.msra.mxu0 0.0
  %948 = vmatprep.subr.mxu0 0.0
  %949 = vmatpush1.msra.mxu0 0.0
  %950 = vmatprep.subr.mxu0 0.0
  %951 = vmatpush1.msra.mxu0 0.0
  %952 = vmatprep.subr.mxu0 0.0
  %953 = vmatpush1.msra.mxu0 0.0
  %954 = vmatprep.subr.mxu0 0.0
  %955 = vmatpush1.msra.mxu0 0.0
  %956 = vmatprep.subr.mxu0 0.0
  %957 = vmatpush1.msra.mxu0 0.0
  %958 = vmatprep.subr.mxu0 0.0
  %959 = vmatpush1.msra.mxu0 0.0
  %960 = vmatprep.mubr.f32.mxu0 0.0
  %961 = vmatmul.mubr.f32.gmra.mrb[0].mxu0 %v891
  %v962 = vpop.f32.mrb[0].mxu0
  %v963 = vadd.f32 %v882, %v962
  %v964 = vpop.f32.mrb[0].mxu0
  %965 = vmatprep.mubr.f32.mxu0 0.0
  %966 = vmatmul.mubr.f32.gmra.mrb[0].mxu0 %v894
  %v967 = vpop.f32.mrb[0].mxu0
  %v968 = vadd.f32 %v887, %v967
  %v969 = vpop.f32.mrb[0].mxu0
  %970 = vdwg.mxu0
  %v971 = vld [vmem:[%s6] sm:$0x1]
  %v973 = vlaneseq
  %v974 = vshrl.u32 %v973, 7
  %v975 = vsub.s32 0, %v974
  %v976 = vrot.slane %v971, %v975
  %v978 = vadd.f32 %v963, %v976
  %v979 = vadd.f32 %v968, %v976
  %v980 = vlaneseq
  %v981 = vshrl.u32 %v980, 7
  %v982 = vsub.s32 0, %v981
  %v983 = vrot.slane %v806, %v982
  %v984 = vmul.f32 %v978, %v983
  %v985 = vmul.f32 %v979, %v983
  %v986 = vmul.f32 %v413, %v984
  %v987 = vmul.f32 %v413, %v985
  %v988 = vmul.f32 %v986, %v648
  %v989 = vmul.f32 %v987, %v649
  %v990 = vadd.f32 %v648, %v988
  %v991 = vadd.f32 %v649, %v989
  %v992 = vld [vmem:[%s9] sm:$0x1]
  %v994 = vlaneseq
  %v995 = vshrl.u32 %v994, 7
  %v996 = vsub.s32 0, %v995
  %v997 = vrot.slane %v992, %v996
  %v1000 = vsel %vm72, %v990, 0
  %v1003 = vsel %vm72, %v991, 0
  %1005 = vmatprep.subr.mxu0 0.0
  %1006 = vmatpush1.msra.mxu0 %v59
  %1007 = vmatprep.subr.mxu0 0.0
  %1008 = vmatpush1.msra.mxu0 %v60
  %1009 = vmatprep.subr.mxu0 0.0
  %1010 = vmatpush1.msra.mxu0 %v61
  %1011 = vmatprep.subr.mxu0 0.0
  %1012 = vmatpush1.msra.mxu0 0.0
  %1013 = vmatprep.subr.mxu0 0.0
  %1014 = vmatpush1.msra.mxu0 0.0
  %1015 = vmatprep.subr.mxu0 0.0
  %1016 = vmatpush1.msra.mxu0 0.0
  %1017 = vmatprep.subr.mxu0 0.0
  %1018 = vmatpush1.msra.mxu0 0.0
  %1019 = vmatprep.subr.mxu0 0.0
  %1020 = vmatpush1.msra.mxu0 0.0
  %1021 = vmatprep.subr.mxu0 0.0
  %1022 = vmatpush1.msra.mxu0 0.0
  %1023 = vmatprep.subr.mxu0 0.0
  %1024 = vmatpush1.msra.mxu0 0.0
  %1025 = vmatprep.subr.mxu0 0.0
  %1026 = vmatpush1.msra.mxu0 0.0
  %1027 = vmatprep.subr.mxu0 0.0
  %1028 = vmatpush1.msra.mxu0 0.0
  %1029 = vmatprep.subr.mxu0 0.0
  %1030 = vmatpush1.msra.mxu0 0.0
  %1031 = vmatprep.subr.mxu0 0.0
  %1032 = vmatpush1.msra.mxu0 0.0
  %1033 = vmatprep.subr.mxu0 0.0
  %1034 = vmatpush1.msra.mxu0 0.0
  %1035 = vmatprep.subr.mxu0 0.0
  %1036 = vmatpush1.msra.mxu0 0.0
  %1037 = vmatprep.subr.mxu0 0.0
  %1038 = vmatpush1.msra.mxu0 0.0
  %1039 = vmatprep.subr.mxu0 0.0
  %1040 = vmatpush1.msra.mxu0 0.0
  %1041 = vmatprep.subr.mxu0 0.0
  %1042 = vmatpush1.msra.mxu0 0.0
  %1043 = vmatprep.subr.mxu0 0.0
  %1044 = vmatpush1.msra.mxu0 0.0
  %1045 = vmatprep.subr.mxu0 0.0
  %1046 = vmatpush1.msra.mxu0 0.0
  %1047 = vmatprep.subr.mxu0 0.0
  %1048 = vmatpush1.msra.mxu0 0.0
  %1049 = vmatprep.subr.mxu0 0.0
  %1050 = vmatpush1.msra.mxu0 0.0
  %1051 = vmatprep.subr.mxu0 0.0
  %1052 = vmatpush1.msra.mxu0 0.0
  %1053 = vmatprep.subr.mxu0 0.0
  %1054 = vmatpush1.msra.mxu0 0.0
  %1055 = vmatprep.subr.mxu0 0.0
  %1056 = vmatpush1.msra.mxu0 0.0
  %1057 = vmatprep.subr.mxu0 0.0
  %1058 = vmatpush1.msra.mxu0 0.0
  %1059 = vmatprep.subr.mxu0 0.0
  %1060 = vmatpush1.msra.mxu0 0.0
  %1061 = vmatprep.subr.mxu0 0.0
  %1062 = vmatpush1.msra.mxu0 0.0
  %1063 = vmatprep.subr.mxu0 0.0
  %1064 = vmatpush1.msra.mxu0 0.0
  %1065 = vmatprep.subr.mxu0 0.0
  %1066 = vmatpush1.msra.mxu0 0.0
  %1067 = vmatprep.subr.mxu0 0.0
  %1068 = vmatpush1.msra.mxu0 0.0
  %1069 = vmatprep.mubr.f32.mxu0 0.0
  %1070 = vmatmul.mubr.f32.gmra.mrb[0].mxu0 %v1000
  %v1071 = vpop.f32.mrb[0].mxu0
  %v1072 = vadd.f32 %v997, %v1071
  %v1073 = vpop.f32.mrb[0].mxu0
  %1074 = vmatprep.mubr.f32.mxu0 0.0
  %1075 = vmatmul.mubr.f32.gmra.mrb[0].mxu0 %v1003
  %v1076 = vpop.f32.mrb[0].mxu0
  %v1077 = vadd.f32 %v997, %v1076
  %v1078 = vpop.f32.mrb[0].mxu0
  %1079 = vdwg.mxu0
  %v1080 = vmax.f32 %v1072, 0.0
  %v1081 = vmax.f32 %v1077, 0.0
  %v1082 = vld [vmem:[%s11] sm:$0x1]
  %v1084 = vlaneseq
  %v1085 = vshrl.u32 %v1084, 7
  %v1086 = vsub.s32 0, %v1085
  %v1087 = vrot.slane %v1082, %v1086
  %v1090 = vsel %vm517, %v1080, 0
  %v1093 = vsel %vm517, %v1081, 0
  %1095 = vmatprep.subr.mxu0 0.0
  %1096 = vmatpush1.msra.mxu0 %v62
  %1097 = vmatprep.subr.mxu0 0.0
  %1098 = vmatpush1.msra.mxu0 %v63
  %1099 = vmatprep.subr.mxu0 0.0
  %1100 = vmatpush1.msra.mxu0 %v64
  %1101 = vmatprep.subr.mxu0 0.0
  %1102 = vmatpush1.msra.mxu0 %v65
  %1103 = vmatprep.subr.mxu0 0.0
  %1104 = vmatpush1.msra.mxu0 %v66
  %1105 = vmatprep.subr.mxu0 0.0
  %1106 = vmatpush1.msra.mxu0 %v67
  %1107 = vmatprep.subr.mxu0 0.0
  %1108 = vmatpush1.msra.mxu0 0.0
  %1109 = vmatprep.subr.mxu0 0.0
  %1110 = vmatpush1.msra.mxu0 0.0
  %1111 = vmatprep.subr.mxu0 0.0
  %1112 = vmatpush1.msra.mxu0 0.0
  %1113 = vmatprep.subr.mxu0 0.0
  %1114 = vmatpush1.msra.mxu0 0.0
  %1115 = vmatprep.subr.mxu0 0.0
  %1116 = vmatpush1.msra.mxu0 0.0
  %1117 = vmatprep.subr.mxu0 0.0
  %1118 = vmatpush1.msra.mxu0 0.0
  %1119 = vmatprep.subr.mxu0 0.0
  %1120 = vmatpush1.msra.mxu0 0.0
  %1121 = vmatprep.subr.mxu0 0.0
  %1122 = vmatpush1.msra.mxu0 0.0
  %1123 = vmatprep.subr.mxu0 0.0
  %1124 = vmatpush1.msra.mxu0 0.0
  %1125 = vmatprep.subr.mxu0 0.0
  %1126 = vmatpush1.msra.mxu0 0.0
  %1127 = vmatprep.subr.mxu0 0.0
  %1128 = vmatpush1.msra.mxu0 0.0
  %1129 = vmatprep.subr.mxu0 0.0
  %1130 = vmatpush1.msra.mxu0 0.0
  %1131 = vmatprep.subr.mxu0 0.0
  %1132 = vmatpush1.msra.mxu0 0.0
  %1133 = vmatprep.subr.mxu0 0.0
  %1134 = vmatpush1.msra.mxu0 0.0
  %1135 = vmatprep.subr.mxu0 0.0
  %1136 = vmatpush1.msra.mxu0 0.0
  %1137 = vmatprep.subr.mxu0 0.0
  %1138 = vmatpush1.msra.mxu0 0.0
  %1139 = vmatprep.subr.mxu0 0.0
  %1140 = vmatpush1.msra.mxu0 0.0
  %1141 = vmatprep.subr.mxu0 0.0
  %1142 = vmatpush1.msra.mxu0 0.0
  %1143 = vmatprep.subr.mxu0 0.0
  %1144 = vmatpush1.msra.mxu0 0.0
  %1145 = vmatprep.subr.mxu0 0.0
  %1146 = vmatpush1.msra.mxu0 0.0
  %1147 = vmatprep.subr.mxu0 0.0
  %1148 = vmatpush1.msra.mxu0 0.0
  %1149 = vmatprep.subr.mxu0 0.0
  %1150 = vmatpush1.msra.mxu0 0.0
  %1151 = vmatprep.subr.mxu0 0.0
  %1152 = vmatpush1.msra.mxu0 0.0
  %1153 = vmatprep.subr.mxu0 0.0
  %1154 = vmatpush1.msra.mxu0 0.0
  %1155 = vmatprep.subr.mxu0 0.0
  %1156 = vmatpush1.msra.mxu0 0.0
  %1157 = vmatprep.subr.mxu0 0.0
  %1158 = vmatpush1.msra.mxu0 0.0
  %1159 = vmatprep.mubr.f32.mxu0 0.0
  %1160 = vmatmul.mubr.f32.gmra.mrb[0].mxu0 %v1090
  %v1161 = vpop.f32.mrb[0].mxu0
  %v1162 = vadd.f32 %v1087, %v1161
  %v1163 = vpop.f32.mrb[0].mxu0
  %1164 = vmatprep.mubr.f32.mxu0 0.0
  %1165 = vmatmul.mubr.f32.gmra.mrb[0].mxu0 %v1093
  %v1166 = vpop.f32.mrb[0].mxu0
  %v1167 = vadd.f32 %v1087, %v1166
  %v1168 = vpop.f32.mrb[0].mxu0
  %1169 = vdwg.mxu0
  %v1170 = vadd.f32 %v990, %v1162
  %v1171 = vadd.f32 %v991, %v1167
  %v1172 = vld [vmem:[%s12] sm:$0x1]
  %v1173 = vld [vmem:[%s13] sm:$0x1]
  %v1174 = vsel %vm72, %v1170, 0.0
  %1175 = vadd.xlane.f32.xlu0 %v1174
  %v1176 = vpop.xlane.xlu0 %1175
  %v1177 = vsel %vm72, %v1171, 0.0
  %1178 = vadd.xlane.f32.xlu0 %v1177
  %v1179 = vpop.xlane.xlu0 %1178
  %v1180 = vmul.f32 %v1176, %v609
  %v1181 = vmul.f32 %v1179, %v609
  %v1182 = vsub.f32 %v1170, %v1180
  %v1183 = vsub.f32 %v1171, %v1181
  %v1184 = vmul.f32 %v1182, %v1182
  %v1185 = vmul.f32 %v1183, %v1183
  %v1186 = vsel %vm72, %v1184, 0.0
  %1187 = vadd.xlane.f32.xlu0 %v1186
  %v1188 = vpop.xlane.xlu0 %1187
  %v1189 = vsel %vm72, %v1185, 0.0
  %1190 = vadd.xlane.f32.xlu0 %v1189
  %v1191 = vpop.xlane.xlu0 %1190
  %v1192 = vmul.f32 %v1188, %v609
  %v1193 = vmul.f32 %v1191, %v609
  %v1194 = vadd.f32 %v1192, 1e-05
  %v1195 = vadd.f32 %v1193, 1e-05
  %v1196 = vrsqrt.pop %v1194
  %v1197 = vrsqrt.pop %v1195
  %v1198 = vmul.f32 %v1182, %v1196
  %v1199 = vmul.f32 %v1183, %v1197
  %v1201 = vlaneseq
  %v1202 = vshrl.u32 %v1201, 7
  %v1203 = vsub.s32 0, %v1202
  %v1204 = vrot.slane %v1172, %v1203
  %v1206 = vmul.f32 %v1198, %v1204
  %v1207 = vmul.f32 %v1199, %v1204
  %v1209 = vlaneseq
  %v1210 = vshrl.u32 %v1209, 7
  %v1211 = vsub.s32 0, %v1210
  %v1212 = vrot.slane %v1173, %v1211
  %v1214 = vadd.f32 %v1206, %v1212
  %v1215 = vadd.f32 %v1207, %v1212
  %1216 = vst.msk [vmem:[%s14 + $0x10] sm:$0xff] %vm72, %v1214
  %1217 = vst.msk [vmem:[%s14 + $0x18] sm:$0xff] %vm72, %v1215
  // Predicated region
  $region58: #{transformer_encoder_layer.3} parent=0 // pred_check
    _
  $region59: #{transformer_encoder_layer.3} parent=0 // pred_check_branch
    %1219 = sbr.rel (0) target = $region61
  $region60: #{transformer_encoder_layer.3} parent=0 // pred_region
    _
  $region61: #{transformer_encoder_layer.3} parent=0 // pred_fallthru
    _
  // Predicated region
  $region62: #{transformer_encoder_layer.3} parent=0 // pred_check
    _
  $region63: #{transformer_encoder_layer.3} parent=0 // pred_check_branch
    %1221 = sbr.rel (0) target = $region65
  $region64: #{transformer_encoder_layer.3} parent=0 // pred_region
    _
  $region65: #{transformer_encoder_layer.3} parent=0 // pred_fallthru
    _

// kernel: transformer_encoder_layer.2
$region0: #{transformer_encoder_layer.2}
  #allocation0 [shape = 'u32[]', space=smem, size = 0x4, offset = 0x4, fixed_abs, tag = 'smem constant byte address 0x4 - core index']
  #allocation1 [shape = 'u32[144,128]{1,0:T(1,128)}', space=vmem, size = 0x12000, scoped, tag = 'internal scratch']
  #allocation2 [shape = 'f32[32,48]{1,0:T(8,128)}', space=vmem, size = 0x4000, scoped, tag = 'scratch operand']
  #allocation3 [shape = 'f32[32,24]{1,0:T(8,128)}', space=vmem, size = 0x4000, scoped, tag = 'scratch operand']
  #allocation4 [shape = 'f32[32,24]{1,0:T(8,128)}', space=vmem, size = 0x4000, scoped, tag = 'scratch operand']
  %s0 = inlined_call_operand.vmem [shape: f32[32,24], index: 0, kind: input, shape index: {}]
  %s1 = inlined_call_operand.vmem [shape: f32[32,24], index: 1, kind: input, shape index: {}]
  %s2 = inlined_call_operand.vmem [shape: f32[24,48], index: 2, kind: input, shape index: {}]
  %s3 = inlined_call_operand.vmem [shape: f32[1,48], index: 3, kind: input, shape index: {}]
  %s4 = inlined_call_operand.vmem [shape: f32[24,24], index: 4, kind: input, shape index: {}]
  %s5 = inlined_call_operand.vmem [shape: f32[1,24], index: 5, kind: input, shape index: {}]
  %s6 = inlined_call_operand.vmem [shape: f32[24,24], index: 6, kind: input, shape index: {}]
  %s7 = inlined_call_operand.vmem [shape: f32[1,24], index: 7, kind: input, shape index: {}]
  %s8 = inlined_call_operand.vmem [shape: f32[1,24], index: 8, kind: input, shape index: {}]
  %s9 = inlined_call_operand.vmem [shape: f32[1,24], index: 9, kind: input, shape index: {}]
  %s10 = inlined_call_operand.vmem [shape: f32[1,24], index: 10, kind: input, shape index: {}]
  %s11 = inlined_call_operand.vmem [shape: f32[1,24], index: 11, kind: input, shape index: {}]
  %s12 = inlined_call_operand.vmem [shape: f32[32,24], index: 12, kind: output, shape index: {}]
  %s13 = sld [smem:[#allocation0]]
  $region58: #{transformer_encoder_layer.2} parent=0
    _
  %s15 = ssub.s32 1, %s13
  %s16 = scalar_select 0, %s15, %s13
  // Predicated region
  $region2: #{transformer_encoder_layer.2} parent=0 // pred_check
    _
  $region3: #{transformer_encoder_layer.2} parent=0 // pred_check_branch
    %18 = sbr.rel (0) target = $region5
  $region4: #{transformer_encoder_layer.2} parent=0 // pred_region
    _
  $region5: #{transformer_encoder_layer.2} parent=0 // pred_fallthru
    _
  // Predicated region
  $region6: #{transformer_encoder_layer.2} parent=0 // pred_check
    _
  $region7: #{transformer_encoder_layer.2} parent=0 // pred_check_branch
    %20 = sbr.rel (0) target = $region9
  $region8: #{transformer_encoder_layer.2} parent=0 // pred_region
    _
  $region9: #{transformer_encoder_layer.2} parent=0 // pred_fallthru
    _
  // Predicated region
  $region10: #{transformer_encoder_layer.2} parent=0 // pred_check
    _
  $region11: #{transformer_encoder_layer.2} parent=0 // pred_check_branch
    %22 = sbr.rel (0) target = $region13
  $region12: #{transformer_encoder_layer.2} parent=0 // pred_region
    _
  $region13: #{transformer_encoder_layer.2} parent=0 // pred_fallthru
    _
  // Predicated region
  $region14: #{transformer_encoder_layer.2} parent=0 // pred_check
    _
  $region15: #{transformer_encoder_layer.2} parent=0 // pred_check_branch
    %24 = sbr.rel (0) target = $region17
  $region16: #{transformer_encoder_layer.2} parent=0 // pred_region
    _
  $region17: #{transformer_encoder_layer.2} parent=0 // pred_fallthru
    _
  // Predicated region
  $region18: #{transformer_encoder_layer.2} parent=0 // pred_check
    _
  $region19: #{transformer_encoder_layer.2} parent=0 // pred_check_branch
    %26 = sbr.rel (0) target = $region21
  $region20: #{transformer_encoder_layer.2} parent=0 // pred_region
    _
  $region21: #{transformer_encoder_layer.2} parent=0 // pred_fallthru
    _
  // Predicated region
  $region22: #{transformer_encoder_layer.2} parent=0 // pred_check
    _
  $region23: #{transformer_encoder_layer.2} parent=0 // pred_check_branch
    %28 = sbr.rel (0) target = $region25
  $region24: #{transformer_encoder_layer.2} parent=0 // pred_region
    _
  $region25: #{transformer_encoder_layer.2} parent=0 // pred_fallthru
    _
  // Predicated region
  $region26: #{transformer_encoder_layer.2} parent=0 // pred_check
    _
  $region27: #{transformer_encoder_layer.2} parent=0 // pred_check_branch
    %30 = sbr.rel (0) target = $region29
  $region28: #{transformer_encoder_layer.2} parent=0 // pred_region
    _
  $region29: #{transformer_encoder_layer.2} parent=0 // pred_fallthru
    _
  // Predicated region
  $region30: #{transformer_encoder_layer.2} parent=0 // pred_check
    _
  $region31: #{transformer_encoder_layer.2} parent=0 // pred_check_branch
    %32 = sbr.rel (0) target = $region33
  $region32: #{transformer_encoder_layer.2} parent=0 // pred_region
    _
  $region33: #{transformer_encoder_layer.2} parent=0 // pred_fallthru
    _
  // Predicated region
  $region34: #{transformer_encoder_layer.2} parent=0 // pred_check
    _
  $region35: #{transformer_encoder_layer.2} parent=0 // pred_check_branch
    %34 = sbr.rel (0) target = $region37
  $region36: #{transformer_encoder_layer.2} parent=0 // pred_region
    _
  $region37: #{transformer_encoder_layer.2} parent=0 // pred_fallthru
    _
  // Predicated region
  $region38: #{transformer_encoder_layer.2} parent=0 // pred_check
    _
  $region39: #{transformer_encoder_layer.2} parent=0 // pred_check_branch
    %36 = sbr.rel (0) target = $region41
  $region40: #{transformer_encoder_layer.2} parent=0 // pred_region
    _
  $region41: #{transformer_encoder_layer.2} parent=0 // pred_fallthru
    _
  // Predicated region
  $region42: #{transformer_encoder_layer.2} parent=0 // pred_check
    _
  $region43: #{transformer_encoder_layer.2} parent=0 // pred_check_branch
    %38 = sbr.rel (0) target = $region45
  $region44: #{transformer_encoder_layer.2} parent=0 // pred_region
    _
  $region45: #{transformer_encoder_layer.2} parent=0 // pred_fallthru
    _
  // Predicated region
  $region46: #{transformer_encoder_layer.2} parent=0 // pred_check
    _
  $region47: #{transformer_encoder_layer.2} parent=0 // pred_check_branch
    %40 = sbr.rel (0) target = $region49
  $region48: #{transformer_encoder_layer.2} parent=0 // pred_region
    _
  $region49: #{transformer_encoder_layer.2} parent=0 // pred_fallthru
    _
  %v41 = vld [vmem:[%s0] sm:$0xff]
  %v42 = vld [vmem:[%s0 + $0x8] sm:$0xff]
  %v43 = vld [vmem:[%s0 + $0x10] sm:$0xff]
  %v44 = vld [vmem:[%s0 + $0x18] sm:$0xff]
  %v45 = vld [vmem:[%s1] sm:$0xff]
  %v46 = vld [vmem:[%s1 + $0x8] sm:$0xff]
  %v47 = vld [vmem:[%s1 + $0x10] sm:$0xff]
  %v48 = vld [vmem:[%s1 + $0x18] sm:$0xff]
  %v49 = vadd.f32 %v41, %v45
  %v50 = vadd.f32 %v42, %v46
  %v51 = vadd.f32 %v43, %v47
  %v52 = vadd.f32 %v44, %v48
  %v53 = vld [vmem:[%s8] sm:$0x1]
  %v54 = vld [vmem:[%s9] sm:$0x1]
  %vm55 = vcmask 195584
  %v56 = vsel %vm55, %v49, 0.0
  %57 = vadd.xlane.f32.xlu0 %v56
  %v58 = vpop.xlane.xlu0 %57
  %v59 = vsel %vm55, %v50, 0.0
  %60 = vadd.xlane.f32.xlu0 %v59
  %v61 = vpop.xlane.xlu0 %60
  %v62 = vsel %vm55, %v51, 0.0
  %63 = vadd.xlane.f32.xlu0 %v62
  %v64 = vpop.xlane.xlu0 %63
  %v65 = vsel %vm55, %v52, 0.0
  %66 = vadd.xlane.f32.xlu0 %v65
  %v67 = vpop.xlane.xlu0 %66
  %v68 = vrcp.pop 24.0
  %v69 = vmul.f32 %v58, %v68
  %v70 = vmul.f32 %v61, %v68
  %v71 = vmul.f32 %v64, %v68
  %v72 = vmul.f32 %v67, %v68
  %v73 = vsub.f32 %v49, %v69
  %v74 = vsub.f32 %v50, %v70
  %v75 = vsub.f32 %v51, %v71
  %v76 = vsub.f32 %v52, %v72
  %v77 = vmul.f32 %v73, %v73
  %v78 = vmul.f32 %v74, %v74
  %v79 = vmul.f32 %v75, %v75
  %v80 = vmul.f32 %v76, %v76
  %v81 = vsel %vm55, %v77, 0.0
  %82 = vadd.xlane.f32.xlu0 %v81
  %v83 = vpop.xlane.xlu0 %82
  %v84 = vsel %vm55, %v78, 0.0
  %85 = vadd.xlane.f32.xlu0 %v84
  %v86 = vpop.xlane.xlu0 %85
  %v87 = vsel %vm55, %v79, 0.0
  %88 = vadd.xlane.f32.xlu0 %v87
  %v89 = vpop.xlane.xlu0 %88
  %v90 = vsel %vm55, %v80, 0.0
  %91 = vadd.xlane.f32.xlu0 %v90
  %v92 = vpop.xlane.xlu0 %91
  %v93 = vmul.f32 %v83, %v68
  %v94 = vmul.f32 %v86, %v68
  %v95 = vmul.f32 %v89, %v68
  %v96 = vmul.f32 %v92, %v68
  %v97 = vadd.f32 %v93, 1e-05
  %v98 = vadd.f32 %v94, 1e-05
  %v99 = vadd.f32 %v95, 1e-05
  %v100 = vadd.f32 %v96, 1e-05
  %v101 = vrsqrt.pop %v97
  %v102 = vrsqrt.pop %v98
  %v103 = vrsqrt.pop %v99
  %v104 = vrsqrt.pop %v100
  %v105 = vmul.f32 %v73, %v101
  %v106 = vmul.f32 %v74, %v102
  %v107 = vmul.f32 %v75, %v103
  %v108 = vmul.f32 %v76, %v104
  %v110 = vlaneseq
  %v111 = vshrl.u32 %v110, 7
  %v112 = vsub.s32 0, %v111
  %v113 = vrot.slane %v53, %v112
  %v115 = vmul.f32 %v105, %v113
  %v116 = vmul.f32 %v106, %v113
  %v117 = vmul.f32 %v107, %v113
  %v118 = vmul.f32 %v108, %v113
  %v120 = vlaneseq
  %v121 = vshrl.u32 %v120, 7
  %v122 = vsub.s32 0, %v121
  %v123 = vrot.slane %v54, %v122
  %v125 = vadd.f32 %v115, %v123
  %v126 = vadd.f32 %v116, %v123
  %v127 = vadd.f32 %v117, %v123
  %v128 = vadd.f32 %v118, %v123
  %v129 = vld [vmem:[%s2] sm:$0xff]
  %v130 = vld [vmem:[%s2 + $0x8] sm:$0xff]
  %v131 = vld [vmem:[%s2 + $0x10] sm:$0xff]
  %v132 = vld [vmem:[%s3] sm:$0x1]
  %v134 = vlaneseq
  %v135 = vshrl.u32 %v134, 7
  %v136 = vsub.s32 0, %v135
  %v137 = vrot.slane %v132, %v136
  %v140 = vsel %vm55, %v125, 0
  %v143 = vsel %vm55, %v126, 0
  %v146 = vsel %vm55, %v127, 0
  %v149 = vsel %vm55, %v128, 0
  %151 = vmatprep.subr.mxu0 0.0
  %152 = vmatpush1.msra.mxu0 %v129
  %153 = vmatprep.subr.mxu0 0.0
  %154 = vmatpush1.msra.mxu0 %v130
  %155 = vmatprep.subr.mxu0 0.0
  %156 = vmatpush1.msra.mxu0 %v131
  %157 = vmatprep.subr.mxu0 0.0
  %158 = vmatpush1.msra.mxu0 0.0
  %159 = vmatprep.subr.mxu0 0.0
  %160 = vmatpush1.msra.mxu0 0.0
  %161 = vmatprep.subr.mxu0 0.0
  %162 = vmatpush1.msra.mxu0 0.0
  %163 = vmatprep.subr.mxu0 0.0
  %164 = vmatpush1.msra.mxu0 0.0
  %165 = vmatprep.subr.mxu0 0.0
  %166 = vmatpush1.msra.mxu0 0.0
  %167 = vmatprep.subr.mxu0 0.0
  %168 = vmatpush1.msra.mxu0 0.0
  %169 = vmatprep.subr.mxu0 0.0
  %170 = vmatpush1.msra.mxu0 0.0
  %171 = vmatprep.subr.mxu0 0.0
  %172 = vmatpush1.msra.mxu0 0.0
  %173 = vmatprep.subr.mxu0 0.0
  %174 = vmatpush1.msra.mxu0 0.0
  %175 = vmatprep.subr.mxu0 0.0
  %176 = vmatpush1.msra.mxu0 0.0
  %177 = vmatprep.subr.mxu0 0.0
  %178 = vmatpush1.msra.mxu0 0.0
  %179 = vmatprep.subr.mxu0 0.0
  %180 = vmatpush1.msra.mxu0 0.0
  %181 = vmatprep.subr.mxu0 0.0
  %182 = vmatpush1.msra.mxu0 0.0
  %183 = vmatprep.subr.mxu0 0.0
  %184 = vmatpush1.msra.mxu0 0.0
  %185 = vmatprep.subr.mxu0 0.0
  %186 = vmatpush1.msra.mxu0 0.0
  %187 = vmatprep.subr.mxu0 0.0
  %188 = vmatpush1.msra.mxu0 0.0
  %189 = vmatprep.subr.mxu0 0.0
  %190 = vmatpush1.msra.mxu0 0.0
  %191 = vmatprep.subr.mxu0 0.0
  %192 = vmatpush1.msra.mxu0 0.0
  %193 = vmatprep.subr.mxu0 0.0
  %194 = vmatpush1.msra.mxu0 0.0
  %195 = vmatprep.subr.mxu0 0.0
  %196 = vmatpush1.msra.mxu0 0.0
  %197 = vmatprep.subr.mxu0 0.0
  %198 = vmatpush1.msra.mxu0 0.0
  %199 = vmatprep.subr.mxu0 0.0
  %200 = vmatpush1.msra.mxu0 0.0
  %201 = vmatprep.subr.mxu0 0.0
  %202 = vmatpush1.msra.mxu0 0.0
  %203 = vmatprep.subr.mxu0 0.0
  %204 = vmatpush1.msra.mxu0 0.0
  %205 = vmatprep.subr.mxu0 0.0
  %206 = vmatpush1.msra.mxu0 0.0
  %207 = vmatprep.subr.mxu0 0.0
  %208 = vmatpush1.msra.mxu0 0.0
  %209 = vmatprep.subr.mxu0 0.0
  %210 = vmatpush1.msra.mxu0 0.0
  %211 = vmatprep.subr.mxu0 0.0
  %212 = vmatpush1.msra.mxu0 0.0
  %213 = vmatprep.subr.mxu0 0.0
  %214 = vmatpush1.msra.mxu0 0.0
  %215 = vmatprep.mubr.f32.mxu0 0.0
  %216 = vmatmul.mubr.f32.gmra.mrb[0].mxu0 %v140
  %v217 = vpop.f32.mrb[0].mxu0
  %v218 = vadd.f32 %v137, %v217
  %v219 = vpop.f32.mrb[0].mxu0
  %220 = vmatprep.mubr.f32.mxu0 0.0
  %221 = vmatmul.mubr.f32.gmra.mrb[0].mxu0 %v143
  %v222 = vpop.f32.mrb[0].mxu0
  %v223 = vadd.f32 %v137, %v222
  %v224 = vpop.f32.mrb[0].mxu0
  %225 = vmatprep.mubr.f32.mxu0 0.0
  %226 = vmatmul.mubr.f32.gmra.mrb[0].mxu0 %v146
  %v227 = vpop.f32.mrb[0].mxu0
  %v228 = vadd.f32 %v137, %v227
  %v229 = vpop.f32.mrb[0].mxu0
  %230 = vmatprep.mubr.f32.mxu0 0.0
  %231 = vmatmul.mubr.f32.gmra.mrb[0].mxu0 %v149
  %v232 = vpop.f32.mrb[0].mxu0
  %v233 = vadd.f32 %v137, %v232
  %v234 = vpop.f32.mrb[0].mxu0
  %235 = vdwg.mxu0
  %vm236 = vcmask 392192
  %237 = vst.msk [vmem:[#allocation2] sm:$0xff] %vm236, %v218
  %238 = vst.msk [vmem:[#allocation2 + $0x8] sm:$0xff] %vm236, %v223
  %239 = vst.msk [vmem:[#allocation2 + $0x10] sm:$0xff] %vm236, %v228
  %240 = vst.msk [vmem:[#allocation2 + $0x18] sm:$0xff] %vm236, %v233
  %v241 = vld [vmem:[%s4] sm:$0xff]
  %v242 = vld [vmem:[%s4 + $0x8] sm:$0xff]
  %v243 = vld [vmem:[%s4 + $0x10] sm:$0xff]
  %v244 = vld [vmem:[%s5] sm:$0x1]
  %v246 = vlaneseq
  %v247 = vshrl.u32 %v246, 7
  %v248 = vsub.s32 0, %v247
  %v249 = vrot.slane %v244, %v248
  %v252 = vsel %vm55, %v41, 0
  %v255 = vsel %vm55, %v42, 0
  %v258 = vsel %vm55, %v43, 0
  %v261 = vsel %vm55, %v44, 0
  %263 = vmatprep.subr.mxu0 0.0
  %264 = vmatpush1.msra.mxu0 %v241
  %265 = vmatprep.subr.mxu0 0.0
  %266 = vmatpush1.msra.mxu0 %v242
  %267 = vmatprep.subr.mxu0 0.0
  %268 = vmatpush1.msra.mxu0 %v243
  %269 = vmatprep.subr.mxu0 0.0
  %270 = vmatpush1.msra.mxu0 0.0
  %271 = vmatprep.subr.mxu0 0.0
  %272 = vmatpush1.msra.mxu0 0.0
  %273 = vmatprep.subr.mxu0 0.0
  %274 = vmatpush1.msra.mxu0 0.0
  %275 = vmatprep.subr.mxu0 0.0
  %276 = vmatpush1.msra.mxu0 0.0
  %277 = vmatprep.subr.mxu0 0.0
  %278 = vmatpush1.msra.mxu0 0.0
  %279 = vmatprep.subr.mxu0 0.0
  %280 = vmatpush1.msra.mxu0 0.0
  %281 = vmatprep.subr.mxu0 0.0
  %282 = vmatpush1.msra.mxu0 0.0
  %283 = vmatprep.subr.mxu0 0.0
  %284 = vmatpush1.msra.mxu0 0.0
  %285 = vmatprep.subr.mxu0 0.0
  %286 = vmatpush1.msra.mxu0 0.0
  %287 = vmatprep.subr.mxu0 0.0
  %288 = vmatpush1.msra.mxu0 0.0
  %289 = vmatprep.subr.mxu0 0.0
  %290 = vmatpush1.msra.mxu0 0.0
  %291 = vmatprep.subr.mxu0 0.0
  %292 = vmatpush1.msra.mxu0 0.0
  %293 = vmatprep.subr.mxu0 0.0
  %294 = vmatpush1.msra.mxu0 0.0
  %295 = vmatprep.subr.mxu0 0.0
  %296 = vmatpush1.msra.mxu0 0.0
  %297 = vmatprep.subr.mxu0 0.0
  %298 = vmatpush1.msra.mxu0 0.0
  %299 = vmatprep.subr.mxu0 0.0
  %300 = vmatpush1.msra.mxu0 0.0
  %301 = vmatprep.subr.mxu0 0.0
  %302 = vmatpush1.msra.mxu0 0.0
  %303 = vmatprep.subr.mxu0 0.0
  %304 = vmatpush1.msra.mxu0 0.0
  %305 = vmatprep.subr.mxu0 0.0
  %306 = vmatpush1.msra.mxu0 0.0
  %307 = vmatprep.subr.mxu0 0.0
  %308 = vmatpush1.msra.mxu0 0.0
  %309 = vmatprep.subr.mxu0 0.0
  %310 = vmatpush1.msra.mxu0 0.0
  %311 = vmatprep.subr.mxu0 0.0
  %312 = vmatpush1.msra.mxu0 0.0
  %313 = vmatprep.subr.mxu0 0.0
  %314 = vmatpush1.msra.mxu0 0.0
  %315 = vmatprep.subr.mxu0 0.0
  %316 = vmatpush1.msra.mxu0 0.0
  %317 = vmatprep.subr.mxu0 0.0
  %318 = vmatpush1.msra.mxu0 0.0
  %319 = vmatprep.subr.mxu0 0.0
  %320 = vmatpush1.msra.mxu0 0.0
  %321 = vmatprep.subr.mxu0 0.0
  %322 = vmatpush1.msra.mxu0 0.0
  %323 = vmatprep.subr.mxu0 0.0
  %324 = vmatpush1.msra.mxu0 0.0
  %325 = vmatprep.subr.mxu0 0.0
  %326 = vmatpush1.msra.mxu0 0.0
  %327 = vmatprep.mubr.f32.mxu0 0.0
  %328 = vmatmul.mubr.f32.gmra.mrb[0].mxu0 %v252
  %v329 = vpop.f32.mrb[0].mxu0
  %v330 = vadd.f32 %v249, %v329
  %v331 = vpop.f32.mrb[0].mxu0
  %332 = vmatprep.mubr.f32.mxu0 0.0
  %333 = vmatmul.mubr.f32.gmra.mrb[0].mxu0 %v255
  %v334 = vpop.f32.mrb[0].mxu0
  %v335 = vadd.f32 %v249, %v334
  %v336 = vpop.f32.mrb[0].mxu0
  %337 = vmatprep.mubr.f32.mxu0 0.0
  %338 = vmatmul.mubr.f32.gmra.mrb[0].mxu0 %v258
  %v339 = vpop.f32.mrb[0].mxu0
  %v340 = vadd.f32 %v249, %v339
  %v341 = vpop.f32.mrb[0].mxu0
  %342 = vmatprep.mubr.f32.mxu0 0.0
  %343 = vmatmul.mubr.f32.gmra.mrb[0].mxu0 %v261
  %v344 = vpop.f32.mrb[0].mxu0
  %v345 = vadd.f32 %v249, %v344
  %v346 = vpop.f32.mrb[0].mxu0
  %347 = vdwg.mxu0
  %348 = vst.msk [vmem:[#allocation3] sm:$0xff] %vm55, %v330
  %349 = vst.msk [vmem:[#allocation3 + $0x8] sm:$0xff] %vm55, %v335
  %350 = vst.msk [vmem:[#allocation3 + $0x10] sm:$0xff] %vm55, %v340
  %351 = vst.msk [vmem:[#allocation3 + $0x18] sm:$0xff] %vm55, %v345
  %v352 = vld [vmem:[#allocation2] sm:$0xff]
  %v353 = vld [vmem:[#allocation2 + $0x8] sm:$0xff]
  %v354 = vld [vmem:[#allocation3] sm:$0xff]
  %v355 = vld [vmem:[#allocation3 + $0x8] sm:$0xff]
  %358 = vrot.lane.b32.xlu0 %v352, 104
  %v359 = vpop.permute.xlu0 %358
  %360 = vrot.lane.b32.xlu0 %v353, 104
  %v361 = vpop.permute.xlu0 %360
  %vm362 = vcmask 48128
  %v363 = vsel %vm362, %v352, 0
  %v365 = vsel %vm362, %v353, 0
  %v367 = vsel %vm362, %v359, 0
  %v369 = vsel %vm362, %v361, 0
  %371 = vmatprep.subr.mxu0 0.0
  %372 = vmatpush1.xpose.msra.mxu0 %v367
  %373 = vmatprep.subr.mxu0 0.0
  %374 = vmatpush1.xpose.msra.mxu0 %v369
  %375 = vmatprep.subr.mxu0 0.0
  %376 = vmatpush1.xpose.msra.mxu0 0.0
  %377 = vmatprep.subr.mxu0 0.0
  %378 = vmatpush1.xpose.msra.mxu0 0.0
  %379 = vmatprep.subr.mxu0 0.0
  %380 = vmatpush1.xpose.msra.mxu0 0.0
  %381 = vmatprep.subr.mxu0 0.0
  %382 = vmatpush1.xpose.msra.mxu0 0.0
  %383 = vmatprep.subr.mxu0 0.0
  %384 = vmatpush1.xpose.msra.mxu0 0.0
  %385 = vmatprep.subr.mxu0 0.0
  %386 = vmatpush1.xpose.msra.mxu0 0.0
  %387 = vmatprep.subr.mxu0 0.0
  %388 = vmatpush1.xpose.msra.mxu0 0.0
  %389 = vmatprep.subr.mxu0 0.0
  %390 = vmatpush1.xpose.msra.mxu0 0.0
  %391 = vmatprep.subr.mxu0 0.0
  %392 = vmatpush1.xpose.msra.mxu0 0.0
  %393 = vmatprep.subr.mxu0 0.0
  %394 = vmatpush1.xpose.msra.mxu0 0.0
  %395 = vmatprep.subr.mxu0 0.0
  %396 = vmatpush1.xpose.msra.mxu0 0.0
  %397 = vmatprep.subr.mxu0 0.0
  %398 = vmatpush1.xpose.msra.mxu0 0.0
  %399 = vmatprep.subr.mxu0 0.0
  %400 = vmatpush1.xpose.msra.mxu0 0.0
  %401 = vmatprep.subr.mxu0 0.0
  %402 = vmatpush1.xpose.msra.mxu0 0.0
  %403 = vmatprep.subr.mxu0 0.0
  %404 = vmatpush1.xpose.msra.mxu0 0.0
  %405 = vmatprep.subr.mxu0 0.0
  %406 = vmatpush1.xpose.msra.mxu0 0.0
  %407 = vmatprep.subr.mxu0 0.0
  %408 = vmatpush1.xpose.msra.mxu0 0.0
  %409 = vmatprep.subr.mxu0 0.0
  %410 = vmatpush1.xpose.msra.mxu0 0.0
  %411 = vmatprep.subr.mxu0 0.0
  %412 = vmatpush1.xpose.msra.mxu0 0.0
  %413 = vmatprep.subr.mxu0 0.0
  %414 = vmatpush1.xpose.msra.mxu0 0.0
  %415 = vmatprep.subr.mxu0 0.0
  %416 = vmatpush1.xpose.msra.mxu0 0.0
  %417 = vmatprep.subr.mxu0 0.0
  %418 = vmatpush1.xpose.msra.mxu0 0.0
  %419 = vmatprep.subr.mxu0 0.0
  %420 = vmatpush1.xpose.msra.mxu0 0.0
  %421 = vmatprep.subr.mxu0 0.0
  %422 = vmatpush1.xpose.msra.mxu0 0.0
  %423 = vmatprep.subr.mxu0 0.0
  %424 = vmatpush1.xpose.msra.mxu0 0.0
  %425 = vmatprep.subr.mxu0 0.0
  %426 = vmatpush1.xpose.msra.mxu0 0.0
  %427 = vmatprep.subr.mxu0 0.0
  %428 = vmatpush1.xpose.msra.mxu0 0.0
  %429 = vmatprep.subr.mxu0 0.0
  %430 = vmatpush1.xpose.msra.mxu0 0.0
  %431 = vmatprep.subr.mxu0 0.0
  %432 = vmatpush1.xpose.msra.mxu0 0.0
  %433 = vmatprep.subr.mxu0 0.0
  %434 = vmatpush1.xpose.msra.mxu0 0.0
  %435 = vmatprep.mubr.f32.mxu0 0.0
  %436 = vmatmul.mubr.f32.gmra.mrb[0].mxu0 %v363
  %v437 = vpop.f32.mrb[0].mxu0
  %v438 = vadd.f32 0.0, %v437
  %v439 = vpop.f32.mrb[0].mxu0
  %440 = vmatprep.mubr.f32.mxu0 0.0
  %441 = vmatmul.mubr.f32.gmra.mrb[0].mxu0 %v365
  %v442 = vpop.f32.mrb[0].mxu0
  %v443 = vadd.f32 0.0, %v442
  %v444 = vpop.f32.mrb[0].mxu0
  %445 = vdwg.mxu0
  %v446 = vmul.f32 %v438, 0.4082483
  %v447 = vmul.f32 %v443, 0.4082483
  %vm448 = vcmask 130048
  %v449 = vsel %vm448, %v446, -inf
  %450 = vmax.xlane.f32.xlu0 %v449
  %v451 = vpop.xlane.xlu0 %450
  %v452 = vsel %vm448, %v447, -inf
  %453 = vmax.xlane.f32.xlu0 %v452
  %v454 = vpop.xlane.xlu0 %453
  %v455 = vsub.f32 %v446, %v451
  %v456 = vsub.f32 %v447, %v454
  %v457 = vmul.f32 %v455, 1.442695
  %v458 = vpow.pop %v457
  %v459 = vmul.f32 %v456, 1.442695
  %v460 = vpow.pop %v459
  %v461 = vsel %vm448, %v458, 0.0
  %462 = vadd.xlane.f32.xlu0 %v461
  %v463 = vpop.xlane.xlu0 %462
  %v464 = vsel %vm448, %v460, 0.0
  %465 = vadd.xlane.f32.xlu0 %v464
  %v466 = vpop.xlane.xlu0 %465
  %v467 = vrcp.pop %v463
  %v468 = vrcp.pop %v466
  %v469 = vmul.f32 %v458, %v467
  %v470 = vmul.f32 %v460, %v468
  %v472 = vsel %vm448, %v469, 0
  %v475 = vsel %vm448, %v470, 0
  %477 = vmatprep.subr.mxu0 0.0
  %478 = vmatpush1.msra.mxu0 %v354
  %479 = vmatprep.subr.mxu0 0.0
  %480 = vmatpush1.msra.mxu0 %v355
  %481 = vmatprep.subr.mxu0 0.0
  %482 = vmatpush1.msra.mxu0 0.0
  %483 = vmatprep.subr.mxu0 0.0
  %484 = vmatpush1.msra.mxu0 0.0
  %485 = vmatprep.subr.mxu0 0.0
  %486 = vmatpush1.msra.mxu0 0.0
  %487 = vmatprep.subr.mxu0 0.0
  %488 = vmatpush1.msra.mxu0 0.0
  %489 = vmatprep.subr.mxu0 0.0
  %490 = vmatpush1.msra.mxu0 0.0
  %491 = vmatprep.subr.mxu0 0.0
  %492 = vmatpush1.msra.mxu0 0.0
  %493 = vmatprep.subr.mxu0 0.0
  %494 = vmatpush1.msra.mxu0 0.0
  %495 = vmatprep.subr.mxu0 0.0
  %496 = vmatpush1.msra.mxu0 0.0
  %497 = vmatprep.subr.mxu0 0.0
  %498 = vmatpush1.msra.mxu0 0.0
  %499 = vmatprep.subr.mxu0 0.0
  %500 = vmatpush1.msra.mxu0 0.0
  %501 = vmatprep.subr.mxu0 0.0
  %502 = vmatpush1.msra.mxu0 0.0
  %503 = vmatprep.subr.mxu0 0.0
  %504 = vmatpush1.msra.mxu0 0.0
  %505 = vmatprep.subr.mxu0 0.0
  %506 = vmatpush1.msra.mxu0 0.0
  %507 = vmatprep.subr.mxu0 0.0
  %508 = vmatpush1.msra.mxu0 0.0
  %509 = vmatprep.subr.mxu0 0.0
  %510 = vmatpush1.msra.mxu0 0.0
  %511 = vmatprep.subr.mxu0 0.0
  %512 = vmatpush1.msra.mxu0 0.0
  %513 = vmatprep.subr.mxu0 0.0
  %514 = vmatpush1.msra.mxu0 0.0
  %515 = vmatprep.subr.mxu0 0.0
  %516 = vmatpush1.msra.mxu0 0.0
  %517 = vmatprep.subr.mxu0 0.0
  %518 = vmatpush1.msra.mxu0 0.0
  %519 = vmatprep.subr.mxu0 0.0
  %520 = vmatpush1.msra.mxu0 0.0
  %521 = vmatprep.subr.mxu0 0.0
  %522 = vmatpush1.msra.mxu0 0.0
  %523 = vmatprep.subr.mxu0 0.0
  %524 = vmatpush1.msra.mxu0 0.0
  %525 = vmatprep.subr.mxu0 0.0
  %526 = vmatpush1.msra.mxu0 0.0
  %527 = vmatprep.subr.mxu0 0.0
  %528 = vmatpush1.msra.mxu0 0.0
  %529 = vmatprep.subr.mxu0 0.0
  %530 = vmatpush1.msra.mxu0 0.0
  %531 = vmatprep.subr.mxu0 0.0
  %532 = vmatpush1.msra.mxu0 0.0
  %533 = vmatprep.subr.mxu0 0.0
  %534 = vmatpush1.msra.mxu0 0.0
  %535 = vmatprep.subr.mxu0 0.0
  %536 = vmatpush1.msra.mxu0 0.0
  %537 = vmatprep.subr.mxu0 0.0
  %538 = vmatpush1.msra.mxu0 0.0
  %539 = vmatprep.subr.mxu0 0.0
  %540 = vmatpush1.msra.mxu0 0.0
  %541 = vmatprep.mubr.f32.mxu0 0.0
  %542 = vmatmul.mubr.f32.gmra.mrb[0].mxu0 %v472
  %v543 = vpop.f32.mrb[0].mxu0
  %v544 = vadd.f32 0.0, %v543
  %v545 = vpop.f32.mrb[0].mxu0
  %546 = vmatprep.mubr.f32.mxu0 0.0
  %547 = vmatmul.mubr.f32.gmra.mrb[0].mxu0 %v475
  %v548 = vpop.f32.mrb[0].mxu0
  %v549 = vadd.f32 0.0, %v548
  %v550 = vpop.f32.mrb[0].mxu0
  %551 = vdwg.mxu0
  %552 = vst.msk [vmem:[#allocation4] sm:$0xff] %vm362, %v544
  %553 = vst.msk [vmem:[#allocation4 + $0x8] sm:$0xff] %vm362, %v549
  %v554 = vld [vmem:[#allocation2] sm:$0xff]
  %v555 = vld [vmem:[#allocation2 + $0x8] sm:$0xff]
  %v556 = vld [vmem:[#allocation3] sm:$0xff]
  %v557 = vld [vmem:[#allocation3 + $0x8] sm:$0xff]
  %560 = vrot.lane.b32.xlu0 %v554, 122
  %v561 = vpop.permute.xlu0 %560
  %562 = vrot.lane.b32.xlu0 %v555, 122
  %v563 = vpop.permute.xlu0 %562
  %564 = vrot.lane.b32.xlu0 %v554, 98
  %v565 = vpop.permute.xlu0 %564
  %566 = vrot.lane.b32.xlu0 %v555, 98
  %v567 = vpop.permute.xlu0 %566
  %v568 = vsel %vm362, %v561, 0
  %v570 = vsel %vm362, %v563, 0
  %v572 = vsel %vm362, %v565, 0
  %v574 = vsel %vm362, %v567, 0
  %576 = vmatprep.subr.mxu0 0.0
  %577 = vmatpush1.xpose.msra.mxu0 %v572
  %578 = vmatprep.subr.mxu0 0.0
  %579 = vmatpush1.xpose.msra.mxu0 %v574
  %580 = vmatprep.subr.mxu0 0.0
  %581 = vmatpush1.xpose.msra.mxu0 0.0
  %582 = vmatprep.subr.mxu0 0.0
  %583 = vmatpush1.xpose.msra.mxu0 0.0
  %584 = vmatprep.subr.mxu0 0.0
  %585 = vmatpush1.xpose.msra.mxu0 0.0
  %586 = vmatprep.subr.mxu0 0.0
  %587 = vmatpush1.xpose.msra.mxu0 0.0
  %588 = vmatprep.subr.mxu0 0.0
  %589 = vmatpush1.xpose.msra.mxu0 0.0
  %590 = vmatprep.subr.mxu0 0.0
  %591 = vmatpush1.xpose.msra.mxu0 0.0
  %592 = vmatprep.subr.mxu0 0.0
  %593 = vmatpush1.xpose.msra.mxu0 0.0
  %594 = vmatprep.subr.mxu0 0.0
  %595 = vmatpush1.xpose.msra.mxu0 0.0
  %596 = vmatprep.subr.mxu0 0.0
  %597 = vmatpush1.xpose.msra.mxu0 0.0
  %598 = vmatprep.subr.mxu0 0.0
  %599 = vmatpush1.xpose.msra.mxu0 0.0
  %600 = vmatprep.subr.mxu0 0.0
  %601 = vmatpush1.xpose.msra.mxu0 0.0
  %602 = vmatprep.subr.mxu0 0.0
  %603 = vmatpush1.xpose.msra.mxu0 0.0
  %604 = vmatprep.subr.mxu0 0.0
  %605 = vmatpush1.xpose.msra.mxu0 0.0
  %606 = vmatprep.subr.mxu0 0.0
  %607 = vmatpush1.xpose.msra.mxu0 0.0
  %608 = vmatprep.subr.mxu0 0.0
  %609 = vmatpush1.xpose.msra.mxu0 0.0
  %610 = vmatprep.subr.mxu0 0.0
  %611 = vmatpush1.xpose.msra.mxu0 0.0
  %612 = vmatprep.subr.mxu0 0.0
  %613 = vmatpush1.xpose.msra.mxu0 0.0
  %614 = vmatprep.subr.mxu0 0.0
  %615 = vmatpush1.xpose.msra.mxu0 0.0
  %616 = vmatprep.subr.mxu0 0.0
  %617 = vmatpush1.xpose.msra.mxu0 0.0
  %618 = vmatprep.subr.mxu0 0.0
  %619 = vmatpush1.xpose.msra.mxu0 0.0
  %620 = vmatprep.subr.mxu0 0.0
  %621 = vmatpush1.xpose.msra.mxu0 0.0
  %622 = vmatprep.subr.mxu0 0.0
  %623 = vmatpush1.xpose.msra.mxu0 0.0
  %624 = vmatprep.subr.mxu0 0.0
  %625 = vmatpush1.xpose.msra.mxu0 0.0
  %626 = vmatprep.subr.mxu0 0.0
  %627 = vmatpush1.xpose.msra.mxu0 0.0
  %628 = vmatprep.subr.mxu0 0.0
  %629 = vmatpush1.xpose.msra.mxu0 0.0
  %630 = vmatprep.subr.mxu0 0.0
  %631 = vmatpush1.xpose.msra.mxu0 0.0
  %632 = vmatprep.subr.mxu0 0.0
  %633 = vmatpush1.xpose.msra.mxu0 0.0
  %634 = vmatprep.subr.mxu0 0.0
  %635 = vmatpush1.xpose.msra.mxu0 0.0
  %636 = vmatprep.subr.mxu0 0.0
  %637 = vmatpush1.xpose.msra.mxu0 0.0
  %638 = vmatprep.subr.mxu0 0.0
  %639 = vmatpush1.xpose.msra.mxu0 0.0
  %640 = vmatprep.mubr.f32.mxu0 0.0
  %641 = vmatmul.mubr.f32.gmra.mrb[0].mxu0 %v568
  %v642 = vpop.f32.mrb[0].mxu0
  %v643 = vadd.f32 0.0, %v642
  %v644 = vpop.f32.mrb[0].mxu0
  %645 = vmatprep.mubr.f32.mxu0 0.0
  %646 = vmatmul.mubr.f32.gmra.mrb[0].mxu0 %v570
  %v647 = vpop.f32.mrb[0].mxu0
  %v648 = vadd.f32 0.0, %v647
  %v649 = vpop.f32.mrb[0].mxu0
  %650 = vdwg.mxu0
  %v651 = vmul.f32 %v643, 0.4082483
  %v652 = vmul.f32 %v648, 0.4082483
  %v653 = vsel %vm448, %v651, -inf
  %654 = vmax.xlane.f32.xlu0 %v653
  %v655 = vpop.xlane.xlu0 %654
  %v656 = vsel %vm448, %v652, -inf
  %657 = vmax.xlane.f32.xlu0 %v656
  %v658 = vpop.xlane.xlu0 %657
  %v659 = vsub.f32 %v651, %v655
  %v660 = vsub.f32 %v652, %v658
  %v661 = vmul.f32 %v659, 1.442695
  %v662 = vpow.pop %v661
  %v663 = vmul.f32 %v660, 1.442695
  %v664 = vpow.pop %v663
  %v665 = vsel %vm448, %v662, 0.0
  %666 = vadd.xlane.f32.xlu0 %v665
  %v667 = vpop.xlane.xlu0 %666
  %v668 = vsel %vm448, %v664, 0.0
  %669 = vadd.xlane.f32.xlu0 %v668
  %v670 = vpop.xlane.xlu0 %669
  %v671 = vrcp.pop %v667
  %v672 = vrcp.pop %v670
  %v673 = vmul.f32 %v662, %v671
  %v674 = vmul.f32 %v664, %v672
  %677 = vrot.lane.b32.xlu0 %v556, 122
  %v678 = vpop.permute.xlu0 %677
  %679 = vrot.lane.b32.xlu0 %v557, 122
  %v680 = vpop.permute.xlu0 %679
  %v684 = vsel %vm448, %v673, 0
  %v687 = vsel %vm448, %v674, 0
  %689 = vmatprep.subr.mxu0 0.0
  %690 = vmatpush1.msra.mxu0 %v678
  %691 = vmatprep.subr.mxu0 0.0
  %692 = vmatpush1.msra.mxu0 %v680
  %693 = vmatprep.subr.mxu0 0.0
  %694 = vmatpush1.msra.mxu0 0.0
  %695 = vmatprep.subr.mxu0 0.0
  %696 = vmatpush1.msra.mxu0 0.0
  %697 = vmatprep.subr.mxu0 0.0
  %698 = vmatpush1.msra.mxu0 0.0
  %699 = vmatprep.subr.mxu0 0.0
  %700 = vmatpush1.msra.mxu0 0.0
  %701 = vmatprep.subr.mxu0 0.0
  %702 = vmatpush1.msra.mxu0 0.0
  %703 = vmatprep.subr.mxu0 0.0
  %704 = vmatpush1.msra.mxu0 0.0
  %705 = vmatprep.subr.mxu0 0.0
  %706 = vmatpush1.msra.mxu0 0.0
  %707 = vmatprep.subr.mxu0 0.0
  %708 = vmatpush1.msra.mxu0 0.0
  %709 = vmatprep.subr.mxu0 0.0
  %710 = vmatpush1.msra.mxu0 0.0
  %711 = vmatprep.subr.mxu0 0.0
  %712 = vmatpush1.msra.mxu0 0.0
  %713 = vmatprep.subr.mxu0 0.0
  %714 = vmatpush1.msra.mxu0 0.0
  %715 = vmatprep.subr.mxu0 0.0
  %716 = vmatpush1.msra.mxu0 0.0
  %717 = vmatprep.subr.mxu0 0.0
  %718 = vmatpush1.msra.mxu0 0.0
  %719 = vmatprep.subr.mxu0 0.0
  %720 = vmatpush1.msra.mxu0 0.0
  %721 = vmatprep.subr.mxu0 0.0
  %722 = vmatpush1.msra.mxu0 0.0
  %723 = vmatprep.subr.mxu0 0.0
  %724 = vmatpush1.msra.mxu0 0.0
  %725 = vmatprep.subr.mxu0 0.0
  %726 = vmatpush1.msra.mxu0 0.0
  %727 = vmatprep.subr.mxu0 0.0
  %728 = vmatpush1.msra.mxu0 0.0
  %729 = vmatprep.subr.mxu0 0.0
  %730 = vmatpush1.msra.mxu0 0.0
  %731 = vmatprep.subr.mxu0 0.0
  %732 = vmatpush1.msra.mxu0 0.0
  %733 = vmatprep.subr.mxu0 0.0
  %734 = vmatpush1.msra.mxu0 0.0
  %735 = vmatprep.subr.mxu0 0.0
  %736 = vmatpush1.msra.mxu0 0.0
  %737 = vmatprep.subr.mxu0 0.0
  %738 = vmatpush1.msra.mxu0 0.0
  %739 = vmatprep.subr.mxu0 0.0
  %740 = vmatpush1.msra.mxu0 0.0
  %741 = vmatprep.subr.mxu0 0.0
  %742 = vmatpush1.msra.mxu0 0.0
  %743 = vmatprep.subr.mxu0 0.0
  %744 = vmatpush1.msra.mxu0 0.0
  %745 = vmatprep.subr.mxu0 0.0
  %746 = vmatpush1.msra.mxu0 0.0
  %747 = vmatprep.subr.mxu0 0.0
  %748 = vmatpush1.msra.mxu0 0.0
  %749 = vmatprep.subr.mxu0 0.0
  %750 = vmatpush1.msra.mxu0 0.0
  %751 = vmatprep.subr.mxu0 0.0
  %752 = vmatpush1.msra.mxu0 0.0
  %753 = vmatprep.mubr.f32.mxu0 0.0
  %754 = vmatmul.mubr.f32.gmra.mrb[0].mxu0 %v684
  %v755 = vpop.f32.mrb[0].mxu0
  %v756 = vadd.f32 0.0, %v755
  %v757 = vpop.f32.mrb[0].mxu0
  %758 = vmatprep.mubr.f32.mxu0 0.0
  %759 = vmatmul.mubr.f32.gmra.mrb[0].mxu0 %v687
  %v760 = vpop.f32.mrb[0].mxu0
  %v761 = vadd.f32 0.0, %v760
  %v762 = vpop.f32.mrb[0].mxu0
  %763 = vdwg.mxu0
  %766 = vrot.lane.b32.xlu0 %v756, 6
  %v767 = vpop.permute.xlu0 %766
  %768 = vrot.lane.b32.xlu0 %v761, 6
  %v769 = vpop.permute.xlu0 %768
  %vm772 = vcmask 97328
  %773 = vst.msk [vmem:[#allocation4] sm:$0xff] %vm772, %v767
  %774 = vst.msk [vmem:[#allocation4 + $0x8] sm:$0xff] %vm772, %v769
  %v775 = vld [vmem:[#allocation2] sm:$0xff]
  %v776 = vld [vmem:[#allocation2 + $0x8] sm:$0xff]
  %v777 = vld [vmem:[#allocation3] sm:$0xff]
  %v778 = vld [vmem:[#allocation3 + $0x8] sm:$0xff]
  %781 = vrot.lane.b32.xlu0 %v775, 116
  %v782 = vpop.permute.xlu0 %781
  %783 = vrot.lane.b32.xlu0 %v776, 116
  %v784 = vpop.permute.xlu0 %783
  %785 = vrot.lane.b32.xlu0 %v775, 92
  %v786 = vpop.permute.xlu0 %785
  %787 = vrot.lane.b32.xlu0 %v776, 92
  %v788 = vpop.permute.xlu0 %787
  %v789 = vsel %vm362, %v782, 0
  %v791 = vsel %vm362, %v784, 0
  %v793 = vsel %vm362, %v786, 0
  %v795 = vsel %vm362, %v788, 0
  %797 = vmatprep.subr.mxu0 0.0
  %798 = vmatpush1.xpose.msra.mxu0 %v793
  %799 = vmatprep.subr.mxu0 0.0
  %800 = vmatpush1.xpose.msra.mxu0 %v795
  %801 = vmatprep.subr.mxu0 0.0
  %802 = vmatpush1.xpose.msra.mxu0 0.0
  %803 = vmatprep.subr.mxu0 0.0
  %804 = vmatpush1.xpose.msra.mxu0 0.0
  %805 = vmatprep.subr.mxu0 0.0
  %806 = vmatpush1.xpose.msra.mxu0 0.0
  %807 = vmatprep.subr.mxu0 0.0
  %808 = vmatpush1.xpose.msra.mxu0 0.0
  %809 = vmatprep.subr.mxu0 0.0
  %810 = vmatpush1.xpose.msra.mxu0 0.0
  %811 = vmatprep.subr.mxu0 0.0
  %812 = vmatpush1.xpose.msra.mxu0 0.0
  %813 = vmatprep.subr.mxu0 0.0
  %814 = vmatpush1.xpose.msra.mxu0 0.0
  %815 = vmatprep.subr.mxu0 0.0
  %816 = vmatpush1.xpose.msra.mxu0 0.0
  %817 = vmatprep.subr.mxu0 0.0
  %818 = vmatpush1.xpose.msra.mxu0 0.0
  %819 = vmatprep.subr.mxu0 0.0
  %820 = vmatpush1.xpose.msra.mxu0 0.0
  %821 = vmatprep.subr.mxu0 0.0
  %822 = vmatpush1.xpose.msra.mxu0 0.0
  %823 = vmatprep.subr.mxu0 0.0
  %824 = vmatpush1.xpose.msra.mxu0 0.0
  %825 = vmatprep.subr.mxu0 0.0
  %826 = vmatpush1.xpose.msra.mxu0 0.0
  %827 = vmatprep.subr.mxu0 0.0
  %828 = vmatpush1.xpose.msra.mxu0 0.0
  %829 = vmatprep.subr.mxu0 0.0
  %830 = vmatpush1.xpose.msra.mxu0 0.0
  %831 = vmatprep.subr.mxu0 0.0
  %832 = vmatpush1.xpose.msra.mxu0 0.0
  %833 = vmatprep.subr.mxu0 0.0
  %834 = vmatpush1.xpose.msra.mxu0 0.0
  %835 = vmatprep.subr.mxu0 0.0
  %836 = vmatpush1.xpose.msra.mxu0 0.0
  %837 = vmatprep.subr.mxu0 0.0
  %838 = vmatpush1.xpose.msra.mxu0 0.0
  %839 = vmatprep.subr.mxu0 0.0
  %840 = vmatpush1.xpose.msra.mxu0 0.0
  %841 = vmatprep.subr.mxu0 0.0
  %842 = vmatpush1.xpose.msra.mxu0 0.0
  %843 = vmatprep.subr.mxu0 0.0
  %844 = vmatpush1.xpose.msra.mxu0 0.0
  %845 = vmatprep.subr.mxu0 0.0
  %846 = vmatpush1.xpose.msra.mxu0 0.0
  %847 = vmatprep.subr.mxu0 0.0
  %848 = vmatpush1.xpose.msra.mxu0 0.0
  %849 = vmatprep.subr.mxu0 0.0
  %850 = vmatpush1.xpose.msra.mxu0 0.0
  %851 = vmatprep.subr.mxu0 0.0
  %852 = vmatpush1.xpose.msra.mxu0 0.0
  %853 = vmatprep.subr.mxu0 0.0
  %854 = vmatpush1.xpose.msra.mxu0 0.0
  %855 = vmatprep.subr.mxu0 0.0
  %856 = vmatpush1.xpose.msra.mxu0 0.0
  %857 = vmatprep.subr.mxu0 0.0
  %858 = vmatpush1.xpose.msra.mxu0 0.0
  %859 = vmatprep.subr.mxu0 0.0
  %860 = vmatpush1.xpose.msra.mxu0 0.0
  %861 = vmatprep.mubr.f32.mxu0 0.0
  %862 = vmatmul.mubr.f32.gmra.mrb[0].mxu0 %v789
  %v863 = vpop.f32.mrb[0].mxu0
  %v864 = vadd.f32 0.0, %v863
  %v865 = vpop.f32.mrb[0].mxu0
  %866 = vmatprep.mubr.f32.mxu0 0.0
  %867 = vmatmul.mubr.f32.gmra.mrb[0].mxu0 %v791
  %v868 = vpop.f32.mrb[0].mxu0
  %v869 = vadd.f32 0.0, %v868
  %v870 = vpop.f32.mrb[0].mxu0
  %871 = vdwg.mxu0
  %v872 = vmul.f32 %v864, 0.4082483
  %v873 = vmul.f32 %v869, 0.4082483
  %v874 = vsel %vm448, %v872, -inf
  %875 = vmax.xlane.f32.xlu0 %v874
  %v876 = vpop.xlane.xlu0 %875
  %v877 = vsel %vm448, %v873, -inf
  %878 = vmax.xlane.f32.xlu0 %v877
  %v879 = vpop.xlane.xlu0 %878
  %v880 = vsub.f32 %v872, %v876
  %v881 = vsub.f32 %v873, %v879
  %v882 = vmul.f32 %v880, 1.442695
  %v883 = vpow.pop %v882
  %v884 = vmul.f32 %v881, 1.442695
  %v885 = vpow.pop %v884
  %v886 = vsel %vm448, %v883, 0.0
  %887 = vadd.xlane.f32.xlu0 %v886
  %v888 = vpop.xlane.xlu0 %887
  %v889 = vsel %vm448, %v885, 0.0
  %890 = vadd.xlane.f32.xlu0 %v889
  %v891 = vpop.xlane.xlu0 %890
  %v892 = vrcp.pop %v888
  %v893 = vrcp.pop %v891
  %v894 = vmul.f32 %v883, %v892
  %v895 = vmul.f32 %v885, %v893
  %898 = vrot.lane.b32.xlu0 %v777, 116
  %v899 = vpop.permute.xlu0 %898
  %900 = vrot.lane.b32.xlu0 %v778, 116
  %v901 = vpop.permute.xlu0 %900
  %v905 = vsel %vm448, %v894, 0
  %v908 = vsel %vm448, %v895, 0
  %910 = vmatprep.subr.mxu0 0.0
  %911 = vmatpush1.msra.mxu0 %v899
  %912 = vmatprep.subr.mxu0 0.0
  %913 = vmatpush1.msra.mxu0 %v901
  %914 = vmatprep.subr.mxu0 0.0
  %915 = vmatpush1.msra.mxu0 0.0
  %916 = vmatprep.subr.mxu0 0.0
  %917 = vmatpush1.msra.mxu0 0.0
  %918 = vmatprep.subr.mxu0 0.0
  %919 = vmatpush1.msra.mxu0 0.0
  %920 = vmatprep.subr.mxu0 0.0
  %921 = vmatpush1.msra.mxu0 0.0
  %922 = vmatprep.subr.mxu0 0.0
  %923 = vmatpush1.msra.mxu0 0.0
  %924 = vmatprep.subr.mxu0 0.0
  %925 = vmatpush1.msra.mxu0 0.0
  %926 = vmatprep.subr.mxu0 0.0
  %927 = vmatpush1.msra.mxu0 0.0
  %928 = vmatprep.subr.mxu0 0.0
  %929 = vmatpush1.msra.mxu0 0.0
  %930 = vmatprep.subr.mxu0 0.0
  %931 = vmatpush1.msra.mxu0 0.0
  %932 = vmatprep.subr.mxu0 0.0
  %933 = vmatpush1.msra.mxu0 0.0
  %934 = vmatprep.subr.mxu0 0.0
  %935 = vmatpush1.msra.mxu0 0.0
  %936 = vmatprep.subr.mxu0 0.0
  %937 = vmatpush1.msra.mxu0 0.0
  %938 = vmatprep.subr.mxu0 0.0
  %939 = vmatpush1.msra.mxu0 0.0
  %940 = vmatprep.subr.mxu0 0.0
  %941 = vmatpush1.msra.mxu0 0.0
  %942 = vmatprep.subr.mxu0 0.0
  %943 = vmatpush1.msra.mxu0 0.0
  %944 = vmatprep.subr.mxu0 0.0
  %945 = vmatpush1.msra.mxu0 0.0
  %946 = vmatprep.subr.mxu0 0.0
  %947 = vmatpush1.msra.mxu0 0.0
  %948 = vmatprep.subr.mxu0 0.0
  %949 = vmatpush1.msra.mxu0 0.0
  %950 = vmatprep.subr.mxu0 0.0
  %951 = vmatpush1.msra.mxu0 0.0
  %952 = vmatprep.subr.mxu0 0.0
  %953 = vmatpush1.msra.mxu0 0.0
  %954 = vmatprep.subr.mxu0 0.0
  %955 = vmatpush1.msra.mxu0 0.0
  %956 = vmatprep.subr.mxu0 0.0
  %957 = vmatpush1.msra.mxu0 0.0
  %958 = vmatprep.subr.mxu0 0.0
  %959 = vmatpush1.msra.mxu0 0.0
  %960 = vmatprep.subr.mxu0 0.0
  %961 = vmatpush1.msra.mxu0 0.0
  %962 = vmatprep.subr.mxu0 0.0
  %963 = vmatpush1.msra.mxu0 0.0
  %964 = vmatprep.subr.mxu0 0.0
  %965 = vmatpush1.msra.mxu0 0.0
  %966 = vmatprep.subr.mxu0 0.0
  %967 = vmatpush1.msra.mxu0 0.0
  %968 = vmatprep.subr.mxu0 0.0
  %969 = vmatpush1.msra.mxu0 0.0
  %970 = vmatprep.subr.mxu0 0.0
  %971 = vmatpush1.msra.mxu0 0.0
  %972 = vmatprep.subr.mxu0 0.0
  %973 = vmatpush1.msra.mxu0 0.0
  %974 = vmatprep.mubr.f32.mxu0 0.0
  %975 = vmatmul.mubr.f32.gmra.mrb[0].mxu0 %v905
  %v976 = vpop.f32.mrb[0].mxu0
  %v977 = vadd.f32 0.0, %v976
  %v978 = vpop.f32.mrb[0].mxu0
  %979 = vmatprep.mubr.f32.mxu0 0.0
  %980 = vmatmul.mubr.f32.gmra.mrb[0].mxu0 %v908
  %v981 = vpop.f32.mrb[0].mxu0
  %v982 = vadd.f32 0.0, %v981
  %v983 = vpop.f32.mrb[0].mxu0
  %984 = vdwg.mxu0
  %987 = vrot.lane.b32.xlu0 %v977, 12
  %v988 = vpop.permute.xlu0 %987
  %989 = vrot.lane.b32.xlu0 %v982, 12
  %v990 = vpop.permute.xlu0 %989
  %vm993 = vcmask 146528
  %994 = vst.msk [vmem:[#allocation4] sm:$0xff] %vm993, %v988
  %995 = vst.msk [vmem:[#allocation4 + $0x8] sm:$0xff] %vm993, %v990
  %v996 = vld [vmem:[#allocation2] sm:$0xff]
  %v997 = vld [vmem:[#allocation2 + $0x8] sm:$0xff]
  %v998 = vld [vmem:[#allocation3] sm:$0xff]
  %v999 = vld [vmem:[#allocation3 + $0x8] sm:$0xff]
  %1002 = vrot.lane.b32.xlu0 %v996, 110
  %v1003 = vpop.permute.xlu0 %1002
  %1004 = vrot.lane.b32.xlu0 %v997, 110
  %v1005 = vpop.permute.xlu0 %1004
  %1006 = vrot.lane.b32.xlu0 %v996, 86
  %v1007 = vpop.permute.xlu0 %1006
  %1008 = vrot.lane.b32.xlu0 %v997, 86
  %v1009 = vpop.permute.xlu0 %1008
  %v1010 = vsel %vm362, %v1003, 0
  %v1012 = vsel %vm362, %v1005, 0
  %v1014 = vsel %vm362, %v1007, 0
  %v1016 = vsel %vm362, %v1009, 0
  %1018 = vmatprep.subr.mxu0 0.0
  %1019 = vmatpush1.xpose.msra.mxu0 %v1014
  %1020 = vmatprep.subr.mxu0 0.0
  %1021 = vmatpush1.xpose.msra.mxu0 %v1016
  %1022 = vmatprep.subr.mxu0 0.0
  %1023 = vmatpush1.xpose.msra.mxu0 0.0
  %1024 = vmatprep.subr.mxu0 0.0
  %1025 = vmatpush1.xpose.msra.mxu0 0.0
  %1026 = vmatprep.subr.mxu0 0.0
  %1027 = vmatpush1.xpose.msra.mxu0 0.0
  %1028 = vmatprep.subr.mxu0 0.0
  %1029 = vmatpush1.xpose.msra.mxu0 0.0
  %1030 = vmatprep.subr.mxu0 0.0
  %1031 = vmatpush1.xpose.msra.mxu0 0.0
  %1032 = vmatprep.subr.mxu0 0.0
  %1033 = vmatpush1.xpose.msra.mxu0 0.0
  %1034 = vmatprep.subr.mxu0 0.0
  %1035 = vmatpush1.xpose.msra.mxu0 0.0
  %1036 = vmatprep.subr.mxu0 0.0
  %1037 = vmatpush1.xpose.msra.mxu0 0.0
  %1038 = vmatprep.subr.mxu0 0.0
  %1039 = vmatpush1.xpose.msra.mxu0 0.0
  %1040 = vmatprep.subr.mxu0 0.0
  %1041 = vmatpush1.xpose.msra.mxu0 0.0
  %1042 = vmatprep.subr.mxu0 0.0
  %1043 = vmatpush1.xpose.msra.mxu0 0.0
  %1044 = vmatprep.subr.mxu0 0.0
  %1045 = vmatpush1.xpose.msra.mxu0 0.0
  %1046 = vmatprep.subr.mxu0 0.0
  %1047 = vmatpush1.xpose.msra.mxu0 0.0
  %1048 = vmatprep.subr.mxu0 0.0
  %1049 = vmatpush1.xpose.msra.mxu0 0.0
  %1050 = vmatprep.subr.mxu0 0.0
  %1051 = vmatpush1.xpose.msra.mxu0 0.0
  %1052 = vmatprep.subr.mxu0 0.0
  %1053 = vmatpush1.xpose.msra.mxu0 0.0
  %1054 = vmatprep.subr.mxu0 0.0
  %1055 = vmatpush1.xpose.msra.mxu0 0.0
  %1056 = vmatprep.subr.mxu0 0.0
  %1057 = vmatpush1.xpose.msra.mxu0 0.0
  %1058 = vmatprep.subr.mxu0 0.0
  %1059 = vmatpush1.xpose.msra.mxu0 0.0
  %1060 = vmatprep.subr.mxu0 0.0
  %1061 = vmatpush1.xpose.msra.mxu0 0.0
  %1062 = vmatprep.subr.mxu0 0.0
  %1063 = vmatpush1.xpose.msra.mxu0 0.0
  %1064 = vmatprep.subr.mxu0 0.0
  %1065 = vmatpush1.xpose.msra.mxu0 0.0
  %1066 = vmatprep.subr.mxu0 0.0
  %1067 = vmatpush1.xpose.msra.mxu0 0.0
  %1068 = vmatprep.subr.mxu0 0.0
  %1069 = vmatpush1.xpose.msra.mxu0 0.0
  %1070 = vmatprep.subr.mxu0 0.0
  %1071 = vmatpush1.xpose.msra.mxu0 0.0
  %1072 = vmatprep.subr.mxu0 0.0
  %1073 = vmatpush1.xpose.msra.mxu0 0.0
  %1074 = vmatprep.subr.mxu0 0.0
  %1075 = vmatpush1.xpose.msra.mxu0 0.0
  %1076 = vmatprep.subr.mxu0 0.0
  %1077 = vmatpush1.xpose.msra.mxu0 0.0
  %1078 = vmatprep.subr.mxu0 0.0
  %1079 = vmatpush1.xpose.msra.mxu0 0.0
  %1080 = vmatprep.subr.mxu0 0.0
  %1081 = vmatpush1.xpose.msra.mxu0 0.0
  %1082 = vmatprep.mubr.f32.mxu0 0.0
  %1083 = vmatmul.mubr.f32.gmra.mrb[0].mxu0 %v1010
  %v1084 = vpop.f32.mrb[0].mxu0
  %v1085 = vadd.f32 0.0, %v1084
  %v1086 = vpop.f32.mrb[0].mxu0
  %1087 = vmatprep.mubr.f32.mxu0 0.0
  %1088 = vmatmul.mubr.f32.gmra.mrb[0].mxu0 %v1012
  %v1089 = vpop.f32.mrb[0].mxu0
  %v1090 = vadd.f32 0.0, %v1089
  %v1091 = vpop.f32.mrb[0].mxu0
  %1092 = vdwg.mxu0
  %v1093 = vmul.f32 %v1085, 0.4082483
  %v1094 = vmul.f32 %v1090, 0.4082483
  %v1095 = vsel %vm448, %v1093, -inf
  %1096 = vmax.xlane.f32.xlu0 %v1095
  %v1097 = vpop.xlane.xlu0 %1096
  %v1098 = vsel %vm448, %v1094, -inf
  %1099 = vmax.xlane.f32.xlu0 %v1098
  %v1100 = vpop.xlane.xlu0 %1099
  %v1101 = vsub.f32 %v1093, %v1097
  %v1102 = vsub.f32 %v1094, %v1100
  %v1103 = vmul.f32 %v1101, 1.442695
  %v1104 = vpow.pop %v1103
  %v1105 = vmul.f32 %v1102, 1.442695
  %v1106 = vpow.pop %v1105
  %v1107 = vsel %vm448, %v1104, 0.0
  %1108 = vadd.xlane.f32.xlu0 %v1107
  %v1109 = vpop.xlane.xlu0 %1108
  %v1110 = vsel %vm448, %v1106, 0.0
  %1111 = vadd.xlane.f32.xlu0 %v1110
  %v1112 = vpop.xlane.xlu0 %1111
  %v1113 = vrcp.pop %v1109
  %v1114 = vrcp.pop %v1112
  %v1115 = vmul.f32 %v1104, %v1113
  %v1116 = vmul.f32 %v1106, %v1114
  %1119 = vrot.lane.b32.xlu0 %v998, 110
  %v1120 = vpop.permute.xlu0 %1119
  %1121 = vrot.lane.b32.xlu0 %v999, 110
  %v1122 = vpop.permute.xlu0 %1121
  %v1126 = vsel %vm448, %v1115, 0
  %v1129 = vsel %vm448, %v1116, 0
  %1131 = vmatprep.subr.mxu0 0.0
  %1132 = vmatpush1.msra.mxu0 %v1120
  %1133 = vmatprep.subr.mxu0 0.0
  %1134 = vmatpush1.msra.mxu0 %v1122
  %1135 = vmatprep.subr.mxu0 0.0
  %1136 = vmatpush1.msra.mxu0 0.0
  %1137 = vmatprep.subr.mxu0 0.0
  %1138 = vmatpush1.msra.mxu0 0.0
  %1139 = vmatprep.subr.mxu0 0.0
  %1140 = vmatpush1.msra.mxu0 0.0
  %1141 = vmatprep.subr.mxu0 0.0
  %1142 = vmatpush1.msra.mxu0 0.0
  %1143 = vmatprep.subr.mxu0 0.0
  %1144 = vmatpush1.msra.mxu0 0.0
  %1145 = vmatprep.subr.mxu0 0.0
  %1146 = vmatpush1.msra.mxu0 0.0
  %1147 = vmatprep.subr.mxu0 0.0
  %1148 = vmatpush1.msra.mxu0 0.0
  %1149 = vmatprep.subr.mxu0 0.0
  %1150 = vmatpush1.msra.mxu0 0.0
  %1151 = vmatprep.subr.mxu0 0.0
  %1152 = vmatpush1.msra.mxu0 0.0
  %1153 = vmatprep.subr.mxu0 0.0
  %1154 = vmatpush1.msra.mxu0 0.0
  %1155 = vmatprep.subr.mxu0 0.0
  %1156 = vmatpush1.msra.mxu0 0.0
  %1157 = vmatprep.subr.mxu0 0.0
  %1158 = vmatpush1.msra.mxu0 0.0
  %1159 = vmatprep.subr.mxu0 0.0
  %1160 = vmatpush1.msra.mxu0 0.0
  %1161 = vmatprep.subr.mxu0 0.0
  %1162 = vmatpush1.msra.mxu0 0.0
  %1163 = vmatprep.subr.mxu0 0.0
  %1164 = vmatpush1.msra.mxu0 0.0
  %1165 = vmatprep.subr.mxu0 0.0
  %1166 = vmatpush1.msra.mxu0 0.0
  %1167 = vmatprep.subr.mxu0 0.0
  %1168 = vmatpush1.msra.mxu0 0.0
  %1169 = vmatprep.subr.mxu0 0.0
  %1170 = vmatpush1.msra.mxu0 0.0
  %1171 = vmatprep.subr.mxu0 0.0
  %1172 = vmatpush1.msra.mxu0 0.0
  %1173 = vmatprep.subr.mxu0 0.0
  %1174 = vmatpush1.msra.mxu0 0.0
  %1175 = vmatprep.subr.mxu0 0.0
  %1176 = vmatpush1.msra.mxu0 0.0
  %1177 = vmatprep.subr.mxu0 0.0
  %1178 = vmatpush1.msra.mxu0 0.0
  %1179 = vmatprep.subr.mxu0 0.0
  %1180 = vmatpush1.msra.mxu0 0.0
  %1181 = vmatprep.subr.mxu0 0.0
  %1182 = vmatpush1.msra.mxu0 0.0
  %1183 = vmatprep.subr.mxu0 0.0
  %1184 = vmatpush1.msra.mxu0 0.0
  %1185 = vmatprep.subr.mxu0 0.0
  %1186 = vmatpush1.msra.mxu0 0.0
  %1187 = vmatprep.subr.mxu0 0.0
  %1188 = vmatpush1.msra.mxu0 0.0
  %1189 = vmatprep.subr.mxu0 0.0
  %1190 = vmatpush1.msra.mxu0 0.0
  %1191 = vmatprep.subr.mxu0 0.0
  %1192 = vmatpush1.msra.mxu0 0.0
  %1193 = vmatprep.subr.mxu0 0.0
  %1194 = vmatpush1.msra.mxu0 0.0
  %1195 = vmatprep.mubr.f32.mxu0 0.0
  %1196 = vmatmul.mubr.f32.gmra.mrb[0].mxu0 %v1126
  %v1197 = vpop.f32.mrb[0].mxu0
  %v1198 = vadd.f32 0.0, %v1197
  %v1199 = vpop.f32.mrb[0].mxu0
  %1200 = vmatprep.mubr.f32.mxu0 0.0
  %1201 = vmatmul.mubr.f32.gmra.mrb[0].mxu0 %v1129
  %v1202 = vpop.f32.mrb[0].mxu0
  %v1203 = vadd.f32 0.0, %v1202
  %v1204 = vpop.f32.mrb[0].mxu0
  %1205 = vdwg.mxu0
  %1208 = vrot.lane.b32.xlu0 %v1198, 18
  %v1209 = vpop.permute.xlu0 %1208
  %1210 = vrot.lane.b32.xlu0 %v1203, 18
  %v1211 = vpop.permute.xlu0 %1210
  %vm1214 = vcmask 195728
  %1215 = vst.msk [vmem:[#allocation4] sm:$0xff] %vm1214, %v1209
  %1216 = vst.msk [vmem:[#allocation4 + $0x8] sm:$0xff] %vm1214, %v1211
  %v1217 = vld [vmem:[#allocation2 + $0x10] sm:$0xff]
  %v1218 = vld [vmem:[#allocation2 + $0x18] sm:$0xff]
  %v1219 = vld [vmem:[#allocation3 + $0x10] sm:$0xff]
  %v1220 = vld [vmem:[#allocation3 + $0x18] sm:$0xff]
  %1223 = vrot.lane.b32.xlu0 %v1217, 104
  %v1224 = vpop.permute.xlu0 %1223
  %1225 = vrot.lane.b32.xlu0 %v1218, 104
  %v1226 = vpop.permute.xlu0 %1225
  %v1227 = vsel %vm362, %v1217, 0
  %v1229 = vsel %vm362, %v1218, 0
  %v1231 = vsel %vm362, %v1224, 0
  %v1233 = vsel %vm362, %v1226, 0
  %1235 = vmatprep.subr.mxu0 0.0
  %1236 = vmatpush1.xpose.msra.mxu0 %v1231
  %1237 = vmatprep.subr.mxu0 0.0
  %1238 = vmatpush1.xpose.msra.mxu0 %v1233
  %1239 = vmatprep.subr.mxu0 0.0
  %1240 = vmatpush1.xpose.msra.mxu0 0.0
  %1241 = vmatprep.subr.mxu0 0.0
  %1242 = vmatpush1.xpose.msra.mxu0 0.0
  %1243 = vmatprep.subr.mxu0 0.0
  %1244 = vmatpush1.xpose.msra.mxu0 0.0
  %1245 = vmatprep.subr.mxu0 0.0
  %1246 = vmatpush1.xpose.msra.mxu0 0.0
  %1247 = vmatprep.subr.mxu0 0.0
  %1248 = vmatpush1.xpose.msra.mxu0 0.0
  %1249 = vmatprep.subr.mxu0 0.0
  %1250 = vmatpush1.xpose.msra.mxu0 0.0
  %1251 = vmatprep.subr.mxu0 0.0
  %1252 = vmatpush1.xpose.msra.mxu0 0.0
  %1253 = vmatprep.subr.mxu0 0.0
  %1254 = vmatpush1.xpose.msra.mxu0 0.0
  %1255 = vmatprep.subr.mxu0 0.0
  %1256 = vmatpush1.xpose.msra.mxu0 0.0
  %1257 = vmatprep.subr.mxu0 0.0
  %1258 = vmatpush1.xpose.msra.mxu0 0.0
  %1259 = vmatprep.subr.mxu0 0.0
  %1260 = vmatpush1.xpose.msra.mxu0 0.0
  %1261 = vmatprep.subr.mxu0 0.0
  %1262 = vmatpush1.xpose.msra.mxu0 0.0
  %1263 = vmatprep.subr.mxu0 0.0
  %1264 = vmatpush1.xpose.msra.mxu0 0.0
  %1265 = vmatprep.subr.mxu0 0.0
  %1266 = vmatpush1.xpose.msra.mxu0 0.0
  %1267 = vmatprep.subr.mxu0 0.0
  %1268 = vmatpush1.xpose.msra.mxu0 0.0
  %1269 = vmatprep.subr.mxu0 0.0
  %1270 = vmatpush1.xpose.msra.mxu0 0.0
  %1271 = vmatprep.subr.mxu0 0.0
  %1272 = vmatpush1.xpose.msra.mxu0 0.0
  %1273 = vmatprep.subr.mxu0 0.0
  %1274 = vmatpush1.xpose.msra.mxu0 0.0
  %1275 = vmatprep.subr.mxu0 0.0
  %1276 = vmatpush1.xpose.msra.mxu0 0.0
  %1277 = vmatprep.subr.mxu0 0.0
  %1278 = vmatpush1.xpose.msra.mxu0 0.0
  %1279 = vmatprep.subr.mxu0 0.0
  %1280 = vmatpush1.xpose.msra.mxu0 0.0
  %1281 = vmatprep.subr.mxu0 0.0
  %1282 = vmatpush1.xpose.msra.mxu0 0.0
  %1283 = vmatprep.subr.mxu0 0.0
  %1284 = vmatpush1.xpose.msra.mxu0 0.0
  %1285 = vmatprep.subr.mxu0 0.0
  %1286 = vmatpush1.xpose.msra.mxu0 0.0
  %1287 = vmatprep.subr.mxu0 0.0
  %1288 = vmatpush1.xpose.msra.mxu0 0.0
  %1289 = vmatprep.subr.mxu0 0.0
  %1290 = vmatpush1.xpose.msra.mxu0 0.0
  %1291 = vmatprep.subr.mxu0 0.0
  %1292 = vmatpush1.xpose.msra.mxu0 0.0
  %1293 = vmatprep.subr.mxu0 0.0
  %1294 = vmatpush1.xpose.msra.mxu0 0.0
  %1295 = vmatprep.subr.mxu0 0.0
  %1296 = vmatpush1.xpose.msra.mxu0 0.0
  %1297 = vmatprep.subr.mxu0 0.0
  %1298 = vmatpush1.xpose.msra.mxu0 0.0
  %1299 = vmatprep.mubr.f32.mxu0 0.0
  %1300 = vmatmul.mubr.f32.gmra.mrb[0].mxu0 %v1227
  %v1301 = vpop.f32.mrb[0].mxu0
  %v1302 = vadd.f32 0.0, %v1301
  %v1303 = vpop.f32.mrb[0].mxu0
  %1304 = vmatprep.mubr.f32.mxu0 0.0
  %1305 = vmatmul.mubr.f32.gmra.mrb[0].mxu0 %v1229
  %v1306 = vpop.f32.mrb[0].mxu0
  %v1307 = vadd.f32 0.0, %v1306
  %v1308 = vpop.f32.mrb[0].mxu0
  %1309 = vdwg.mxu0
  %v1310 = vmul.f32 %v1302, 0.4082483
  %v1311 = vmul.f32 %v1307, 0.4082483
  %v1312 = vsel %vm448, %v1310, -inf
  %1313 = vmax.xlane.f32.xlu0 %v1312
  %v1314 = vpop.xlane.xlu0 %1313
  %v1315 = vsel %vm448, %v1311, -inf
  %1316 = vmax.xlane.f32.xlu0 %v1315
  %v1317 = vpop.xlane.xlu0 %1316
  %v1318 = vsub.f32 %v1310, %v1314
  %v1319 = vsub.f32 %v1311, %v1317
  %v1320 = vmul.f32 %v1318, 1.442695
  %v1321 = vpow.pop %v1320
  %v1322 = vmul.f32 %v1319, 1.442695
  %v1323 = vpow.pop %v1322
  %v1324 = vsel %vm448, %v1321, 0.0
  %1325 = vadd.xlane.f32.xlu0 %v1324
  %v1326 = vpop.xlane.xlu0 %1325
  %v1327 = vsel %vm448, %v1323, 0.0
  %1328 = vadd.xlane.f32.xlu0 %v1327
  %v1329 = vpop.xlane.xlu0 %1328
  %v1330 = vrcp.pop %v1326
  %v1331 = vrcp.pop %v1329
  %v1332 = vmul.f32 %v1321, %v1330
  %v1333 = vmul.f32 %v1323, %v1331
  %v1335 = vsel %vm448, %v1332, 0
  %v1338 = vsel %vm448, %v1333, 0
  %1340 = vmatprep.subr.mxu0 0.0
  %1341 = vmatpush1.msra.mxu0 %v1219
  %1342 = vmatprep.subr.mxu0 0.0
  %1343 = vmatpush1.msra.mxu0 %v1220
  %1344 = vmatprep.subr.mxu0 0.0
  %1345 = vmatpush1.msra.mxu0 0.0
  %1346 = vmatprep.subr.mxu0 0.0
  %1347 = vmatpush1.msra.mxu0 0.0
  %1348 = vmatprep.subr.mxu0 0.0
  %1349 = vmatpush1.msra.mxu0 0.0
  %1350 = vmatprep.subr.mxu0 0.0
  %1351 = vmatpush1.msra.mxu0 0.0
  %1352 = vmatprep.subr.mxu0 0.0
  %1353 = vmatpush1.msra.mxu0 0.0
  %1354 = vmatprep.subr.mxu0 0.0
  %1355 = vmatpush1.msra.mxu0 0.0
  %1356 = vmatprep.subr.mxu0 0.0
  %1357 = vmatpush1.msra.mxu0 0.0
  %1358 = vmatprep.subr.mxu0 0.0
  %1359 = vmatpush1.msra.mxu0 0.0
  %1360 = vmatprep.subr.mxu0 0.0
  %1361 = vmatpush1.msra.mxu0 0.0
  %1362 = vmatprep.subr.mxu0 0.0
  %1363 = vmatpush1.msra.mxu0 0.0
  %1364 = vmatprep.subr.mxu0 0.0
  %1365 = vmatpush1.msra.mxu0 0.0
  %1366 = vmatprep.subr.mxu0 0.0
  %1367 = vmatpush1.msra.mxu0 0.0
  %1368 = vmatprep.subr.mxu0 0.0
  %1369 = vmatpush1.msra.mxu0 0.0
  %1370 = vmatprep.subr.mxu0 0.0
  %1371 = vmatpush1.msra.mxu0 0.0
  %1372 = vmatprep.subr.mxu0 0.0
  %1373 = vmatpush1.msra.mxu0 0.0
  %1374 = vmatprep.subr.mxu0 0.0
  %1375 = vmatpush1.msra.mxu0 0.0
  %1376 = vmatprep.subr.mxu0 0.0
  %1377 = vmatpush1.msra.mxu0 0.0
  %1378 = vmatprep.subr.mxu0 0.0
  %1379 = vmatpush1.msra.mxu0 0.0
  %1380 = vmatprep.subr.mxu0 0.0
  %1381 = vmatpush1.msra.mxu0 0.0
  %1382 = vmatprep.subr.mxu0 0.0
  %1383 = vmatpush1.msra.mxu0 0.0
  %1384 = vmatprep.subr.mxu0 0.0
  %1385 = vmatpush1.msra.mxu0 0.0
  %1386 = vmatprep.subr.mxu0 0.0
  %1387 = vmatpush1.msra.mxu0 0.0
  %1388 = vmatprep.subr.mxu0 0.0
  %1389 = vmatpush1.msra.mxu0 0.0
  %1390 = vmatprep.subr.mxu0 0.0
  %1391 = vmatpush1.msra.mxu0 0.0
  %1392 = vmatprep.subr.mxu0 0.0
  %1393 = vmatpush1.msra.mxu0 0.0
  %1394 = vmatprep.subr.mxu0 0.0
  %1395 = vmatpush1.msra.mxu0 0.0
  %1396 = vmatprep.subr.mxu0 0.0
  %1397 = vmatpush1.msra.mxu0 0.0
  %1398 = vmatprep.subr.mxu0 0.0
  %1399 = vmatpush1.msra.mxu0 0.0
  %1400 = vmatprep.subr.mxu0 0.0
  %1401 = vmatpush1.msra.mxu0 0.0
  %1402 = vmatprep.subr.mxu0 0.0
  %1403 = vmatpush1.msra.mxu0 0.0
  %1404 = vmatprep.mubr.f32.mxu0 0.0
  %1405 = vmatmul.mubr.f32.gmra.mrb[0].mxu0 %v1335
  %v1406 = vpop.f32.mrb[0].mxu0
  %v1407 = vadd.f32 0.0, %v1406
  %v1408 = vpop.f32.mrb[0].mxu0
  %1409 = vmatprep.mubr.f32.mxu0 0.0
  %1410 = vmatmul.mubr.f32.gmra.mrb[0].mxu0 %v1338
  %v1411 = vpop.f32.mrb[0].mxu0
  %v1412 = vadd.f32 0.0, %v1411
  %v1413 = vpop.f32.mrb[0].mxu0
  %1414 = vdwg.mxu0
  %1415 = vst.msk [vmem:[#allocation4 + $0x10] sm:$0xff] %vm362, %v1407
  %1416 = vst.msk [vmem:[#allocation4 + $0x18] sm:$0xff] %vm362, %v1412
  %v1417 = vld [vmem:[#allocation2 + $0x10] sm:$0xff]
  %v1418 = vld [vmem:[#allocation2 + $0x18] sm:$0xff]
  %v1419 = vld [vmem:[#allocation3 + $0x10] sm:$0xff]
  %v1420 = vld [vmem:[#allocation3 + $0x18] sm:$0xff]
  %1423 = vrot.lane.b32.xlu0 %v1417, 122
  %v1424 = vpop.permute.xlu0 %1423
  %1425 = vrot.lane.b32.xlu0 %v1418, 122
  %v1426 = vpop.permute.xlu0 %1425
  %1427 = vrot.lane.b32.xlu0 %v1417, 98
  %v1428 = vpop.permute.xlu0 %1427
  %1429 = vrot.lane.b32.xlu0 %v1418, 98
  %v1430 = vpop.permute.xlu0 %1429
  %v1431 = vsel %vm362, %v1424, 0
  %v1433 = vsel %vm362, %v1426, 0
  %v1435 = vsel %vm362, %v1428, 0
  %v1437 = vsel %vm362, %v1430, 0
  %1439 = vmatprep.subr.mxu0 0.0
  %1440 = vmatpush1.xpose.msra.mxu0 %v1435
  %1441 = vmatprep.subr.mxu0 0.0
  %1442 = vmatpush1.xpose.msra.mxu0 %v1437
  %1443 = vmatprep.subr.mxu0 0.0
  %1444 = vmatpush1.xpose.msra.mxu0 0.0
  %1445 = vmatprep.subr.mxu0 0.0
  %1446 = vmatpush1.xpose.msra.mxu0 0.0
  %1447 = vmatprep.subr.mxu0 0.0
  %1448 = vmatpush1.xpose.msra.mxu0 0.0
  %1449 = vmatprep.subr.mxu0 0.0
  %1450 = vmatpush1.xpose.msra.mxu0 0.0
  %1451 = vmatprep.subr.mxu0 0.0
  %1452 = vmatpush1.xpose.msra.mxu0 0.0
  %1453 = vmatprep.subr.mxu0 0.0
  %1454 = vmatpush1.xpose.msra.mxu0 0.0
  %1455 = vmatprep.subr.mxu0 0.0
  %1456 = vmatpush1.xpose.msra.mxu0 0.0
  %1457 = vmatprep.subr.mxu0 0.0
  %1458 = vmatpush1.xpose.msra.mxu0 0.0
  %1459 = vmatprep.subr.mxu0 0.0
  %1460 = vmatpush1.xpose.msra.mxu0 0.0
  %1461 = vmatprep.subr.mxu0 0.0
  %1462 = vmatpush1.xpose.msra.mxu0 0.0
  %1463 = vmatprep.subr.mxu0 0.0
  %1464 = vmatpush1.xpose.msra.mxu0 0.0
  %1465 = vmatprep.subr.mxu0 0.0
  %1466 = vmatpush1.xpose.msra.mxu0 0.0
  %1467 = vmatprep.subr.mxu0 0.0
  %1468 = vmatpush1.xpose.msra.mxu0 0.0
  %1469 = vmatprep.subr.mxu0 0.0
  %1470 = vmatpush1.xpose.msra.mxu0 0.0
  %1471 = vmatprep.subr.mxu0 0.0
  %1472 = vmatpush1.xpose.msra.mxu0 0.0
  %1473 = vmatprep.subr.mxu0 0.0
  %1474 = vmatpush1.xpose.msra.mxu0 0.0
  %1475 = vmatprep.subr.mxu0 0.0
  %1476 = vmatpush1.xpose.msra.mxu0 0.0
  %1477 = vmatprep.subr.mxu0 0.0
  %1478 = vmatpush1.xpose.msra.mxu0 0.0
  %1479 = vmatprep.subr.mxu0 0.0
  %1480 = vmatpush1.xpose.msra.mxu0 0.0
  %1481 = vmatprep.subr.mxu0 0.0
  %1482 = vmatpush1.xpose.msra.mxu0 0.0
  %1483 = vmatprep.subr.mxu0 0.0
  %1484 = vmatpush1.xpose.msra.mxu0 0.0
  %1485 = vmatprep.subr.mxu0 0.0
  %1486 = vmatpush1.xpose.msra.mxu0 0.0
  %1487 = vmatprep.subr.mxu0 0.0
  %1488 = vmatpush1.xpose.msra.mxu0 0.0
  %1489 = vmatprep.subr.mxu0 0.0
  %1490 = vmatpush1.xpose.msra.mxu0 0.0
  %1491 = vmatprep.subr.mxu0 0.0
  %1492 = vmatpush1.xpose.msra.mxu0 0.0
  %1493 = vmatprep.subr.mxu0 0.0
  %1494 = vmatpush1.xpose.msra.mxu0 0.0
  %1495 = vmatprep.subr.mxu0 0.0
  %1496 = vmatpush1.xpose.msra.mxu0 0.0
  %1497 = vmatprep.subr.mxu0 0.0
  %1498 = vmatpush1.xpose.msra.mxu0 0.0
  %1499 = vmatprep.subr.mxu0 0.0
  %1500 = vmatpush1.xpose.msra.mxu0 0.0
  %1501 = vmatprep.subr.mxu0 0.0
  %1502 = vmatpush1.xpose.msra.mxu0 0.0
  %1503 = vmatprep.mubr.f32.mxu0 0.0
  %1504 = vmatmul.mubr.f32.gmra.mrb[0].mxu0 %v1431
  %v1505 = vpop.f32.mrb[0].mxu0
  %v1506 = vadd.f32 0.0, %v1505
  %v1507 = vpop.f32.mrb[0].mxu0
  %1508 = vmatprep.mubr.f32.mxu0 0.0
  %1509 = vmatmul.mubr.f32.gmra.mrb[0].mxu0 %v1433
  %v1510 = vpop.f32.mrb[0].mxu0
  %v1511 = vadd.f32 0.0, %v1510
  %v1512 = vpop.f32.mrb[0].mxu0
  %1513 = vdwg.mxu0
  %v1514 = vmul.f32 %v1506, 0.4082483
  %v1515 = vmul.f32 %v1511, 0.4082483
  %v1516 = vsel %vm448, %v1514, -inf
  %1517 = vmax.xlane.f32.xlu0 %v1516
  %v1518 = vpop.xlane.xlu0 %1517
  %v1519 = vsel %vm448, %v1515, -inf
  %1520 = vmax.xlane.f32.xlu0 %v1519
  %v1521 = vpop.xlane.xlu0 %1520
  %v1522 = vsub.f32 %v1514, %v1518
  %v1523 = vsub.f32 %v1515, %v1521
  %v1524 = vmul.f32 %v1522, 1.442695
  %v1525 = vpow.pop %v1524
  %v1526 = vmul.f32 %v1523, 1.442695
  %v1527 = vpow.pop %v1526
  %v1528 = vsel %vm448, %v1525, 0.0
  %1529 = vadd.xlane.f32.xlu0 %v1528
  %v1530 = vpop.xlane.xlu0 %1529
  %v1531 = vsel %vm448, %v1527, 0.0
  %1532 = vadd.xlane.f32.xlu0 %v1531
  %v1533 = vpop.xlane.xlu0 %1532
  %v1534 = vrcp.pop %v1530
  %v1535 = vrcp.pop %v1533
  %v1536 = vmul.f32 %v1525, %v1534
  %v1537 = vmul.f32 %v1527, %v1535
  %1540 = vrot.lane.b32.xlu0 %v1419, 122
  %v1541 = vpop.permute.xlu0 %1540
  %1542 = vrot.lane.b32.xlu0 %v1420, 122
  %v1543 = vpop.permute.xlu0 %1542
  %v1547 = vsel %vm448, %v1536, 0
  %v1550 = vsel %vm448, %v1537, 0
  %1552 = vmatprep.subr.mxu0 0.0
  %1553 = vmatpush1.msra.mxu0 %v1541
  %1554 = vmatprep.subr.mxu0 0.0
  %1555 = vmatpush1.msra.mxu0 %v1543
  %1556 = vmatprep.subr.mxu0 0.0
  %1557 = vmatpush1.msra.mxu0 0.0
  %1558 = vmatprep.subr.mxu0 0.0
  %1559 = vmatpush1.msra.mxu0 0.0
  %1560 = vmatprep.subr.mxu0 0.0
  %1561 = vmatpush1.msra.mxu0 0.0
  %1562 = vmatprep.subr.mxu0 0.0
  %1563 = vmatpush1.msra.mxu0 0.0
  %1564 = vmatprep.subr.mxu0 0.0
  %1565 = vmatpush1.msra.mxu0 0.0
  %1566 = vmatprep.subr.mxu0 0.0
  %1567 = vmatpush1.msra.mxu0 0.0
  %1568 = vmatprep.subr.mxu0 0.0
  %1569 = vmatpush1.msra.mxu0 0.0
  %1570 = vmatprep.subr.mxu0 0.0
  %1571 = vmatpush1.msra.mxu0 0.0
  %1572 = vmatprep.subr.mxu0 0.0
  %1573 = vmatpush1.msra.mxu0 0.0
  %1574 = vmatprep.subr.mxu0 0.0
  %1575 = vmatpush1.msra.mxu0 0.0
  %1576 = vmatprep.subr.mxu0 0.0
  %1577 = vmatpush1.msra.mxu0 0.0
  %1578 = vmatprep.subr.mxu0 0.0
  %1579 = vmatpush1.msra.mxu0 0.0
  %1580 = vmatprep.subr.mxu0 0.0
  %1581 = vmatpush1.msra.mxu0 0.0
  %1582 = vmatprep.subr.mxu0 0.0
  %1583 = vmatpush1.msra.mxu0 0.0
  %1584 = vmatprep.subr.mxu0 0.0
  %1585 = vmatpush1.msra.mxu0 0.0
  %1586 = vmatprep.subr.mxu0 0.0
  %1587 = vmatpush1.msra.mxu0 0.0
  %1588 = vmatprep.subr.mxu0 0.0
  %1589 = vmatpush1.msra.mxu0 0.0
  %1590 = vmatprep.subr.mxu0 0.0
  %1591 = vmatpush1.msra.mxu0 0.0
  %1592 = vmatprep.subr.mxu0 0.0
  %1593 = vmatpush1.msra.mxu0 0.0
  %1594 = vmatprep.subr.mxu0 0.0
  %1595 = vmatpush1.msra.mxu0 0.0
  %1596 = vmatprep.subr.mxu0 0.0
  %1597 = vmatpush1.msra.mxu0 0.0
  %1598 = vmatprep.subr.mxu0 0.0
  %1599 = vmatpush1.msra.mxu0 0.0
  %1600 = vmatprep.subr.mxu0 0.0
  %1601 = vmatpush1.msra.mxu0 0.0
  %1602 = vmatprep.subr.mxu0 0.0
  %1603 = vmatpush1.msra.mxu0 0.0
  %1604 = vmatprep.subr.mxu0 0.0
  %1605 = vmatpush1.msra.mxu0 0.0
  %1606 = vmatprep.subr.mxu0 0.0
  %1607 = vmatpush1.msra.mxu0 0.0
  %1608 = vmatprep.subr.mxu0 0.0
  %1609 = vmatpush1.msra.mxu0 0.0
  %1610 = vmatprep.subr.mxu0 0.0
  %1611 = vmatpush1.msra.mxu0 0.0
  %1612 = vmatprep.subr.mxu0 0.0
  %1613 = vmatpush1.msra.mxu0 0.0
  %1614 = vmatprep.subr.mxu0 0.0
  %1615 = vmatpush1.msra.mxu0 0.0
  %1616 = vmatprep.mubr.f32.mxu0 0.0
  %1617 = vmatmul.mubr.f32.gmra.mrb[0].mxu0 %v1547
  %v1618 = vpop.f32.mrb[0].mxu0
  %v1619 = vadd.f32 0.0, %v1618
  %v1620 = vpop.f32.mrb[0].mxu0
  %1621 = vmatprep.mubr.f32.mxu0 0.0
  %1622 = vmatmul.mubr.f32.gmra.mrb[0].mxu0 %v1550
  %v1623 = vpop.f32.mrb[0].mxu0
  %v1624 = vadd.f32 0.0, %v1623
  %v1625 = vpop.f32.mrb[0].mxu0
  %1626 = vdwg.mxu0
  %1629 = vrot.lane.b32.xlu0 %v1619, 6
  %v1630 = vpop.permute.xlu0 %1629
  %1631 = vrot.lane.b32.xlu0 %v1624, 6
  %v1632 = vpop.permute.xlu0 %1631
  %1635 = vst.msk [vmem:[#allocation4 + $0x10] sm:$0xff] %vm772, %v1630
  %1636 = vst.msk [vmem:[#allocation4 + $0x18] sm:$0xff] %vm772, %v1632
  %v1637 = vld [vmem:[#allocation2 + $0x10] sm:$0xff]
  %v1638 = vld [vmem:[#allocation2 + $0x18] sm:$0xff]
  %v1639 = vld [vmem:[#allocation3 + $0x10] sm:$0xff]
  %v1640 = vld [vmem:[#allocation3 + $0x18] sm:$0xff]
  %1643 = vrot.lane.b32.xlu0 %v1637, 116
  %v1644 = vpop.permute.xlu0 %1643
  %1645 = vrot.lane.b32.xlu0 %v1638, 116
  %v1646 = vpop.permute.xlu0 %1645
  %1647 = vrot.lane.b32.xlu0 %v1637, 92
  %v1648 = vpop.permute.xlu0 %1647
  %1649 = vrot.lane.b32.xlu0 %v1638, 92
  %v1650 = vpop.permute.xlu0 %1649
  %v1651 = vsel %vm362, %v1644, 0
  %v1653 = vsel %vm362, %v1646, 0
  %v1655 = vsel %vm362, %v1648, 0
  %v1657 = vsel %vm362, %v1650, 0
  %1659 = vmatprep.subr.mxu0 0.0
  %1660 = vmatpush1.xpose.msra.mxu0 %v1655
  %1661 = vmatprep.subr.mxu0 0.0
  %1662 = vmatpush1.xpose.msra.mxu0 %v1657
  %1663 = vmatprep.subr.mxu0 0.0
  %1664 = vmatpush1.xpose.msra.mxu0 0.0
  %1665 = vmatprep.subr.mxu0 0.0
  %1666 = vmatpush1.xpose.msra.mxu0 0.0
  %1667 = vmatprep.subr.mxu0 0.0
  %1668 = vmatpush1.xpose.msra.mxu0 0.0
  %1669 = vmatprep.subr.mxu0 0.0
  %1670 = vmatpush1.xpose.msra.mxu0 0.0
  %1671 = vmatprep.subr.mxu0 0.0
  %1672 = vmatpush1.xpose.msra.mxu0 0.0
  %1673 = vmatprep.subr.mxu0 0.0
  %1674 = vmatpush1.xpose.msra.mxu0 0.0
  %1675 = vmatprep.subr.mxu0 0.0
  %1676 = vmatpush1.xpose.msra.mxu0 0.0
  %1677 = vmatprep.subr.mxu0 0.0
  %1678 = vmatpush1.xpose.msra.mxu0 0.0
  %1679 = vmatprep.subr.mxu0 0.0
  %1680 = vmatpush1.xpose.msra.mxu0 0.0
  %1681 = vmatprep.subr.mxu0 0.0
  %1682 = vmatpush1.xpose.msra.mxu0 0.0
  %1683 = vmatprep.subr.mxu0 0.0
  %1684 = vmatpush1.xpose.msra.mxu0 0.0
  %1685 = vmatprep.subr.mxu0 0.0
  %1686 = vmatpush1.xpose.msra.mxu0 0.0
  %1687 = vmatprep.subr.mxu0 0.0
  %1688 = vmatpush1.xpose.msra.mxu0 0.0
  %1689 = vmatprep.subr.mxu0 0.0
  %1690 = vmatpush1.xpose.msra.mxu0 0.0
  %1691 = vmatprep.subr.mxu0 0.0
  %1692 = vmatpush1.xpose.msra.mxu0 0.0
  %1693 = vmatprep.subr.mxu0 0.0
  %1694 = vmatpush1.xpose.msra.mxu0 0.0
  %1695 = vmatprep.subr.mxu0 0.0
  %1696 = vmatpush1.xpose.msra.mxu0 0.0
  %1697 = vmatprep.subr.mxu0 0.0
  %1698 = vmatpush1.xpose.msra.mxu0 0.0
  %1699 = vmatprep.subr.mxu0 0.0
  %1700 = vmatpush1.xpose.msra.mxu0 0.0
  %1701 = vmatprep.subr.mxu0 0.0
  %1702 = vmatpush1.xpose.msra.mxu0 0.0
  %1703 = vmatprep.subr.mxu0 0.0
  %1704 = vmatpush1.xpose.msra.mxu0 0.0
  %1705 = vmatprep.subr.mxu0 0.0
  %1706 = vmatpush1.xpose.msra.mxu0 0.0
  %1707 = vmatprep.subr.mxu0 0.0
  %1708 = vmatpush1.xpose.msra.mxu0 0.0
  %1709 = vmatprep.subr.mxu0 0.0
  %1710 = vmatpush1.xpose.msra.mxu0 0.0
  %1711 = vmatprep.subr.mxu0 0.0
  %1712 = vmatpush1.xpose.msra.mxu0 0.0
  %1713 = vmatprep.subr.mxu0 0.0
  %1714 = vmatpush1.xpose.msra.mxu0 0.0
  %1715 = vmatprep.subr.mxu0 0.0
  %1716 = vmatpush1.xpose.msra.mxu0 0.0
  %1717 = vmatprep.subr.mxu0 0.0
  %1718 = vmatpush1.xpose.msra.mxu0 0.0
  %1719 = vmatprep.subr.mxu0 0.0
  %1720 = vmatpush1.xpose.msra.mxu0 0.0
  %1721 = vmatprep.subr.mxu0 0.0
  %1722 = vmatpush1.xpose.msra.mxu0 0.0
  %1723 = vmatprep.mubr.f32.mxu0 0.0
  %1724 = vmatmul.mubr.f32.gmra.mrb[0].mxu0 %v1651
  %v1725 = vpop.f32.mrb[0].mxu0
  %v1726 = vadd.f32 0.0, %v1725
  %v1727 = vpop.f32.mrb[0].mxu0
  %1728 = vmatprep.mubr.f32.mxu0 0.0
  %1729 = vmatmul.mubr.f32.gmra.mrb[0].mxu0 %v1653
  %v1730 = vpop.f32.mrb[0].mxu0
  %v1731 = vadd.f32 0.0, %v1730
  %v1732 = vpop.f32.mrb[0].mxu0
  %1733 = vdwg.mxu0
  %v1734 = vmul.f32 %v1726, 0.4082483
  %v1735 = vmul.f32 %v1731, 0.4082483
  %v1736 = vsel %vm448, %v1734, -inf
  %1737 = vmax.xlane.f32.xlu0 %v1736
  %v1738 = vpop.xlane.xlu0 %1737
  %v1739 = vsel %vm448, %v1735, -inf
  %1740 = vmax.xlane.f32.xlu0 %v1739
  %v1741 = vpop.xlane.xlu0 %1740
  %v1742 = vsub.f32 %v1734, %v1738
  %v1743 = vsub.f32 %v1735, %v1741
  %v1744 = vmul.f32 %v1742, 1.442695
  %v1745 = vpow.pop %v1744
  %v1746 = vmul.f32 %v1743, 1.442695
  %v1747 = vpow.pop %v1746
  %v1748 = vsel %vm448, %v1745, 0.0
  %1749 = vadd.xlane.f32.xlu0 %v1748
  %v1750 = vpop.xlane.xlu0 %1749
  %v1751 = vsel %vm448, %v1747, 0.0
  %1752 = vadd.xlane.f32.xlu0 %v1751
  %v1753 = vpop.xlane.xlu0 %1752
  %v1754 = vrcp.pop %v1750
  %v1755 = vrcp.pop %v1753
  %v1756 = vmul.f32 %v1745, %v1754
  %v1757 = vmul.f32 %v1747, %v1755
  %1760 = vrot.lane.b32.xlu0 %v1639, 116
  %v1761 = vpop.permute.xlu0 %1760
  %1762 = vrot.lane.b32.xlu0 %v1640, 116
  %v1763 = vpop.permute.xlu0 %1762
  %v1767 = vsel %vm448, %v1756, 0
  %v1770 = vsel %vm448, %v1757, 0
  %1772 = vmatprep.subr.mxu0 0.0
  %1773 = vmatpush1.msra.mxu0 %v1761
  %1774 = vmatprep.subr.mxu0 0.0
  %1775 = vmatpush1.msra.mxu0 %v1763
  %1776 = vmatprep.subr.mxu0 0.0
  %1777 = vmatpush1.msra.mxu0 0.0
  %1778 = vmatprep.subr.mxu0 0.0
  %1779 = vmatpush1.msra.mxu0 0.0
  %1780 = vmatprep.subr.mxu0 0.0
  %1781 = vmatpush1.msra.mxu0 0.0
  %1782 = vmatprep.subr.mxu0 0.0
  %1783 = vmatpush1.msra.mxu0 0.0
  %1784 = vmatprep.subr.mxu0 0.0
  %1785 = vmatpush1.msra.mxu0 0.0
  %1786 = vmatprep.subr.mxu0 0.0
  %1787 = vmatpush1.msra.mxu0 0.0
  %1788 = vmatprep.subr.mxu0 0.0
  %1789 = vmatpush1.msra.mxu0 0.0
  %1790 = vmatprep.subr.mxu0 0.0
  %1791 = vmatpush1.msra.mxu0 0.0
  %1792 = vmatprep.subr.mxu0 0.0
  %1793 = vmatpush1.msra.mxu0 0.0
  %1794 = vmatprep.subr.mxu0 0.0
  %1795 = vmatpush1.msra.mxu0 0.0
  %1796 = vmatprep.subr.mxu0 0.0
  %1797 = vmatpush1.msra.mxu0 0.0
  %1798 = vmatprep.subr.mxu0 0.0
  %1799 = vmatpush1.msra.mxu0 0.0
  %1800 = vmatprep.subr.mxu0 0.0
  %1801 = vmatpush1.msra.mxu0 0.0
  %1802 = vmatprep.subr.mxu0 0.0
  %1803 = vmatpush1.msra.mxu0 0.0
  %1804 = vmatprep.subr.mxu0 0.0
  %1805 = vmatpush1.msra.mxu0 0.0
  %1806 = vmatprep.subr.mxu0 0.0
  %1807 = vmatpush1.msra.mxu0 0.0
  %1808 = vmatprep.subr.mxu0 0.0
  %1809 = vmatpush1.msra.mxu0 0.0
  %1810 = vmatprep.subr.mxu0 0.0
  %1811 = vmatpush1.msra.mxu0 0.0
  %1812 = vmatprep.subr.mxu0 0.0
  %1813 = vmatpush1.msra.mxu0 0.0
  %1814 = vmatprep.subr.mxu0 0.0
  %1815 = vmatpush1.msra.mxu0 0.0
  %1816 = vmatprep.subr.mxu0 0.0
  %1817 = vmatpush1.msra.mxu0 0.0
  %1818 = vmatprep.subr.mxu0 0.0
  %1819 = vmatpush1.msra.mxu0 0.0
  %1820 = vmatprep.subr.mxu0 0.0
  %1821 = vmatpush1.msra.mxu0 0.0
  %1822 = vmatprep.subr.mxu0 0.0
  %1823 = vmatpush1.msra.mxu0 0.0
  %1824 = vmatprep.subr.mxu0 0.0
  %1825 = vmatpush1.msra.mxu0 0.0
  %1826 = vmatprep.subr.mxu0 0.0
  %1827 = vmatpush1.msra.mxu0 0.0
  %1828 = vmatprep.subr.mxu0 0.0
  %1829 = vmatpush1.msra.mxu0 0.0
  %1830 = vmatprep.subr.mxu0 0.0
  %1831 = vmatpush1.msra.mxu0 0.0
  %1832 = vmatprep.subr.mxu0 0.0
  %1833 = vmatpush1.msra.mxu0 0.0
  %1834 = vmatprep.subr.mxu0 0.0
  %1835 = vmatpush1.msra.mxu0 0.0
  %1836 = vmatprep.mubr.f32.mxu0 0.0
  %1837 = vmatmul.mubr.f32.gmra.mrb[0].mxu0 %v1767
  %v1838 = vpop.f32.mrb[0].mxu0
  %v1839 = vadd.f32 0.0, %v1838
  %v1840 = vpop.f32.mrb[0].mxu0
  %1841 = vmatprep.mubr.f32.mxu0 0.0
  %1842 = vmatmul.mubr.f32.gmra.mrb[0].mxu0 %v1770
  %v1843 = vpop.f32.mrb[0].mxu0
  %v1844 = vadd.f32 0.0, %v1843
  %v1845 = vpop.f32.mrb[0].mxu0
  %1846 = vdwg.mxu0
  %1849 = vrot.lane.b32.xlu0 %v1839, 12
  %v1850 = vpop.permute.xlu0 %1849
  %1851 = vrot.lane.b32.xlu0 %v1844, 12
  %v1852 = vpop.permute.xlu0 %1851
  %1855 = vst.msk [vmem:[#allocation4 + $0x10] sm:$0xff] %vm993, %v1850
  %1856 = vst.msk [vmem:[#allocation4 + $0x18] sm:$0xff] %vm993, %v1852
  %v1857 = vld [vmem:[#allocation2 + $0x10] sm:$0xff]
  %v1858 = vld [vmem:[#allocation2 + $0x18] sm:$0xff]
  %v1859 = vld [vmem:[#allocation3 + $0x10] sm:$0xff]
  %v1860 = vld [vmem:[#allocation3 + $0x18] sm:$0xff]
  %1863 = vrot.lane.b32.xlu0 %v1857, 110
  %v1864 = vpop.permute.xlu0 %1863
  %1865 = vrot.lane.b32.xlu0 %v1858, 110
  %v1866 = vpop.permute.xlu0 %1865
  %1867 = vrot.lane.b32.xlu0 %v1857, 86
  %v1868 = vpop.permute.xlu0 %1867
  %1869 = vrot.lane.b32.xlu0 %v1858, 86
  %v1870 = vpop.permute.xlu0 %1869
  %v1871 = vsel %vm362, %v1864, 0
  %v1873 = vsel %vm362, %v1866, 0
  %v1875 = vsel %vm362, %v1868, 0
  %v1877 = vsel %vm362, %v1870, 0
  %1879 = vmatprep.subr.mxu0 0.0
  %1880 = vmatpush1.xpose.msra.mxu0 %v1875
  %1881 = vmatprep.subr.mxu0 0.0
  %1882 = vmatpush1.xpose.msra.mxu0 %v1877
  %1883 = vmatprep.subr.mxu0 0.0
  %1884 = vmatpush1.xpose.msra.mxu0 0.0
  %1885 = vmatprep.subr.mxu0 0.0
  %1886 = vmatpush1.xpose.msra.mxu0 0.0
  %1887 = vmatprep.subr.mxu0 0.0
  %1888 = vmatpush1.xpose.msra.mxu0 0.0
  %1889 = vmatprep.subr.mxu0 0.0
  %1890 = vmatpush1.xpose.msra.mxu0 0.0
  %1891 = vmatprep.subr.mxu0 0.0
  %1892 = vmatpush1.xpose.msra.mxu0 0.0
  %1893 = vmatprep.subr.mxu0 0.0
  %1894 = vmatpush1.xpose.msra.mxu0 0.0
  %1895 = vmatprep.subr.mxu0 0.0
  %1896 = vmatpush1.xpose.msra.mxu0 0.0
  %1897 = vmatprep.subr.mxu0 0.0
  %1898 = vmatpush1.xpose.msra.mxu0 0.0
  %1899 = vmatprep.subr.mxu0 0.0
  %1900 = vmatpush1.xpose.msra.mxu0 0.0
  %1901 = vmatprep.subr.mxu0 0.0
  %1902 = vmatpush1.xpose.msra.mxu0 0.0
  %1903 = vmatprep.subr.mxu0 0.0
  %1904 = vmatpush1.xpose.msra.mxu0 0.0
  %1905 = vmatprep.subr.mxu0 0.0
  %1906 = vmatpush1.xpose.msra.mxu0 0.0
  %1907 = vmatprep.subr.mxu0 0.0
  %1908 = vmatpush1.xpose.msra.mxu0 0.0
  %1909 = vmatprep.subr.mxu0 0.0
  %1910 = vmatpush1.xpose.msra.mxu0 0.0
  %1911 = vmatprep.subr.mxu0 0.0
  %1912 = vmatpush1.xpose.msra.mxu0 0.0
  %1913 = vmatprep.subr.mxu0 0.0
  %1914 = vmatpush1.xpose.msra.mxu0 0.0
  %1915 = vmatprep.subr.mxu0 0.0
  %1916 = vmatpush1.xpose.msra.mxu0 0.0
  %1917 = vmatprep.subr.mxu0 0.0
  %1918 = vmatpush1.xpose.msra.mxu0 0.0
  %1919 = vmatprep.subr.mxu0 0.0
  %1920 = vmatpush1.xpose.msra.mxu0 0.0
  %1921 = vmatprep.subr.mxu0 0.0
  %1922 = vmatpush1.xpose.msra.mxu0 0.0
  %1923 = vmatprep.subr.mxu0 0.0
  %1924 = vmatpush1.xpose.msra.mxu0 0.0
  %1925 = vmatprep.subr.mxu0 0.0
  %1926 = vmatpush1.xpose.msra.mxu0 0.0
  %1927 = vmatprep.subr.mxu0 0.0
  %1928 = vmatpush1.xpose.msra.mxu0 0.0
  %1929 = vmatprep.subr.mxu0 0.0
  %1930 = vmatpush1.xpose.msra.mxu0 0.0
  %1931 = vmatprep.subr.mxu0 0.0
  %1932 = vmatpush1.xpose.msra.mxu0 0.0
  %1933 = vmatprep.subr.mxu0 0.0
  %1934 = vmatpush1.xpose.msra.mxu0 0.0
  %1935 = vmatprep.subr.mxu0 0.0
  %1936 = vmatpush1.xpose.msra.mxu0 0.0
  %1937 = vmatprep.subr.mxu0 0.0
  %1938 = vmatpush1.xpose.msra.mxu0 0.0
  %1939 = vmatprep.subr.mxu0 0.0
  %1940 = vmatpush1.xpose.msra.mxu0 0.0
  %1941 = vmatprep.subr.mxu0 0.0
  %1942 = vmatpush1.xpose.msra.mxu0 0.0
  %1943 = vmatprep.mubr.f32.mxu0 0.0
  %1944 = vmatmul.mubr.f32.gmra.mrb[0].mxu0 %v1871
  %v1945 = vpop.f32.mrb[0].mxu0
  %v1946 = vadd.f32 0.0, %v1945
  %v1947 = vpop.f32.mrb[0].mxu0
  %1948 = vmatprep.mubr.f32.mxu0 0.0
  %1949 = vmatmul.mubr.f32.gmra.mrb[0].mxu0 %v1873
  %v1950 = vpop.f32.mrb[0].mxu0
  %v1951 = vadd.f32 0.0, %v1950
  %v1952 = vpop.f32.mrb[0].mxu0
  %1953 = vdwg.mxu0
  %v1954 = vmul.f32 %v1946, 0.4082483
  %v1955 = vmul.f32 %v1951, 0.4082483
  %v1956 = vsel %vm448, %v1954, -inf
  %1957 = vmax.xlane.f32.xlu0 %v1956
  %v1958 = vpop.xlane.xlu0 %1957
  %v1959 = vsel %vm448, %v1955, -inf
  %1960 = vmax.xlane.f32.xlu0 %v1959
  %v1961 = vpop.xlane.xlu0 %1960
  %v1962 = vsub.f32 %v1954, %v1958
  %v1963 = vsub.f32 %v1955, %v1961
  %v1964 = vmul.f32 %v1962, 1.442695
  %v1965 = vpow.pop %v1964
  %v1966 = vmul.f32 %v1963, 1.442695
  %v1967 = vpow.pop %v1966
  %v1968 = vsel %vm448, %v1965, 0.0
  %1969 = vadd.xlane.f32.xlu0 %v1968
  %v1970 = vpop.xlane.xlu0 %1969
  %v1971 = vsel %vm448, %v1967, 0.0
  %1972 = vadd.xlane.f32.xlu0 %v1971
  %v1973 = vpop.xlane.xlu0 %1972
  %v1974 = vrcp.pop %v1970
  %v1975 = vrcp.pop %v1973
  %v1976 = vmul.f32 %v1965, %v1974
  %v1977 = vmul.f32 %v1967, %v1975
  %1980 = vrot.lane.b32.xlu0 %v1859, 110
  %v1981 = vpop.permute.xlu0 %1980
  %1982 = vrot.lane.b32.xlu0 %v1860, 110
  %v1983 = vpop.permute.xlu0 %1982
  %v1987 = vsel %vm448, %v1976, 0
  %v1990 = vsel %vm448, %v1977, 0
  %1992 = vmatprep.subr.mxu0 0.0
  %1993 = vmatpush1.msra.mxu0 %v1981
  %1994 = vmatprep.subr.mxu0 0.0
  %1995 = vmatpush1.msra.mxu0 %v1983
  %1996 = vmatprep.subr.mxu0 0.0
  %1997 = vmatpush1.msra.mxu0 0.0
  %1998 = vmatprep.subr.mxu0 0.0
  %1999 = vmatpush1.msra.mxu0 0.0
  %2000 = vmatprep.subr.mxu0 0.0
  %2001 = vmatpush1.msra.mxu0 0.0
  %2002 = vmatprep.subr.mxu0 0.0
  %2003 = vmatpush1.msra.mxu0 0.0
  %2004 = vmatprep.subr.mxu0 0.0
  %2005 = vmatpush1.msra.mxu0 0.0
  %2006 = vmatprep.subr.mxu0 0.0
  %2007 = vmatpush1.msra.mxu0 0.0
  %2008 = vmatprep.subr.mxu0 0.0
  %2009 = vmatpush1.msra.mxu0 0.0
  %2010 = vmatprep.subr.mxu0 0.0
  %2011 = vmatpush1.msra.mxu0 0.0
  %2012 = vmatprep.subr.mxu0 0.0
  %2013 = vmatpush1.msra.mxu0 0.0
  %2014 = vmatprep.subr.mxu0 0.0
  %2015 = vmatpush1.msra.mxu0 0.0
  %2016 = vmatprep.subr.mxu0 0.0
  %2017 = vmatpush1.msra.mxu0 0.0
  %2018 = vmatprep.subr.mxu0 0.0
  %2019 = vmatpush1.msra.mxu0 0.0
  %2020 = vmatprep.subr.mxu0 0.0
  %2021 = vmatpush1.msra.mxu0 0.0
  %2022 = vmatprep.subr.mxu0 0.0
  %2023 = vmatpush1.msra.mxu0 0.0
  %2024 = vmatprep.subr.mxu0 0.0
  %2025 = vmatpush1.msra.mxu0 0.0
  %2026 = vmatprep.subr.mxu0 0.0
  %2027 = vmatpush1.msra.mxu0 0.0
  %2028 = vmatprep.subr.mxu0 0.0
  %2029 = vmatpush1.msra.mxu0 0.0
  %2030 = vmatprep.subr.mxu0 0.0
  %2031 = vmatpush1.msra.mxu0 0.0
  %2032 = vmatprep.subr.mxu0 0.0
  %2033 = vmatpush1.msra.mxu0 0.0
  %2034 = vmatprep.subr.mxu0 0.0
  %2035 = vmatpush1.msra.mxu0 0.0
  %2036 = vmatprep.subr.mxu0 0.0
  %2037 = vmatpush1.msra.mxu0 0.0
  %2038 = vmatprep.subr.mxu0 0.0
  %2039 = vmatpush1.msra.mxu0 0.0
  %2040 = vmatprep.subr.mxu0 0.0
  %2041 = vmatpush1.msra.mxu0 0.0
  %2042 = vmatprep.subr.mxu0 0.0
  %2043 = vmatpush1.msra.mxu0 0.0
  %2044 = vmatprep.subr.mxu0 0.0
  %2045 = vmatpush1.msra.mxu0 0.0
  %2046 = vmatprep.subr.mxu0 0.0
  %2047 = vmatpush1.msra.mxu0 0.0
  %2048 = vmatprep.subr.mxu0 0.0
  %2049 = vmatpush1.msra.mxu0 0.0
  %2050 = vmatprep.subr.mxu0 0.0
  %2051 = vmatpush1.msra.mxu0 0.0
  %2052 = vmatprep.subr.mxu0 0.0
  %2053 = vmatpush1.msra.mxu0 0.0
  %2054 = vmatprep.subr.mxu0 0.0
  %2055 = vmatpush1.msra.mxu0 0.0
  %2056 = vmatprep.mubr.f32.mxu0 0.0
  %2057 = vmatmul.mubr.f32.gmra.mrb[0].mxu0 %v1987
  %v2058 = vpop.f32.mrb[0].mxu0
  %v2059 = vadd.f32 0.0, %v2058
  %v2060 = vpop.f32.mrb[0].mxu0
  %2061 = vmatprep.mubr.f32.mxu0 0.0
  %2062 = vmatmul.mubr.f32.gmra.mrb[0].mxu0 %v1990
  %v2063 = vpop.f32.mrb[0].mxu0
  %v2064 = vadd.f32 0.0, %v2063
  %v2065 = vpop.f32.mrb[0].mxu0
  %2066 = vdwg.mxu0
  %2069 = vrot.lane.b32.xlu0 %v2059, 18
  %v2070 = vpop.permute.xlu0 %2069
  %2071 = vrot.lane.b32.xlu0 %v2064, 18
  %v2072 = vpop.permute.xlu0 %2071
  %2075 = vst.msk [vmem:[#allocation4 + $0x10] sm:$0xff] %vm1214, %v2070
  %2076 = vst.msk [vmem:[#allocation4 + $0x18] sm:$0xff] %vm1214, %v2072
  %v2077 = vld [vmem:[#allocation4] sm:$0xff]
  %v2078 = vld [vmem:[#allocation4 + $0x8] sm:$0xff]
  %v2079 = vld [vmem:[#allocation4 + $0x10] sm:$0xff]
  %v2080 = vld [vmem:[#allocation4 + $0x18] sm:$0xff]
  %v2081 = vld [vmem:[%s6] sm:$0xff]
  %v2082 = vld [vmem:[%s6 + $0x8] sm:$0xff]
  %v2083 = vld [vmem:[%s6 + $0x10] sm:$0xff]
  %v2084 = vld [vmem:[%s7] sm:$0x1]
  %v2086 = vlaneseq
  %v2087 = vshrl.u32 %v2086, 7
  %v2088 = vsub.s32 0, %v2087
  %v2089 = vrot.slane %v2084, %v2088
  %v2092 = vsel %vm55, %v2077, 0
  %v2095 = vsel %vm55, %v2078, 0
  %v2098 = vsel %vm55, %v2079, 0
  %v2101 = vsel %vm55, %v2080, 0
  %2103 = vmatprep.subr.mxu0 0.0
  %2104 = vmatpush1.msra.mxu0 %v2081
  %2105 = vmatprep.subr.mxu0 0.0
  %2106 = vmatpush1.msra.mxu0 %v2082
  %2107 = vmatprep.subr.mxu0 0.0
  %2108 = vmatpush1.msra.mxu0 %v2083
  %2109 = vmatprep.subr.mxu0 0.0
  %2110 = vmatpush1.msra.mxu0 0.0
  %2111 = vmatprep.subr.mxu0 0.0
  %2112 = vmatpush1.msra.mxu0 0.0
  %2113 = vmatprep.subr.mxu0 0.0
  %2114 = vmatpush1.msra.mxu0 0.0
  %2115 = vmatprep.subr.mxu0 0.0
  %2116 = vmatpush1.msra.mxu0 0.0
  %2117 = vmatprep.subr.mxu0 0.0
  %2118 = vmatpush1.msra.mxu0 0.0
  %2119 = vmatprep.subr.mxu0 0.0
  %2120 = vmatpush1.msra.mxu0 0.0
  %2121 = vmatprep.subr.mxu0 0.0
  %2122 = vmatpush1.msra.mxu0 0.0
  %2123 = vmatprep.subr.mxu0 0.0
  %2124 = vmatpush1.msra.mxu0 0.0
  %2125 = vmatprep.subr.mxu0 0.0
  %2126 = vmatpush1.msra.mxu0 0.0
  %2127 = vmatprep.subr.mxu0 0.0
  %2128 = vmatpush1.msra.mxu0 0.0
  %2129 = vmatprep.subr.mxu0 0.0
  %2130 = vmatpush1.msra.mxu0 0.0
  %2131 = vmatprep.subr.mxu0 0.0
  %2132 = vmatpush1.msra.mxu0 0.0
  %2133 = vmatprep.subr.mxu0 0.0
  %2134 = vmatpush1.msra.mxu0 0.0
  %2135 = vmatprep.subr.mxu0 0.0
  %2136 = vmatpush1.msra.mxu0 0.0
  %2137 = vmatprep.subr.mxu0 0.0
  %2138 = vmatpush1.msra.mxu0 0.0
  %2139 = vmatprep.subr.mxu0 0.0
  %2140 = vmatpush1.msra.mxu0 0.0
  %2141 = vmatprep.subr.mxu0 0.0
  %2142 = vmatpush1.msra.mxu0 0.0
  %2143 = vmatprep.subr.mxu0 0.0
  %2144 = vmatpush1.msra.mxu0 0.0
  %2145 = vmatprep.subr.mxu0 0.0
  %2146 = vmatpush1.msra.mxu0 0.0
  %2147 = vmatprep.subr.mxu0 0.0
  %2148 = vmatpush1.msra.mxu0 0.0
  %2149 = vmatprep.subr.mxu0 0.0
  %2150 = vmatpush1.msra.mxu0 0.0
  %2151 = vmatprep.subr.mxu0 0.0
  %2152 = vmatpush1.msra.mxu0 0.0
  %2153 = vmatprep.subr.mxu0 0.0
  %2154 = vmatpush1.msra.mxu0 0.0
  %2155 = vmatprep.subr.mxu0 0.0
  %2156 = vmatpush1.msra.mxu0 0.0
  %2157 = vmatprep.subr.mxu0 0.0
  %2158 = vmatpush1.msra.mxu0 0.0
  %2159 = vmatprep.subr.mxu0 0.0
  %2160 = vmatpush1.msra.mxu0 0.0
  %2161 = vmatprep.subr.mxu0 0.0
  %2162 = vmatpush1.msra.mxu0 0.0
  %2163 = vmatprep.subr.mxu0 0.0
  %2164 = vmatpush1.msra.mxu0 0.0
  %2165 = vmatprep.subr.mxu0 0.0
  %2166 = vmatpush1.msra.mxu0 0.0
  %2167 = vmatprep.mubr.f32.mxu0 0.0
  %2168 = vmatmul.mubr.f32.gmra.mrb[0].mxu0 %v2092
  %v2169 = vpop.f32.mrb[0].mxu0
  %v2170 = vadd.f32 %v2089, %v2169
  %v2171 = vpop.f32.mrb[0].mxu0
  %2172 = vmatprep.mubr.f32.mxu0 0.0
  %2173 = vmatmul.mubr.f32.gmra.mrb[0].mxu0 %v2095
  %v2174 = vpop.f32.mrb[0].mxu0
  %v2175 = vadd.f32 %v2089, %v2174
  %v2176 = vpop.f32.mrb[0].mxu0
  %2177 = vmatprep.mubr.f32.mxu0 0.0
  %2178 = vmatmul.mubr.f32.gmra.mrb[0].mxu0 %v2098
  %v2179 = vpop.f32.mrb[0].mxu0
  %v2180 = vadd.f32 %v2089, %v2179
  %v2181 = vpop.f32.mrb[0].mxu0
  %2182 = vmatprep.mubr.f32.mxu0 0.0
  %2183 = vmatmul.mubr.f32.gmra.mrb[0].mxu0 %v2101
  %v2184 = vpop.f32.mrb[0].mxu0
  %v2185 = vadd.f32 %v2089, %v2184
  %v2186 = vpop.f32.mrb[0].mxu0
  %2187 = vdwg.mxu0
  %v2188 = vadd.f32 %v41, %v2170
  %v2189 = vadd.f32 %v42, %v2175
  %v2190 = vadd.f32 %v43, %v2180
  %v2191 = vadd.f32 %v44, %v2185
  %v2192 = vld [vmem:[%s10] sm:$0x1]
  %v2193 = vld [vmem:[%s11] sm:$0x1]
  %v2194 = vsel %vm55, %v2188, 0.0
  %2195 = vadd.xlane.f32.xlu0 %v2194
  %v2196 = vpop.xlane.xlu0 %2195
  %v2197 = vsel %vm55, %v2189, 0.0
  %2198 = vadd.xlane.f32.xlu0 %v2197
  %v2199 = vpop.xlane.xlu0 %2198
  %v2200 = vsel %vm55, %v2190, 0.0
  %2201 = vadd.xlane.f32.xlu0 %v2200
  %v2202 = vpop.xlane.xlu0 %2201
  %v2203 = vsel %vm55, %v2191, 0.0
  %2204 = vadd.xlane.f32.xlu0 %v2203
  %v2205 = vpop.xlane.xlu0 %2204
  %v2206 = vmul.f32 %v2196, %v68
  %v2207 = vmul.f32 %v2199, %v68
  %v2208 = vmul.f32 %v2202, %v68
  %v2209 = vmul.f32 %v2205, %v68
  %v2210 = vsub.f32 %v2188, %v2206
  %v2211 = vsub.f32 %v2189, %v2207
  %v2212 = vsub.f32 %v2190, %v2208
  %v2213 = vsub.f32 %v2191, %v2209
  %v2214 = vmul.f32 %v2210, %v2210
  %v2215 = vmul.f32 %v2211, %v2211
  %v2216 = vmul.f32 %v2212, %v2212
  %v2217 = vmul.f32 %v2213, %v2213
  %v2218 = vsel %vm55, %v2214, 0.0
  %2219 = vadd.xlane.f32.xlu0 %v2218
  %v2220 = vpop.xlane.xlu0 %2219
  %v2221 = vsel %vm55, %v2215, 0.0
  %2222 = vadd.xlane.f32.xlu0 %v2221
  %v2223 = vpop.xlane.xlu0 %2222
  %v2224 = vsel %vm55, %v2216, 0.0
  %2225 = vadd.xlane.f32.xlu0 %v2224
  %v2226 = vpop.xlane.xlu0 %2225
  %v2227 = vsel %vm55, %v2217, 0.0
  %2228 = vadd.xlane.f32.xlu0 %v2227
  %v2229 = vpop.xlane.xlu0 %2228
  %v2230 = vmul.f32 %v2220, %v68
  %v2231 = vmul.f32 %v2223, %v68
  %v2232 = vmul.f32 %v2226, %v68
  %v2233 = vmul.f32 %v2229, %v68
  %v2234 = vadd.f32 %v2230, 1e-05
  %v2235 = vadd.f32 %v2231, 1e-05
  %v2236 = vadd.f32 %v2232, 1e-05
  %v2237 = vadd.f32 %v2233, 1e-05
  %v2238 = vrsqrt.pop %v2234
  %v2239 = vrsqrt.pop %v2235
  %v2240 = vrsqrt.pop %v2236
  %v2241 = vrsqrt.pop %v2237
  %v2242 = vmul.f32 %v2210, %v2238
  %v2243 = vmul.f32 %v2211, %v2239
  %v2244 = vmul.f32 %v2212, %v2240
  %v2245 = vmul.f32 %v2213, %v2241
  %v2247 = vlaneseq
  %v2248 = vshrl.u32 %v2247, 7
  %v2249 = vsub.s32 0, %v2248
  %v2250 = vrot.slane %v2192, %v2249
  %v2252 = vmul.f32 %v2242, %v2250
  %v2253 = vmul.f32 %v2243, %v2250
  %v2254 = vmul.f32 %v2244, %v2250
  %v2255 = vmul.f32 %v2245, %v2250
  %v2257 = vlaneseq
  %v2258 = vshrl.u32 %v2257, 7
  %v2259 = vsub.s32 0, %v2258
  %v2260 = vrot.slane %v2193, %v2259
  %v2262 = vadd.f32 %v2252, %v2260
  %v2263 = vadd.f32 %v2253, %v2260
  %v2264 = vadd.f32 %v2254, %v2260
  %v2265 = vadd.f32 %v2255, %v2260
  %2266 = vst.msk [vmem:[%s12] sm:$0xff] %vm55, %v2262
  %2267 = vst.msk [vmem:[%s12 + $0x8] sm:$0xff] %vm55, %v2263
  %2268 = vst.msk [vmem:[%s12 + $0x10] sm:$0xff] %vm55, %v2264
  %2269 = vst.msk [vmem:[%s12 + $0x18] sm:$0xff] %vm55, %v2265
  // Predicated region
  $region50: #{transformer_encoder_layer.2} parent=0 // pred_check
    _
  $region51: #{transformer_encoder_layer.2} parent=0 // pred_check_branch
    %2271 = sbr.rel (0) target = $region53
  $region52: #{transformer_encoder_layer.2} parent=0 // pred_region
    _
  $region53: #{transformer_encoder_layer.2} parent=0 // pred_fallthru
    _
  // Predicated region
  $region54: #{transformer_encoder_layer.2} parent=0 // pred_check
    _
  $region55: #{transformer_encoder_layer.2} parent=0 // pred_check_branch
    %2273 = sbr.rel (0) target = $region57
  $region56: #{transformer_encoder_layer.2} parent=0 // pred_region
    _
  $region57: #{transformer_encoder_layer.2} parent=0 // pred_fallthru
    _

</llo_original>
